<compile_context>
chip_gen: v5e
topology: v5e:2x2
jax: 0.10.0
libtpu: 0.0.40
codegen_flags: <defaults>
</compile_context>

<pallas_src>
import jax
import jax.numpy as jnp
from jax.experimental import pallas as pl
from jax.experimental.pallas import tpu as pltpu

NUM_CLASSES = 5      # real output width of fc4
PAD_CLASSES = 128    # lane-dense padded output width
D_IN = 1024


def mlp_kernel(x_ref, w1_ref, b1_ref, w2_ref, b2_ref,
               w3_ref, b3_ref, w4_ref, b4_ref, o_ref):
    acc_t = jnp.float32
    # fc1 + ReLU : (TB,1024) @ (1024,512) -> (TB,512)
    h = jnp.dot(x_ref[...], w1_ref[...], preferred_element_type=acc_t)
    h = jnp.maximum(h + b1_ref[...], 0.0)
    # fc2 + ReLU : (TB,512) @ (512,1024) -> (TB,1024)
    h = jnp.dot(h.astype(w2_ref.dtype), w2_ref[...],
                preferred_element_type=acc_t)
    h = jnp.maximum(h + b2_ref[...], 0.0)
    # fc3 + ReLU : (TB,1024) @ (1024,512) -> (TB,512)
    h = jnp.dot(h.astype(w3_ref.dtype), w3_ref[...],
                preferred_element_type=acc_t)
    h = jnp.maximum(h + b3_ref[...], 0.0)
    # fc4 (no ReLU), lane-padded to 128 classes: (TB,512) @ (512,128)
    logits = jnp.dot(h.astype(w4_ref.dtype), w4_ref[...],
                     preferred_element_type=acc_t)
    logits = logits + b4_ref[...]
    # Mask the zero-padded class lanes so they vanish after softmax.
    lane = jax.lax.broadcasted_iota(jnp.int32, logits.shape, 1)
    logits = jnp.where(lane < NUM_CLASSES, logits, -jnp.inf)
    # Numerically stable softmax over dim=1 (classes). exp -> EUP, max/sum ->
    # XLU: both are idle slots while the MXU is the binding unit.
    m = jnp.max(logits, axis=-1, keepdims=True)
    e = jnp.exp(logits - m)
    denom = jnp.sum(e, axis=-1, keepdims=True)
    o_ref[...] = (e / denom).astype(o_ref.dtype)


def _round_up(n, m):
    return ((n + m - 1) // m) * m


def _choose_tiling(B, tb_target, sublane):
    """Pick (batch_tile, padded_batch).

    Prefers a tile that divides the sublane-rounded batch (so padding -- and
    the jnp.pad HBM copy it implies -- stays minimal) and, whenever the batch
    allows it, caps the tile so the grid has >= 2 steps (v7x: 2 TensorCores).
    """
    Bp0 = _round_up(max(B, 1), sublane)
    tb_target = max(_round_up(tb_target, sublane), sublane)
    half = (Bp0 // 2) // sublane * sublane
    cap = min(tb_target, Bp0 if half < sublane else half)
    # Largest sublane-multiple divisor of Bp0 that fits under the cap.
    best = 0
    t = sublane
    while t <= cap:
        if Bp0 % t == 0:
            best = t
        t += sublane
    if best > 0 and (best * 8 >= cap or best >= 512):
        return best, Bp0          # good divisor: padding limited to < sublane rows
    # Awkward batch size: fall back to a dense tile and pad the batch up to it.
    return cap, _round_up(B, cap)


def prepare_params(params, *, compute_dtype=jnp.bfloat16):
    """One-time param prep (hoisted out of the forward pass).

    Pads fc4 from 5 to 128 lane-dense output columns and casts the MXU-fed
    weights to `compute_dtype` (bf16 by default). Biases stay f32; all matmul
    accumulation stays f32 in-kernel.
    """
    w4, b4 = params["w4"], params["b4"]
    w4p = jnp.zeros((w4.shape[0], PAD_CLASSES), w4.dtype)
    w4p = w4p.at[:, :NUM_CLASSES].set(w4)
    b4p = jnp.zeros((1, PAD_CLASSES), jnp.float32).at[:, :NUM_CLASSES].set(
        b4.astype(jnp.float32))
    return {
        "w1": params["w1"].astype(compute_dtype),
        "b1": params["b1"].astype(jnp.float32),
        "w2": params["w2"].astype(compute_dtype),
        "b2": params["b2"].astype(jnp.float32),
        "w3": params["w3"].astype(compute_dtype),
        "b3": params["b3"].astype(jnp.float32),
        "w4": w4p.astype(compute_dtype),
        "b4": b4p,
    }


def mlp_forward(x, prepped, *, tb=1024):
    """x: (B, 1024). prepped: output of prepare_params()."""
    B, D = x.shape
    assert D == D_IN

    compute_dtype = jnp.dtype(prepped["w1"].dtype)
    itemsize = compute_dtype.itemsize
    sublane = 32 // itemsize          # 8 for f32, 16 for bf16

    xk = x.astype(compute_dtype)
    tb_eff, Bp = _choose_tiling(B, tb, sublane)
    if Bp != B:
        xk = jnp.pad(xk, ((0, Bp - B), (0, 0)))

    def const_spec(arr):
        # Whole array, same block every grid step -> ONE resident VMEM copy
        # (no 2-deep pipeline buffering for constant operands).
        return pl.BlockSpec(arr.shape, lambda i: (0,) * arr.ndim,
                            pipeline_mode=pl.Buffered(1))

    # --- VMEM budget: actual footprint + ~50% headroom, clamped under v7x's
    # 64 MiB per-TC physical VMEM (also lifts v5e's 16 MiB scoped default).
    resident = sum(int(prepped[k].size) * jnp.dtype(prepped[k].dtype).itemsize
                   for k in prepped)                      # single-buffered
    x_tiles = 2 * tb_eff * D_IN * itemsize                # double-buffered input
    out_tiles = 2 * tb_eff * PAD_CLASSES * 4              # double-buffered output
    acts = tb_eff * (512 + 1024 + 512 + PAD_CLASSES) * 4  # f32 intermediates
    vmem_bytes = int(1.5 * (resident + x_tiles + out_tiles + acts)) + (4 << 20)
    vmem_bytes = min(max(vmem_bytes, 16 << 20), 56 << 20)

    # --- Cost estimate so XLA schedules surrounding cast/pad/slice sensibly.
    flops = 2 * Bp * (D_IN * 512 + 512 * 1024 + 1024 * 512 + 512 * PAD_CLASSES)
    bytes_accessed = (Bp * D_IN * itemsize + resident + Bp * PAD_CLASSES * 4)
    cost = pl.CostEstimate(flops=flops,
                           transcendentals=Bp * PAD_CLASSES,
                           bytes_accessed=bytes_accessed)

    out = pl.pallas_call(
        mlp_kernel,
        out_shape=jax.ShapeDtypeStruct((Bp, PAD_CLASSES), jnp.float32),
        grid_spec=pltpu.PrefetchScalarGridSpec(
            num_scalar_prefetch=0,
            grid=(Bp // tb_eff,),
            in_specs=[
                pl.BlockSpec((tb_eff, D_IN), lambda i: (i, 0)),  # x (pipelined)
                const_spec(prepped["w1"]), const_spec(prepped["b1"]),
                const_spec(prepped["w2"]), const_spec(prepped["b2"]),
                const_spec(prepped["w3"]), const_spec(prepped["b3"]),
                const_spec(prepped["w4"]), const_spec(prepped["b4"]),
            ],
            out_specs=pl.BlockSpec((tb_eff, PAD_CLASSES), lambda i: (i, 0)),
        ),
        compiler_params=pltpu.CompilerParams(
            # Batch axis is embarrassingly parallel -> megacore sharding on
            # v7x when the grid has >= 2 steps (the tile picker ensures it).
            dimension_semantics=("parallel",),
            vmem_limit_bytes=vmem_bytes,
        ),
        cost_estimate=cost,
    )(xk, prepped["w1"], prepped["b1"], prepped["w2"], prepped["b2"],
      prepped["w3"], prepped["b3"], prepped["w4"], prepped["b4"])

    # Drop batch padding and the 123 padded class lanes.
    return out[:B, :NUM_CLASSES]


def init_params(key):
    """Deterministic synthetic parameters matching the nn.Linear shapes."""
    dims = [(1024, 512), (512, 1024), (1024, 512), (512, 5)]
    params = {}
    keys = jax.random.split(key, 2 * len(dims))
    for n, (din, dout) in enumerate(dims):
        scale = 1.0 / jnp.sqrt(jnp.float32(din))
        w = jax.random.uniform(keys[2 * n], (din, dout), jnp.float32,
                               minval=-scale, maxval=scale)
        b = jax.random.uniform(keys[2 * n + 1], (1, dout), jnp.float32,
                               minval=-scale, maxval=scale)
        params[f"w{n+1}"] = w
        params[f"b{n+1}"] = b
    return params


def mlp_reference(x, p, dtype=jnp.float32):
    """Pure-JAX reference; `dtype` mimics the kernel's MXU operand dtype."""
    def lin(h, w, b):
        return jnp.dot(h.astype(dtype), w.astype(dtype),
                       preferred_element_type=jnp.float32) + b
    h = jnp.maximum(lin(x, p["w1"], p["b1"]), 0.0)
    h = jnp.maximum(lin(h, p["w2"], p["b2"]), 0.0)
    h = jnp.maximum(lin(h, p["w3"], p["b3"]), 0.0)
    logits = lin(h, p["w4"], p["b4"])
    return jax.nn.softmax(logits, axis=1)


if __name__ == "__main__":
    key = jax.random.PRNGKey(0)
    k_x, k_p = jax.random.split(key)
    # Small demo batch, deliberately NOT a multiple of the tile / sublane to
    # exercise the ragged-batch path; production callers use the defaults.
    B = 40
    x = jax.random.normal(k_x, (B, 1024), dtype=jnp.float32)
    params = init_params(k_p)

    # Default (recommended) path: bf16 MXU operands, f32 accumulation.
    prepped_bf16 = prepare_params(params)                      # one-time prep
    out_bf16 = jax.block_until_ready(mlp_forward(x, prepped_bf16))

    # f32 path (exact-semantics check against the PyTorch-equivalent reference).
    prepped_f32 = prepare_params(params, compute_dtype=jnp.float32)
    out_f32 = jax.block_until_ready(mlp_forward(x, prepped_f32))

    ref_f32 = mlp_reference(x, params, dtype=jnp.float32)
    ref_bf16 = mlp_reference(x, params, dtype=jnp.bfloat16)

    assert out_bf16.shape == (B, NUM_CLASSES)
    assert out_f32.shape == (B, NUM_CLASSES)
    assert jnp.allclose(jnp.sum(out_bf16, axis=1), 1.0, atol=1e-4)
    assert jnp.allclose(jnp.sum(out_f32, axis=1), 1.0, atol=1e-5)
    # Exact-semantics check (f32 kernel vs f32 reference).
    assert jnp.allclose(out_f32, ref_f32, atol=1e-5, rtol=1e-5)
    # bf16 kernel vs bf16-cast reference (tight) and vs f32 reference (loose,
    # precision-only difference).
    assert jnp.allclose(out_bf16, ref_bf16, atol=1e-3)
    assert jnp.allclose(out_bf16, ref_f32, atol=5e-2)

    print("KERNEL_OK")
</pallas_src>

<mosaic_0001>
module attributes {stable_mosaic.version = 11 : i64} {
  func.func @mlp_kernel(%arg0: i32, %arg1: memref<16x1024xbf16, #tpu.memory_space<vmem>>, %arg2: memref<1024x512xbf16, #tpu.memory_space<vmem>>, %arg3: memref<1x512xf32, #tpu.memory_space<vmem>>, %arg4: memref<512x1024xbf16, #tpu.memory_space<vmem>>, %arg5: memref<1x1024xf32, #tpu.memory_space<vmem>>, %arg6: memref<1024x512xbf16, #tpu.memory_space<vmem>>, %arg7: memref<1x512xf32, #tpu.memory_space<vmem>>, %arg8: memref<512x128xbf16, #tpu.memory_space<vmem>>, %arg9: memref<1x128xf32, #tpu.memory_space<vmem>>, %arg10: memref<16x128xf32, #tpu.memory_space<vmem>>) attributes {dimension_semantics = [#tpu.dimension_semantics<parallel>], iteration_bounds = array<i64: 3>, scalar_prefetch = 0 : i64, scratch_operands = 0 : i64, tpu.core_type = #tpu.core_type<tc>, window_params = [{transform_indices = @transform_0, window_bounds = array<i64: 16, 1024>}, {pipeline_mode = #tpu.pipeline_mode<synchronous>, transform_indices = @transform_1, window_bounds = array<i64: 1024, 512>}, {pipeline_mode = #tpu.pipeline_mode<synchronous>, transform_indices = @transform_2, window_bounds = array<i64: 1, 512>}, {pipeline_mode = #tpu.pipeline_mode<synchronous>, transform_indices = @transform_3, window_bounds = array<i64: 512, 1024>}, {pipeline_mode = #tpu.pipeline_mode<synchronous>, transform_indices = @transform_4, window_bounds = array<i64: 1, 1024>}, {pipeline_mode = #tpu.pipeline_mode<synchronous>, transform_indices = @transform_5, window_bounds = array<i64: 1024, 512>}, {pipeline_mode = #tpu.pipeline_mode<synchronous>, transform_indices = @transform_6, window_bounds = array<i64: 1, 512>}, {pipeline_mode = #tpu.pipeline_mode<synchronous>, transform_indices = @transform_7, window_bounds = array<i64: 512, 128>}, {pipeline_mode = #tpu.pipeline_mode<synchronous>, transform_indices = @transform_8, window_bounds = array<i64: 1, 128>}, {transform_indices = @transform_9, window_bounds = array<i64: 16, 128>}]} {
    %c0 = arith.constant 0 : index
    %c0_0 = arith.constant 0 : index
    %0 = vector.load %arg1[%c0, %c0_0] : memref<16x1024xbf16, #tpu.memory_space<vmem>>, vector<16x1024xbf16>
    %c0_1 = arith.constant 0 : index
    %c0_2 = arith.constant 0 : index
    %1 = vector.load %arg2[%c0_1, %c0_2] : memref<1024x512xbf16, #tpu.memory_space<vmem>>, vector<1024x512xbf16>
    %cst = arith.constant dense<0.000000e+00> : vector<16x512xf32>
    %2 = tpu.matmul %0, %1, %cst {dimension_numbers = #tpu.dot_dimension_numbers<[1], [0], [0], [1], [0, 0, 1, 1], [], []>} : vector<16x1024xbf16>, vector<1024x512xbf16>, vector<16x512xf32> -> vector<16x512xf32>
    %c0_3 = arith.constant 0 : index
    %c0_4 = arith.constant 0 : index
    %3 = vector.load %arg3[%c0_3, %c0_4] : memref<1x512xf32, #tpu.memory_space<vmem>>, vector<1x512xf32>
    %4 = vector.broadcast %3 : vector<1x512xf32> to vector<16x512xf32>
    %5 = arith.addf %2, %4 : vector<16x512xf32>
    %cst_5 = arith.constant 0.000000e+00 : f32
    %6 = vector.broadcast %cst_5 : f32 to vector<16x512xf32>
    %7 = arith.maximumf %5, %6 : vector<16x512xf32>
    %8 = arith.truncf %7 : vector<16x512xf32> to vector<16x512xbf16>
    %c0_6 = arith.constant 0 : index
    %c0_7 = arith.constant 0 : index
    %9 = vector.load %arg4[%c0_6, %c0_7] : memref<512x1024xbf16, #tpu.memory_space<vmem>>, vector<512x1024xbf16>
    %cst_8 = arith.constant dense<0.000000e+00> : vector<16x1024xf32>
    %10 = tpu.matmul %8, %9, %cst_8 {dimension_numbers = #tpu.dot_dimension_numbers<[1], [0], [0], [1], [0, 0, 1, 1], [], []>} : vector<16x512xbf16>, vector<512x1024xbf16>, vector<16x1024xf32> -> vector<16x1024xf32>
    %c0_9 = arith.constant 0 : index
    %c0_10 = arith.constant 0 : index
    %11 = vector.load %arg5[%c0_9, %c0_10] : memref<1x1024xf32, #tpu.memory_space<vmem>>, vector<1x1024xf32>
    %12 = vector.broadcast %11 : vector<1x1024xf32> to vector<16x1024xf32>
    %13 = arith.addf %10, %12 : vector<16x1024xf32>
    %cst_11 = arith.constant 0.000000e+00 : f32
    %14 = vector.broadcast %cst_11 : f32 to vector<16x1024xf32>
    %15 = arith.maximumf %13, %14 : vector<16x1024xf32>
    %16 = arith.truncf %15 : vector<16x1024xf32> to vector<16x1024xbf16>
    %c0_12 = arith.constant 0 : index
    %c0_13 = arith.constant 0 : index
    %17 = vector.load %arg6[%c0_12, %c0_13] : memref<1024x512xbf16, #tpu.memory_space<vmem>>, vector<1024x512xbf16>
    %cst_14 = arith.constant dense<0.000000e+00> : vector<16x512xf32>
    %18 = tpu.matmul %16, %17, %cst_14 {dimension_numbers = #tpu.dot_dimension_numbers<[1], [0], [0], [1], [0, 0, 1, 1], [], []>} : vector<16x1024xbf16>, vector<1024x512xbf16>, vector<16x512xf32> -> vector<16x512xf32>
    %c0_15 = arith.constant 0 : index
    %c0_16 = arith.constant 0 : index
    %19 = vector.load %arg7[%c0_15, %c0_16] : memref<1x512xf32, #tpu.memory_space<vmem>>, vector<1x512xf32>
    %20 = vector.broadcast %19 : vector<1x512xf32> to vector<16x512xf32>
    %21 = arith.addf %18, %20 : vector<16x512xf32>
    %cst_17 = arith.constant 0.000000e+00 : f32
    %22 = vector.broadcast %cst_17 : f32 to vector<16x512xf32>
    %23 = arith.maximumf %21, %22 : vector<16x512xf32>
    %24 = arith.truncf %23 : vector<16x512xf32> to vector<16x512xbf16>
    %c0_18 = arith.constant 0 : index
    %c0_19 = arith.constant 0 : index
    %25 = vector.load %arg8[%c0_18, %c0_19] : memref<512x128xbf16, #tpu.memory_space<vmem>>, vector<512x128xbf16>
    %cst_20 = arith.constant dense<0.000000e+00> : vector<16x128xf32>
    %26 = tpu.matmul %24, %25, %cst_20 {dimension_numbers = #tpu.dot_dimension_numbers<[1], [0], [0], [1], [0, 0, 1, 1], [], []>} : vector<16x512xbf16>, vector<512x128xbf16>, vector<16x128xf32> -> vector<16x128xf32>
    %c0_21 = arith.constant 0 : index
    %c0_22 = arith.constant 0 : index
    %27 = vector.load %arg9[%c0_21, %c0_22] : memref<1x128xf32, #tpu.memory_space<vmem>>, vector<1x128xf32>
    %28 = vector.broadcast %27 : vector<1x128xf32> to vector<16x128xf32>
    %29 = arith.addf %26, %28 : vector<16x128xf32>
    %30 = tpu.iota {dimensions = array<i32: 1>} : vector<16x128xi32>
    %c5_i32 = arith.constant 5 : i32
    %31 = vector.broadcast %c5_i32 : i32 to vector<16x128xi32>
    %32 = arith.cmpi slt, %30, %31 : vector<16x128xi32>
    %cst_23 = arith.constant 0xFF800000 : f32
    %33 = vector.broadcast %cst_23 : f32 to vector<16x128xf32>
    %34 = arith.select %32, %29, %33 : vector<16x128xi1>, vector<16x128xf32>
    %cst_24 = arith.constant dense<0xFF800000> : vector<16xf32>
    %35 = vector.multi_reduction <maximumf>, %34, %cst_24 [1] : vector<16x128xf32> to vector<16xf32>
    %36 = vector.shape_cast %35 : vector<16xf32> to vector<16x1xf32>
    %37 = vector.broadcast %36 : vector<16x1xf32> to vector<16x128xf32>
    %38 = arith.subf %34, %37 : vector<16x128xf32>
    %39 = math.exp %38 : vector<16x128xf32>
    %cst_25 = arith.constant dense<0.000000e+00> : vector<16xf32>
    %40 = vector.multi_reduction <add>, %39, %cst_25 [1] : vector<16x128xf32> to vector<16xf32>
    %41 = vector.shape_cast %40 : vector<16xf32> to vector<16x1xf32>
    %42 = vector.broadcast %41 : vector<16x1xf32> to vector<16x128xf32>
    %43 = arith.divf %39, %42 : vector<16x128xf32>
    %c0_26 = arith.constant 0 : index
    %c0_27 = arith.constant 0 : index
    %44 = vector.load %arg10[%c0_26, %c0_27] : memref<16x128xf32, #tpu.memory_space<vmem>>, vector<16x128xf32>
    tpu.vector_store %arg10[%c0_26, %c0_27], %43 {strides = array<i32>} : memref<16x128xf32, #tpu.memory_space<vmem>>, vector<16x128xf32>,
    return
  }
  func.func @transform_0(%arg0: i32) -> (i32, i32) {
    %c0_i32 = arith.constant 0 : i32
    %c0_i32_0 = arith.constant 0 : i32
    return %arg0, %c0_i32 : i32, i32
  }
  func.func @transform_1(%arg0: i32) -> (i32, i32) {
    %c0_i32 = arith.constant 0 : i32
    %c0_i32_0 = arith.constant 0 : i32
    %c0_i32_1 = arith.constant 0 : i32
    return %c0_i32, %c0_i32_0 : i32, i32
  }
  func.func @transform_2(%arg0: i32) -> (i32, i32) {
    %c0_i32 = arith.constant 0 : i32
    %c0_i32_0 = arith.constant 0 : i32
    %c0_i32_1 = arith.constant 0 : i32
    return %c0_i32, %c0_i32_0 : i32, i32
  }
  func.func @transform_3(%arg0: i32) -> (i32, i32) {
    %c0_i32 = arith.constant 0 : i32
    %c0_i32_0 = arith.constant 0 : i32
    %c0_i32_1 = arith.constant 0 : i32
    return %c0_i32, %c0_i32_0 : i32, i32
  }
  func.func @transform_4(%arg0: i32) -> (i32, i32) {
    %c0_i32 = arith.constant 0 : i32
    %c0_i32_0 = arith.constant 0 : i32
    %c0_i32_1 = arith.constant 0 : i32
    return %c0_i32, %c0_i32_0 : i32, i32
  }
  func.func @transform_5(%arg0: i32) -> (i32, i32) {
    %c0_i32 = arith.constant 0 : i32
    %c0_i32_0 = arith.constant 0 : i32
    %c0_i32_1 = arith.constant 0 : i32
    return %c0_i32, %c0_i32_0 : i32, i32
  }
  func.func @transform_6(%arg0: i32) -> (i32, i32) {
    %c0_i32 = arith.constant 0 : i32
    %c0_i32_0 = arith.constant 0 : i32
    %c0_i32_1 = arith.constant 0 : i32
    return %c0_i32, %c0_i32_0 : i32, i32
  }
  func.func @transform_7(%arg0: i32) -> (i32, i32) {
    %c0_i32 = arith.constant 0 : i32
    %c0_i32_0 = arith.constant 0 : i32
    %c0_i32_1 = arith.constant 0 : i32
    return %c0_i32, %c0_i32_0 : i32, i32
  }
  func.func @transform_8(%arg0: i32) -> (i32, i32) {
    %c0_i32 = arith.constant 0 : i32
    %c0_i32_0 = arith.constant 0 : i32
    %c0_i32_1 = arith.constant 0 : i32
    return %c0_i32, %c0_i32_0 : i32, i32
  }
  func.func @transform_9(%arg0: i32) -> (i32, i32) {
    %c0_i32 = arith.constant 0 : i32
    %c0_i32_0 = arith.constant 0 : i32
    return %arg0, %c0_i32 : i32, i32
  }
}

</mosaic_0001>

<llo_original>
// kernel: tpu_custom_call.1
$region0: #{tpu_custom_call.1}
  #allocation0 [shape = 'u32[]', space=smem, size = 0x4, offset = 0x4, fixed_abs, tag = 'smem constant byte address 0x4 - core index']
  #allocation1 [shape = 'u32[72,128]{1,0:T(1,128)}', space=vmem, size = 0x9000, scoped, tag = 'internal scratch']
  %s0 = inlined_call_operand.hbm [shape: bf16[48,1024], index: 0, kind: input, shape index: {}]
  %s1 = inlined_call_operand.hbm [shape: bf16[1024,512], index: 1, kind: input, shape index: {}]
  %s2 = inlined_call_operand.hbm [shape: f32[1,512], index: 2, kind: input, shape index: {}]
  %s3 = inlined_call_operand.hbm [shape: bf16[512,1024], index: 3, kind: input, shape index: {}]
  %s4 = inlined_call_operand.hbm [shape: f32[1,1024], index: 4, kind: input, shape index: {}]
  %s5 = inlined_call_operand.hbm [shape: bf16[1024,512], index: 5, kind: input, shape index: {}]
  %s6 = inlined_call_operand.vmem [shape: f32[1,512], index: 6, kind: input, shape index: {}]
  %s7 = inlined_call_operand.hbm [shape: bf16[512,128], index: 7, kind: input, shape index: {}]
  %s8 = inlined_call_operand.vmem [shape: f32[1,128], index: 8, kind: input, shape index: {}]
  %s9 = inlined_call_operand.hbm [shape: f32[48,128], index: 9, kind: output, shape index: {}]
  %s10 = sld [smem:[#allocation0]]
  $region97: #{tpu_custom_call.1} parent=0
    _
  %s12 = ssub.s32 1, %s10
  %s13 = scalar_select 0, %s12, %s10
  $region1: #{tpu_custom_call.1} parent=0
    #allocation2 [shape = 'u8[65536]{0}', space=vmem, size = 0x10000, scoped, tag = 'input window, operand 0']
    #allocation3 [shape = 's32[2]{0}', space=sflag, size = 0x8, scoped, tag = 'scoped memory for tpu_custom_call.1']
    #allocation4 [shape = 's32[2]{0}', space=sflag, size = 0x8, scoped, tag = 'scoped memory for tpu_custom_call.1']
    #allocation5 [shape = 'u8[1048576]{0}', space=vmem, size = 0x100000, scoped, tag = 'input window, operand 1, single buffered']
    #allocation6 [shape = 's32[1]{0}', space=sflag, size = 0x4, scoped, tag = 'scoped memory for tpu_custom_call.1']
    #allocation7 [shape = 'u8[2048]{0}', space=vmem, size = 0x800, scoped, tag = 'input window, operand 2, single buffered']
    #allocation8 [shape = 'u8[1048576]{0}', space=vmem, size = 0x100000, scoped, tag = 'input window, operand 3, single buffered']
    #allocation9 [shape = 's32[1]{0}', space=sflag, size = 0x4, scoped, tag = 'scoped memory for tpu_custom_call.1']
    #allocation10 [shape = 'u8[4096]{0}', space=vmem, size = 0x1000, scoped, tag = 'input window, operand 4, single buffered']
    #allocation11 [shape = 'u8[1048576]{0}', space=vmem, size = 0x100000, scoped, tag = 'input window, operand 5, single buffered']
    #allocation12 [shape = 's32[1]{0}', space=sflag, size = 0x4, scoped, tag = 'scoped memory for tpu_custom_call.1']
    #allocation13 [shape = 'u8[131072]{0}', space=vmem, size = 0x20000, scoped, tag = 'input window, operand 7, single buffered']
    #allocation14 [shape = 'u8[16384]{0}', space=vmem, size = 0x4000, scoped, tag = 'output window, operand 0']
    %14 = vsyncpa [#allocation3], 0
    %s15 = scalar_lea.sflag [#allocation3], 1
    %16 = vsyncpa %s15, 0
    %17 = vsyncpa [#allocation6], 0
    %18 = vsyncpa [#allocation9], 0
    %19 = vsyncpa [#allocation12], 0
    %20 = vsyncpa [#allocation4], 0
    %s21 = scalar_lea.sflag [#allocation4], 1
    %22 = vsyncpa %s21, 0
    loop: start=0, step=1, limit=5
    $region2: #{tpu_custom_call.1} parent=1 // loop_pre_header
      _
    $region3: #{tpu_custom_call.1} parent=1 // loop_header
      %s24 = sphi 0, %s28
      %p25 = scmp.ge.s32.totalorder %s24, 5
      %s34 = sphi 0, %s36
      %s37 = sphi 0, %s34
      %s38 = sphi 0, %s37
      %s54 = sphi 0, %s38
      %s58 = sphi 0, %s58
      %s60 = sphi 0, %s58
      %s61 = sphi 0, %s60
      %s75 = sphi 0, %s61
      %s79 = sphi 0, %s79
      %s81 = sphi 0, %s79
      %s82 = sphi 0, %s81
      %s96 = sphi 0, %s82
      %s100 = sphi 0, %s100
      %s102 = sphi 0, %s100
      %s103 = sphi 0, %s102
      %s117 = sphi 0, %s103
      %s121 = sphi 0, %s121
      %s123 = sphi 0, %s121
      %s124 = sphi 0, %s123
      %s138 = sphi 0, %s124
      %s142 = sphi 0, %s142
      %s144 = sphi 0, %s142
      %s145 = sphi 0, %s144
      %s159 = sphi 0, %s145
      %s163 = sphi 0, %s163
      %s165 = sphi 0, %s163
      %s166 = sphi 0, %s165
      %s180 = sphi 0, %s166
      %s184 = sphi 0, %s184
      %s186 = sphi 0, %s184
      %s187 = sphi 0, %s186
      %s201 = sphi 0, %s187
      %s205 = sphi 0, %s205
      %s207 = sphi 0, %s205
      %s208 = sphi 0, %s207
      %s222 = sphi 0, %s208
      %s228 = sphi 0, %s230
      %s231 = sphi 0, %s228
      %s232 = sphi 0, %s231
      %s248 = sphi 0, %s232
    $region4: #{tpu_custom_call.1} parent=1 // loop_header_branch
      %27 = sbr.rel (%p25) target = $region8
    $region5: #{tpu_custom_call.1} parent=1 // loop_body
      %s29 = ssub.s32 %s24, 1
      %s30 = ssub.s32 %s24, 2
      %s31 = sadd.s32 %s24, 1
      %s32 = ssub.s32 %s24, %s31
      %p33 = scmp.eq.s32.totalorder %s32, 0
      %s35 = sadd.s32 %s34, 1
      %s36 = scalar_select %p33, %s34, %s35
      %p39 = pneg %p33
      %p40 = scmp.eq.s32.totalorder %s24, 2
      %p41 = por %p39, %p40
      %p42 = scmp.ne.s32.totalorder %s34, %s37
      %p43 = scmp.eq.s32.totalorder %s24, 0
      %p44 = por %p42, %p43
      %p45 = scmp.ne.s32.totalorder %s34, %s37
      %p46 = scmp.eq.s32.totalorder %s29, 2
      %p47 = por %p45, %p46
      %p48 = scmp.ne.s32.totalorder %s37, %s38
      %p49 = scmp.eq.s32.totalorder %s29, 0
      %p50 = por %p48, %p49
      %p51 = scmp.ne.s32.totalorder %s37, %s38
      %p52 = scmp.eq.s32.totalorder %s30, 2
      %p53 = por %p51, %p52
      %p55 = scmp.ne.s32.totalorder %s38, %s54
      %p56 = scmp.eq.s32.totalorder %s30, 0
      %p57 = por %p55, %p56
      %s59 = sadd.s32 %s58, 1
      %p62 = scmp.eq.s32.totalorder %s24, 2
      %p63 = scmp.ne.s32.totalorder %s58, %s60
      %p64 = scmp.eq.s32.totalorder %s24, 0
      %p65 = por %p63, %p64
      %p66 = scmp.ne.s32.totalorder %s58, %s60
      %p67 = scmp.eq.s32.totalorder %s29, 2
      %p68 = por %p66, %p67
      %p69 = scmp.ne.s32.totalorder %s60, %s61
      %p70 = scmp.eq.s32.totalorder %s29, 0
      %p71 = por %p69, %p70
      %p72 = scmp.ne.s32.totalorder %s60, %s61
      %p73 = scmp.eq.s32.totalorder %s30, 2
      %p74 = por %p72, %p73
      %p76 = scmp.ne.s32.totalorder %s61, %s75
      %p77 = scmp.eq.s32.totalorder %s30, 0
      %p78 = por %p76, %p77
      %s80 = sadd.s32 %s79, 1
      %p83 = scmp.eq.s32.totalorder %s24, 2
      %p84 = scmp.ne.s32.totalorder %s79, %s81
      %p85 = scmp.eq.s32.totalorder %s24, 0
      %p86 = por %p84, %p85
      %p87 = scmp.ne.s32.totalorder %s79, %s81
      %p88 = scmp.eq.s32.totalorder %s29, 2
      %p89 = por %p87, %p88
      %p90 = scmp.ne.s32.totalorder %s81, %s82
      %p91 = scmp.eq.s32.totalorder %s29, 0
      %p92 = por %p90, %p91
      %p93 = scmp.ne.s32.totalorder %s81, %s82
      %p94 = scmp.eq.s32.totalorder %s30, 2
      %p95 = por %p93, %p94
      %p97 = scmp.ne.s32.totalorder %s82, %s96
      %p98 = scmp.eq.s32.totalorder %s30, 0
      %p99 = por %p97, %p98
      %s101 = sadd.s32 %s100, 1
      %p104 = scmp.eq.s32.totalorder %s24, 2
      %p105 = scmp.ne.s32.totalorder %s100, %s102
      %p106 = scmp.eq.s32.totalorder %s24, 0
      %p107 = por %p105, %p106
      %p108 = scmp.ne.s32.totalorder %s100, %s102
      %p109 = scmp.eq.s32.totalorder %s29, 2
      %p110 = por %p108, %p109
      %p111 = scmp.ne.s32.totalorder %s102, %s103
      %p112 = scmp.eq.s32.totalorder %s29, 0
      %p113 = por %p111, %p112
      %p114 = scmp.ne.s32.totalorder %s102, %s103
      %p115 = scmp.eq.s32.totalorder %s30, 2
      %p116 = por %p114, %p115
      %p118 = scmp.ne.s32.totalorder %s103, %s117
      %p119 = scmp.eq.s32.totalorder %s30, 0
      %p120 = por %p118, %p119
      %s122 = sadd.s32 %s121, 1
      %p125 = scmp.eq.s32.totalorder %s24, 2
      %p126 = scmp.ne.s32.totalorder %s121, %s123
      %p127 = scmp.eq.s32.totalorder %s24, 0
      %p128 = por %p126, %p127
      %p129 = scmp.ne.s32.totalorder %s121, %s123
      %p130 = scmp.eq.s32.totalorder %s29, 2
      %p131 = por %p129, %p130
      %p132 = scmp.ne.s32.totalorder %s123, %s124
      %p133 = scmp.eq.s32.totalorder %s29, 0
      %p134 = por %p132, %p133
      %p135 = scmp.ne.s32.totalorder %s123, %s124
      %p136 = scmp.eq.s32.totalorder %s30, 2
      %p137 = por %p135, %p136
      %p139 = scmp.ne.s32.totalorder %s124, %s138
      %p140 = scmp.eq.s32.totalorder %s30, 0
      %p141 = por %p139, %p140
      %s143 = sadd.s32 %s142, 1
      %p146 = scmp.eq.s32.totalorder %s24, 2
      %p147 = scmp.ne.s32.totalorder %s142, %s144
      %p148 = scmp.eq.s32.totalorder %s24, 0
      %p149 = por %p147, %p148
      %p150 = scmp.ne.s32.totalorder %s142, %s144
      %p151 = scmp.eq.s32.totalorder %s29, 2
      %p152 = por %p150, %p151
      %p153 = scmp.ne.s32.totalorder %s144, %s145
      %p154 = scmp.eq.s32.totalorder %s29, 0
      %p155 = por %p153, %p154
      %p156 = scmp.ne.s32.totalorder %s144, %s145
      %p157 = scmp.eq.s32.totalorder %s30, 2
      %p158 = por %p156, %p157
      %p160 = scmp.ne.s32.totalorder %s145, %s159
      %p161 = scmp.eq.s32.totalorder %s30, 0
      %p162 = por %p160, %p161
      %s164 = sadd.s32 %s163, 1
      %p167 = scmp.eq.s32.totalorder %s24, 2
      %p168 = scmp.ne.s32.totalorder %s163, %s165
      %p169 = scmp.eq.s32.totalorder %s24, 0
      %p170 = por %p168, %p169
      %p171 = scmp.ne.s32.totalorder %s163, %s165
      %p172 = scmp.eq.s32.totalorder %s29, 2
      %p173 = por %p171, %p172
      %p174 = scmp.ne.s32.totalorder %s165, %s166
      %p175 = scmp.eq.s32.totalorder %s29, 0
      %p176 = por %p174, %p175
      %p177 = scmp.ne.s32.totalorder %s165, %s166
      %p178 = scmp.eq.s32.totalorder %s30, 2
      %p179 = por %p177, %p178
      %p181 = scmp.ne.s32.totalorder %s166, %s180
      %p182 = scmp.eq.s32.totalorder %s30, 0
      %p183 = por %p181, %p182
      %s185 = sadd.s32 %s184, 1
      %p188 = scmp.eq.s32.totalorder %s24, 2
      %p189 = scmp.ne.s32.totalorder %s184, %s186
      %p190 = scmp.eq.s32.totalorder %s24, 0
      %p191 = por %p189, %p190
      %p192 = scmp.ne.s32.totalorder %s184, %s186
      %p193 = scmp.eq.s32.totalorder %s29, 2
      %p194 = por %p192, %p193
      %p195 = scmp.ne.s32.totalorder %s186, %s187
      %p196 = scmp.eq.s32.totalorder %s29, 0
      %p197 = por %p195, %p196
      %p198 = scmp.ne.s32.totalorder %s186, %s187
      %p199 = scmp.eq.s32.totalorder %s30, 2
      %p200 = por %p198, %p199
      %p202 = scmp.ne.s32.totalorder %s187, %s201
      %p203 = scmp.eq.s32.totalorder %s30, 0
      %p204 = por %p202, %p203
      %s206 = sadd.s32 %s205, 1
      %p209 = scmp.eq.s32.totalorder %s24, 2
      %p210 = scmp.ne.s32.totalorder %s205, %s207
      %p211 = scmp.eq.s32.totalorder %s24, 0
      %p212 = por %p210, %p211
      %p213 = scmp.ne.s32.totalorder %s205, %s207
      %p214 = scmp.eq.s32.totalorder %s29, 2
      %p215 = por %p213, %p214
      %p216 = scmp.ne.s32.totalorder %s207, %s208
      %p217 = scmp.eq.s32.totalorder %s29, 0
      %p218 = por %p216, %p217
      %p219 = scmp.ne.s32.totalorder %s207, %s208
      %p220 = scmp.eq.s32.totalorder %s30, 2
      %p221 = por %p219, %p220
      %p223 = scmp.ne.s32.totalorder %s208, %s222
      %p224 = scmp.eq.s32.totalorder %s30, 0
      %p225 = por %p223, %p224
      %s226 = ssub.s32 %s24, %s31
      %p227 = scmp.eq.s32.totalorder %s226, 0
      %s229 = sadd.s32 %s228, 1
      %s230 = scalar_select %p227, %s228, %s229
      %p233 = pneg %p227
      %p234 = scmp.eq.s32.totalorder %s24, 2
      %p235 = por %p233, %p234
      %p236 = scmp.ne.s32.totalorder %s228, %s231
      %p237 = scmp.eq.s32.totalorder %s24, 0
      %p238 = por %p236, %p237
      %p239 = scmp.ne.s32.totalorder %s228, %s231
      %p240 = scmp.eq.s32.totalorder %s29, 2
      %p241 = por %p239, %p240
      %p242 = scmp.ne.s32.totalorder %s231, %s232
      %p243 = scmp.eq.s32.totalorder %s29, 0
      %p244 = por %p242, %p243
      %p245 = scmp.ne.s32.totalorder %s231, %s232
      %p246 = scmp.eq.s32.totalorder %s30, 2
      %p247 = por %p245, %p246
      %p249 = scmp.ne.s32.totalorder %s232, %s248
      %p250 = scmp.eq.s32.totalorder %s30, 0
      %p251 = por %p249, %p250
      %p252 = scmp.le.s32.totalorder 1, %s24
      %p253 = scmp.lt.s32.totalorder %s24, 4
      %p254 = pnand %p252, %p253
      %p255 = pneg %p254
      // Predicated region
      $region9: #{tpu_custom_call.1} parent=5 // pred_check
        _
      $region10: #{tpu_custom_call.1} parent=5 // pred_check_branch
        %257 = sbr.rel (%p254) target = $region12
      $region11: #{tpu_custom_call.1} parent=5 // pred_region
        %s258 = ssub.s32 %s24, 1
        // Predicated region
        $region13: #{tpu_custom_call.1} parent=11 // pred_check
          %p259 = pneg %p71
        $region14: #{tpu_custom_call.1} parent=11 // pred_check_branch
          %261 = sbr.rel (%p259) target = $region16
        $region15: #{tpu_custom_call.1} parent=11 // pred_region
          %263 = vsyncadd [#allocation6], 0
          %s264 = sshll.u32 %s1, 4
          %s265 = int_to_ptr.hbm [resolvable:$true] %s264
          %s266 = sshll.u32 [#allocation5], 4
          %s267 = int_to_ptr.vmem [resolvable:$true] %s266
          %272 = dma.hbm_to_vmem [thread:$0]  %s265, 32768, %s267, [#allocation6], 256, 256, 16
        $region16: #{tpu_custom_call.1} parent=11 // pred_fallthru
          _
        // Predicated region
        $region17: #{tpu_custom_call.1} parent=11 // pred_check
          %p273 = pneg %p92
        $region18: #{tpu_custom_call.1} parent=11 // pred_check_branch
          %275 = sbr.rel (%p273) target = $region20
        $region19: #{tpu_custom_call.1} parent=11 // pred_region
          %277 = vsyncadd [#allocation6], 0
          %s279 = sshll.u32 %s2, 4
          %s280 = int_to_ptr.hbm [resolvable:$true] %s279
          %s281 = sshll.u32 [#allocation7], 4
          %s282 = int_to_ptr.vmem [resolvable:$true] %s281
          %284 = dma.hbm_to_vmem [thread:$0]  %s280, 64, %s282, [#allocation6]
        $region20: #{tpu_custom_call.1} parent=11 // pred_fallthru
          _
        // Predicated region
        $region21: #{tpu_custom_call.1} parent=11 // pred_check
          %p285 = pneg %p113
        $region22: #{tpu_custom_call.1} parent=11 // pred_check_branch
          %287 = sbr.rel (%p285) target = $region24
        $region23: #{tpu_custom_call.1} parent=11 // pred_region
          %289 = vsyncadd [#allocation9], 0
          %s290 = sshll.u32 %s3, 4
          %s291 = int_to_ptr.hbm [resolvable:$true] %s290
          %s292 = sshll.u32 [#allocation8], 4
          %s293 = int_to_ptr.vmem [resolvable:$true] %s292
          %298 = dma.hbm_to_vmem [thread:$0]  %s291, 32768, %s293, [#allocation9], 512, 512, 32
        $region24: #{tpu_custom_call.1} parent=11 // pred_fallthru
          _
        // Predicated region
        $region25: #{tpu_custom_call.1} parent=11 // pred_check
          %p299 = pneg %p134
        $region26: #{tpu_custom_call.1} parent=11 // pred_check_branch
          %301 = sbr.rel (%p299) target = $region28
        $region27: #{tpu_custom_call.1} parent=11 // pred_region
          %303 = vsyncadd [#allocation9], 0
          %s305 = sshll.u32 %s4, 4
          %s306 = int_to_ptr.hbm [resolvable:$true] %s305
          %s307 = sshll.u32 [#allocation10], 4
          %s308 = int_to_ptr.vmem [resolvable:$true] %s307
          %310 = dma.hbm_to_vmem [thread:$0]  %s306, 128, %s308, [#allocation9]
        $region28: #{tpu_custom_call.1} parent=11 // pred_fallthru
          _
        // Predicated region
        $region29: #{tpu_custom_call.1} parent=11 // pred_check
          %p311 = pneg %p155
        $region30: #{tpu_custom_call.1} parent=11 // pred_check_branch
          %313 = sbr.rel (%p311) target = $region32
        $region31: #{tpu_custom_call.1} parent=11 // pred_region
          %315 = vsyncadd [#allocation12], 0
          %s316 = sshll.u32 %s5, 4
          %s317 = int_to_ptr.hbm [resolvable:$true] %s316
          %s318 = sshll.u32 [#allocation11], 4
          %s319 = int_to_ptr.vmem [resolvable:$true] %s318
          %324 = dma.hbm_to_vmem [thread:$0]  %s317, 32768, %s319, [#allocation12], 256, 256, 16
        $region32: #{tpu_custom_call.1} parent=11 // pred_fallthru
          _
        // Predicated region
        $region33: #{tpu_custom_call.1} parent=11 // pred_check
          %p325 = pneg %p176
        $region34: #{tpu_custom_call.1} parent=11 // pred_check_branch
          %327 = sbr.rel (%p325) target = $region36
        $region35: #{tpu_custom_call.1} parent=11 // pred_region
          _
        $region36: #{tpu_custom_call.1} parent=11 // pred_fallthru
          _
        // Predicated region
        $region37: #{tpu_custom_call.1} parent=11 // pred_check
          %p328 = pneg %p197
        $region38: #{tpu_custom_call.1} parent=11 // pred_check_branch
          %330 = sbr.rel (%p328) target = $region40
        $region39: #{tpu_custom_call.1} parent=11 // pred_region
          %332 = vsyncadd [#allocation12], 0
          %s333 = sshll.u32 %s7, 4
          %s334 = int_to_ptr.hbm [resolvable:$true] %s333
          %s335 = sshll.u32 [#allocation13], 4
          %s336 = int_to_ptr.vmem [resolvable:$true] %s335
          %341 = dma.hbm_to_vmem [thread:$0]  %s334, 4096, %s336, [#allocation12], 64, 64, 4
        $region40: #{tpu_custom_call.1} parent=11 // pred_fallthru
          _
        // Predicated region
        $region41: #{tpu_custom_call.1} parent=11 // pred_check
          %p342 = pneg %p218
        $region42: #{tpu_custom_call.1} parent=11 // pred_check_branch
          %344 = sbr.rel (%p342) target = $region44
        $region43: #{tpu_custom_call.1} parent=11 // pred_region
          _
        $region44: #{tpu_custom_call.1} parent=11 // pred_fallthru
          _
      $region12: #{tpu_custom_call.1} parent=5 // pred_fallthru
        _
      %p345 = scmp.lt.s32.totalorder %s24, 3
      // Predicated region
      $region45: #{tpu_custom_call.1} parent=5 // pred_check
        %p346 = pneg %p345
      $region46: #{tpu_custom_call.1} parent=5 // pred_check_branch
        %348 = sbr.rel (%p346) target = $region48
      $region47: #{tpu_custom_call.1} parent=5 // pred_region
        // Predicated region
        $region49: #{tpu_custom_call.1} parent=47 // pred_check
          %p349 = pneg %p44
        $region50: #{tpu_custom_call.1} parent=47 // pred_check_branch
          %351 = sbr.rel (%p349) target = $region52
        $region51: #{tpu_custom_call.1} parent=47 // pred_region
          %s352 = sand.u32 %s34, 1
          %s353 = scalar_lea.sflag [#allocation3], %s352
          %s354 = sand.u32 %s34, 1
          %s355 = smul.addr %s354, 64
          %s356 = scalar_lea.vmem [#allocation2], %s355
          %s357 = smul.u32 2, %s24
          %359 = vsyncadd %s353, 0
          %s360 = smul.addr %s357, 8
          %s361 = smul.addr %s360, 4
          %s362 = scalar_lea.hbm %s0, %s361
          %s363 = sshll.u32 %s362, 4
          %s364 = int_to_ptr.hbm [resolvable:$true] %s363
          %s365 = sshll.u32 %s356, 4
          %s366 = int_to_ptr.vmem [resolvable:$true] %s365
          %371 = dma.hbm_to_vmem [thread:$0]  %s364, 1024, %s366, %s353, 512, 512, 32
        $region52: #{tpu_custom_call.1} parent=47 // pred_fallthru
          _
      $region48: #{tpu_custom_call.1} parent=5 // pred_fallthru
        _
      %p372 = scmp.le.s32.totalorder 1, %s24
      %p373 = scmp.lt.s32.totalorder %s24, 4
      %p374 = pnand %p372, %p373
      %p375 = pneg %p374
      // Predicated region
      $region53: #{tpu_custom_call.1} parent=5 // pred_check
        _
      $region54: #{tpu_custom_call.1} parent=5 // pred_check_branch
        %377 = sbr.rel (%p374) target = $region56
      $region55: #{tpu_custom_call.1} parent=5 // pred_region
        %s378 = ssub.s32 %s24, 1
        %s379 = sand.u32 %s37, 1
        %s380 = scalar_lea.sflag [#allocation3], %s379
        %s381 = sand.u32 %s37, 1
        %s382 = smul.addr %s381, 64
        %s383 = scalar_lea.vmem [#allocation2], %s382
        // Predicated region
        $region57: #{tpu_custom_call.1} parent=55 // pred_check
          %p384 = pneg %p50
        $region58: #{tpu_custom_call.1} parent=55 // pred_check_branch
          %386 = sbr.rel (%p384) target = $region60
        $region59: #{tpu_custom_call.1} parent=55 // pred_region
          %388 = dma.done %s380, 1024
        $region60: #{tpu_custom_call.1} parent=55 // pred_fallthru
          _
        // Predicated region
        $region61: #{tpu_custom_call.1} parent=55 // pred_check
          %p389 = pneg %p71
        $region62: #{tpu_custom_call.1} parent=55 // pred_check_branch
          %391 = sbr.rel (%p389) target = $region64
        $region63: #{tpu_custom_call.1} parent=55 // pred_region
          %393 = dma.done [#allocation6], 32768
        $region64: #{tpu_custom_call.1} parent=55 // pred_fallthru
          _
        // Predicated region
        $region65: #{tpu_custom_call.1} parent=55 // pred_check
          %p394 = pneg %p92
        $region66: #{tpu_custom_call.1} parent=55 // pred_check_branch
          %396 = sbr.rel (%p394) target = $region68
        $region67: #{tpu_custom_call.1} parent=55 // pred_region
          %398 = dma.done [#allocation6], 64
        $region68: #{tpu_custom_call.1} parent=55 // pred_fallthru
          _
        // Predicated region
        $region69: #{tpu_custom_call.1} parent=55 // pred_check
          %p399 = pneg %p113
        $region70: #{tpu_custom_call.1} parent=55 // pred_check_branch
          %401 = sbr.rel (%p399) target = $region72
        $region71: #{tpu_custom_call.1} parent=55 // pred_region
          %403 = dma.done [#allocation9], 32768
        $region72: #{tpu_custom_call.1} parent=55 // pred_fallthru
          _
        // Predicated region
        $region73: #{tpu_custom_call.1} parent=55 // pred_check
          %p404 = pneg %p134
        $region74: #{tpu_custom_call.1} parent=55 // pred_check_branch
          %406 = sbr.rel (%p404) target = $region76
        $region75: #{tpu_custom_call.1} parent=55 // pred_region
          %408 = dma.done [#allocation9], 128
        $region76: #{tpu_custom_call.1} parent=55 // pred_fallthru
          _
        // Predicated region
        $region77: #{tpu_custom_call.1} parent=55 // pred_check
          %p409 = pneg %p155
        $region78: #{tpu_custom_call.1} parent=55 // pred_check_branch
          %411 = sbr.rel (%p409) target = $region80
        $region79: #{tpu_custom_call.1} parent=55 // pred_region
          %413 = dma.done [#allocation12], 32768
        $region80: #{tpu_custom_call.1} parent=55 // pred_fallthru
          _
        // Predicated region
        $region81: #{tpu_custom_call.1} parent=55 // pred_check
          %p414 = pneg %p197
        $region82: #{tpu_custom_call.1} parent=55 // pred_check_branch
          %416 = sbr.rel (%p414) target = $region84
        $region83: #{tpu_custom_call.1} parent=55 // pred_region
          %418 = dma.done [#allocation12], 4096
        $region84: #{tpu_custom_call.1} parent=55 // pred_fallthru
          _
        %s419 = sand.u32 %s37, 1
        %s420 = scalar_lea.sflag [#allocation3], %s419
        %s421 = sand.u32 %s37, 1
        %s422 = smul.addr %s421, 64
        %s423 = scalar_lea.vmem [#allocation2], %s422
        %p424 = pneg %p50
        %p425 = pneg %p47
        %p426 = pneg %p71
        %p427 = pneg %p68
        %p428 = pneg %p92
        %p429 = pneg %p89
        %p430 = pneg %p113
        %p431 = pneg %p110
        %p432 = pneg %p134
        %p433 = pneg %p131
        %p434 = pneg %p155
        %p435 = pneg %p152
        %p436 = pneg %p176
        %p437 = pneg %p173
        %p438 = pneg %p197
        %p439 = pneg %p194
        %p440 = pneg %p218
        %p441 = pneg %p215
        %p442 = pneg %p244
        %p443 = pneg %p241
        %s444 = sand.u32 %s231, 1
        %s445 = scalar_lea.sflag [#allocation4], %s444
        %s446 = sand.u32 %s231, 1
        %s447 = smul.addr %s446, 16
        %s448 = scalar_lea.vmem [#allocation14], %s447
        %s449 = smul.u32 2, %s29
        %s450 = smul.u32 2, %s29
        %v451 = vld [vmem:[%s383] sm:$0xff]
        %v452 = vld [vmem:[%s383 + $0x8] sm:$0xff]
        %v453 = vld [vmem:[%s383 + $0x10] sm:$0xff]
        %v454 = vld [vmem:[%s383 + $0x18] sm:$0xff]
        %v455 = vld [vmem:[%s383 + $0x20] sm:$0xff]
        %v456 = vld [vmem:[%s383 + $0x28] sm:$0xff]
        %v457 = vld [vmem:[%s383 + $0x30] sm:$0xff]
        %v458 = vld [vmem:[%s383 + $0x38] sm:$0xff]
        %v459 = vld [vmem:[#allocation5] sm:$0xff]
        %v460 = vld [vmem:[#allocation5 + $0x8] sm:$0xff]
        %v461 = vld [vmem:[#allocation5 + $0x10] sm:$0xff]
        %v462 = vld [vmem:[#allocation5 + $0x18] sm:$0xff]
        %v463 = vld [vmem:[#allocation5 + $0x20] sm:$0xff]
        %v464 = vld [vmem:[#allocation5 + $0x28] sm:$0xff]
        %v465 = vld [vmem:[#allocation5 + $0x30] sm:$0xff]
        %v466 = vld [vmem:[#allocation5 + $0x38] sm:$0xff]
        %v467 = vld [vmem:[#allocation5 + $0x40] sm:$0xff]
        %v468 = vld [vmem:[#allocation5 + $0x48] sm:$0xff]
        %v469 = vld [vmem:[#allocation5 + $0x50] sm:$0xff]
        %v470 = vld [vmem:[#allocation5 + $0x58] sm:$0xff]
        %v471 = vld [vmem:[#allocation5 + $0x60] sm:$0xff]
        %v472 = vld [vmem:[#allocation5 + $0x68] sm:$0xff]
        %v473 = vld [vmem:[#allocation5 + $0x70] sm:$0xff]
        %v474 = vld [vmem:[#allocation5 + $0x78] sm:$0xff]
        %v475 = vld [vmem:[#allocation5 + $0x80] sm:$0xff]
        %v476 = vld [vmem:[#allocation5 + $0x88] sm:$0xff]
        %v477 = vld [vmem:[#allocation5 + $0x90] sm:$0xff]
        %v478 = vld [vmem:[#allocation5 + $0x98] sm:$0xff]
        %v479 = vld [vmem:[#allocation5 + $0xa0] sm:$0xff]
        %v480 = vld [vmem:[#allocation5 + $0xa8] sm:$0xff]
        %v481 = vld [vmem:[#allocation5 + $0xb0] sm:$0xff]
        %v482 = vld [vmem:[#allocation5 + $0xb8] sm:$0xff]
        %v483 = vld [vmem:[#allocation5 + $0xc0] sm:$0xff]
        %v484 = vld [vmem:[#allocation5 + $0xc8] sm:$0xff]
        %v485 = vld [vmem:[#allocation5 + $0xd0] sm:$0xff]
        %v486 = vld [vmem:[#allocation5 + $0xd8] sm:$0xff]
        %v487 = vld [vmem:[#allocation5 + $0xe0] sm:$0xff]
        %v488 = vld [vmem:[#allocation5 + $0xe8] sm:$0xff]
        %v489 = vld [vmem:[#allocation5 + $0xf0] sm:$0xff]
        %v490 = vld [vmem:[#allocation5 + $0xf8] sm:$0xff]
        %v491 = vld [vmem:[#allocation5 + $0x100] sm:$0xff]
        %v492 = vld [vmem:[#allocation5 + $0x108] sm:$0xff]
        %v493 = vld [vmem:[#allocation5 + $0x110] sm:$0xff]
        %v494 = vld [vmem:[#allocation5 + $0x118] sm:$0xff]
        %v495 = vld [vmem:[#allocation5 + $0x120] sm:$0xff]
        %v496 = vld [vmem:[#allocation5 + $0x128] sm:$0xff]
        %v497 = vld [vmem:[#allocation5 + $0x130] sm:$0xff]
        %v498 = vld [vmem:[#allocation5 + $0x138] sm:$0xff]
        %v499 = vld [vmem:[#allocation5 + $0x140] sm:$0xff]
        %v500 = vld [vmem:[#allocation5 + $0x148] sm:$0xff]
        %v501 = vld [vmem:[#allocation5 + $0x150] sm:$0xff]
        %v502 = vld [vmem:[#allocation5 + $0x158] sm:$0xff]
        %v503 = vld [vmem:[#allocation5 + $0x160] sm:$0xff]
        %v504 = vld [vmem:[#allocation5 + $0x168] sm:$0xff]
        %v505 = vld [vmem:[#allocation5 + $0x170] sm:$0xff]
        %v506 = vld [vmem:[#allocation5 + $0x178] sm:$0xff]
        %v507 = vld [vmem:[#allocation5 + $0x180] sm:$0xff]
        %v508 = vld [vmem:[#allocation5 + $0x188] sm:$0xff]
        %v509 = vld [vmem:[#allocation5 + $0x190] sm:$0xff]
        %v510 = vld [vmem:[#allocation5 + $0x198] sm:$0xff]
        %v511 = vld [vmem:[#allocation5 + $0x1a0] sm:$0xff]
        %v512 = vld [vmem:[#allocation5 + $0x1a8] sm:$0xff]
        %v513 = vld [vmem:[#allocation5 + $0x1b0] sm:$0xff]
        %v514 = vld [vmem:[#allocation5 + $0x1b8] sm:$0xff]
        %v515 = vld [vmem:[#allocation5 + $0x1c0] sm:$0xff]
        %v516 = vld [vmem:[#allocation5 + $0x1c8] sm:$0xff]
        %v517 = vld [vmem:[#allocation5 + $0x1d0] sm:$0xff]
        %v518 = vld [vmem:[#allocation5 + $0x1d8] sm:$0xff]
        %v519 = vld [vmem:[#allocation5 + $0x1e0] sm:$0xff]
        %v520 = vld [vmem:[#allocation5 + $0x1e8] sm:$0xff]
        %v521 = vld [vmem:[#allocation5 + $0x1f0] sm:$0xff]
        %v522 = vld [vmem:[#allocation5 + $0x1f8] sm:$0xff]
        %v523 = vld [vmem:[#allocation5 + $0x200] sm:$0xff]
        %v524 = vld [vmem:[#allocation5 + $0x208] sm:$0xff]
        %v525 = vld [vmem:[#allocation5 + $0x210] sm:$0xff]
        %v526 = vld [vmem:[#allocation5 + $0x218] sm:$0xff]
        %v527 = vld [vmem:[#allocation5 + $0x220] sm:$0xff]
        %v528 = vld [vmem:[#allocation5 + $0x228] sm:$0xff]
        %v529 = vld [vmem:[#allocation5 + $0x230] sm:$0xff]
        %v530 = vld [vmem:[#allocation5 + $0x238] sm:$0xff]
        %v531 = vld [vmem:[#allocation5 + $0x240] sm:$0xff]
        %v532 = vld [vmem:[#allocation5 + $0x248] sm:$0xff]
        %v533 = vld [vmem:[#allocation5 + $0x250] sm:$0xff]
        %v534 = vld [vmem:[#allocation5 + $0x258] sm:$0xff]
        %v535 = vld [vmem:[#allocation5 + $0x260] sm:$0xff]
        %v536 = vld [vmem:[#allocation5 + $0x268] sm:$0xff]
        %v537 = vld [vmem:[#allocation5 + $0x270] sm:$0xff]
        %v538 = vld [vmem:[#allocation5 + $0x278] sm:$0xff]
        %v539 = vld [vmem:[#allocation5 + $0x280] sm:$0xff]
        %v540 = vld [vmem:[#allocation5 + $0x288] sm:$0xff]
        %v541 = vld [vmem:[#allocation5 + $0x290] sm:$0xff]
        %v542 = vld [vmem:[#allocation5 + $0x298] sm:$0xff]
        %v543 = vld [vmem:[#allocation5 + $0x2a0] sm:$0xff]
        %v544 = vld [vmem:[#allocation5 + $0x2a8] sm:$0xff]
        %v545 = vld [vmem:[#allocation5 + $0x2b0] sm:$0xff]
        %v546 = vld [vmem:[#allocation5 + $0x2b8] sm:$0xff]
        %v547 = vld [vmem:[#allocation5 + $0x2c0] sm:$0xff]
        %v548 = vld [vmem:[#allocation5 + $0x2c8] sm:$0xff]
        %v549 = vld [vmem:[#allocation5 + $0x2d0] sm:$0xff]
        %v550 = vld [vmem:[#allocation5 + $0x2d8] sm:$0xff]
        %v551 = vld [vmem:[#allocation5 + $0x2e0] sm:$0xff]
        %v552 = vld [vmem:[#allocation5 + $0x2e8] sm:$0xff]
        %v553 = vld [vmem:[#allocation5 + $0x2f0] sm:$0xff]
        %v554 = vld [vmem:[#allocation5 + $0x2f8] sm:$0xff]
        %v555 = vld [vmem:[#allocation5 + $0x300] sm:$0xff]
        %v556 = vld [vmem:[#allocation5 + $0x308] sm:$0xff]
        %v557 = vld [vmem:[#allocation5 + $0x310] sm:$0xff]
        %v558 = vld [vmem:[#allocation5 + $0x318] sm:$0xff]
        %v559 = vld [vmem:[#allocation5 + $0x320] sm:$0xff]
        %v560 = vld [vmem:[#allocation5 + $0x328] sm:$0xff]
        %v561 = vld [vmem:[#allocation5 + $0x330] sm:$0xff]
        %v562 = vld [vmem:[#allocation5 + $0x338] sm:$0xff]
        %v563 = vld [vmem:[#allocation5 + $0x340] sm:$0xff]
        %v564 = vld [vmem:[#allocation5 + $0x348] sm:$0xff]
        %v565 = vld [vmem:[#allocation5 + $0x350] sm:$0xff]
        %v566 = vld [vmem:[#allocation5 + $0x358] sm:$0xff]
        %v567 = vld [vmem:[#allocation5 + $0x360] sm:$0xff]
        %v568 = vld [vmem:[#allocation5 + $0x368] sm:$0xff]
        %v569 = vld [vmem:[#allocation5 + $0x370] sm:$0xff]
        %v570 = vld [vmem:[#allocation5 + $0x378] sm:$0xff]
        %v571 = vld [vmem:[#allocation5 + $0x380] sm:$0xff]
        %v572 = vld [vmem:[#allocation5 + $0x388] sm:$0xff]
        %v573 = vld [vmem:[#allocation5 + $0x390] sm:$0xff]
        %v574 = vld [vmem:[#allocation5 + $0x398] sm:$0xff]
        %v575 = vld [vmem:[#allocation5 + $0x3a0] sm:$0xff]
        %v576 = vld [vmem:[#allocation5 + $0x3a8] sm:$0xff]
        %v577 = vld [vmem:[#allocation5 + $0x3b0] sm:$0xff]
        %v578 = vld [vmem:[#allocation5 + $0x3b8] sm:$0xff]
        %v579 = vld [vmem:[#allocation5 + $0x3c0] sm:$0xff]
        %v580 = vld [vmem:[#allocation5 + $0x3c8] sm:$0xff]
        %v581 = vld [vmem:[#allocation5 + $0x3d0] sm:$0xff]
        %v582 = vld [vmem:[#allocation5 + $0x3d8] sm:$0xff]
        %v583 = vld [vmem:[#allocation5 + $0x3e0] sm:$0xff]
        %v584 = vld [vmem:[#allocation5 + $0x3e8] sm:$0xff]
        %v585 = vld [vmem:[#allocation5 + $0x3f0] sm:$0xff]
        %v586 = vld [vmem:[#allocation5 + $0x3f8] sm:$0xff]
        %v587 = vld [vmem:[#allocation5 + $0x400] sm:$0xff]
        %v588 = vld [vmem:[#allocation5 + $0x408] sm:$0xff]
        %v589 = vld [vmem:[#allocation5 + $0x410] sm:$0xff]
        %v590 = vld [vmem:[#allocation5 + $0x418] sm:$0xff]
        %v591 = vld [vmem:[#allocation5 + $0x420] sm:$0xff]
        %v592 = vld [vmem:[#allocation5 + $0x428] sm:$0xff]
        %v593 = vld [vmem:[#allocation5 + $0x430] sm:$0xff]
        %v594 = vld [vmem:[#allocation5 + $0x438] sm:$0xff]
        %v595 = vld [vmem:[#allocation5 + $0x440] sm:$0xff]
        %v596 = vld [vmem:[#allocation5 + $0x448] sm:$0xff]
        %v597 = vld [vmem:[#allocation5 + $0x450] sm:$0xff]
        %v598 = vld [vmem:[#allocation5 + $0x458] sm:$0xff]
        %v599 = vld [vmem:[#allocation5 + $0x460] sm:$0xff]
        %v600 = vld [vmem:[#allocation5 + $0x468] sm:$0xff]
        %v601 = vld [vmem:[#allocation5 + $0x470] sm:$0xff]
        %v602 = vld [vmem:[#allocation5 + $0x478] sm:$0xff]
        %v603 = vld [vmem:[#allocation5 + $0x480] sm:$0xff]
        %v604 = vld [vmem:[#allocation5 + $0x488] sm:$0xff]
        %v605 = vld [vmem:[#allocation5 + $0x490] sm:$0xff]
        %v606 = vld [vmem:[#allocation5 + $0x498] sm:$0xff]
        %v607 = vld [vmem:[#allocation5 + $0x4a0] sm:$0xff]
        %v608 = vld [vmem:[#allocation5 + $0x4a8] sm:$0xff]
        %v609 = vld [vmem:[#allocation5 + $0x4b0] sm:$0xff]
        %v610 = vld [vmem:[#allocation5 + $0x4b8] sm:$0xff]
        %v611 = vld [vmem:[#allocation5 + $0x4c0] sm:$0xff]
        %v612 = vld [vmem:[#allocation5 + $0x4c8] sm:$0xff]
        %v613 = vld [vmem:[#allocation5 + $0x4d0] sm:$0xff]
        %v614 = vld [vmem:[#allocation5 + $0x4d8] sm:$0xff]
        %v615 = vld [vmem:[#allocation5 + $0x4e0] sm:$0xff]
        %v616 = vld [vmem:[#allocation5 + $0x4e8] sm:$0xff]
        %v617 = vld [vmem:[#allocation5 + $0x4f0] sm:$0xff]
        %v618 = vld [vmem:[#allocation5 + $0x4f8] sm:$0xff]
        %v619 = vld [vmem:[#allocation5 + $0x500] sm:$0xff]
        %v620 = vld [vmem:[#allocation5 + $0x508] sm:$0xff]
        %v621 = vld [vmem:[#allocation5 + $0x510] sm:$0xff]
        %v622 = vld [vmem:[#allocation5 + $0x518] sm:$0xff]
        %v623 = vld [vmem:[#allocation5 + $0x520] sm:$0xff]
        %v624 = vld [vmem:[#allocation5 + $0x528] sm:$0xff]
        %v625 = vld [vmem:[#allocation5 + $0x530] sm:$0xff]
        %v626 = vld [vmem:[#allocation5 + $0x538] sm:$0xff]
        %v627 = vld [vmem:[#allocation5 + $0x540] sm:$0xff]
        %v628 = vld [vmem:[#allocation5 + $0x548] sm:$0xff]
        %v629 = vld [vmem:[#allocation5 + $0x550] sm:$0xff]
        %v630 = vld [vmem:[#allocation5 + $0x558] sm:$0xff]
        %v631 = vld [vmem:[#allocation5 + $0x560] sm:$0xff]
        %v632 = vld [vmem:[#allocation5 + $0x568] sm:$0xff]
        %v633 = vld [vmem:[#allocation5 + $0x570] sm:$0xff]
        %v634 = vld [vmem:[#allocation5 + $0x578] sm:$0xff]
        %v635 = vld [vmem:[#allocation5 + $0x580] sm:$0xff]
        %v636 = vld [vmem:[#allocation5 + $0x588] sm:$0xff]
        %v637 = vld [vmem:[#allocation5 + $0x590] sm:$0xff]
        %v638 = vld [vmem:[#allocation5 + $0x598] sm:$0xff]
        %v639 = vld [vmem:[#allocation5 + $0x5a0] sm:$0xff]
        %v640 = vld [vmem:[#allocation5 + $0x5a8] sm:$0xff]
        %v641 = vld [vmem:[#allocation5 + $0x5b0] sm:$0xff]
        %v642 = vld [vmem:[#allocation5 + $0x5b8] sm:$0xff]
        %v643 = vld [vmem:[#allocation5 + $0x5c0] sm:$0xff]
        %v644 = vld [vmem:[#allocation5 + $0x5c8] sm:$0xff]
        %v645 = vld [vmem:[#allocation5 + $0x5d0] sm:$0xff]
        %v646 = vld [vmem:[#allocation5 + $0x5d8] sm:$0xff]
        %v647 = vld [vmem:[#allocation5 + $0x5e0] sm:$0xff]
        %v648 = vld [vmem:[#allocation5 + $0x5e8] sm:$0xff]
        %v649 = vld [vmem:[#allocation5 + $0x5f0] sm:$0xff]
        %v650 = vld [vmem:[#allocation5 + $0x5f8] sm:$0xff]
        %v651 = vld [vmem:[#allocation5 + $0x600] sm:$0xff]
        %v652 = vld [vmem:[#allocation5 + $0x608] sm:$0xff]
        %v653 = vld [vmem:[#allocation5 + $0x610] sm:$0xff]
        %v654 = vld [vmem:[#allocation5 + $0x618] sm:$0xff]
        %v655 = vld [vmem:[#allocation5 + $0x620] sm:$0xff]
        %v656 = vld [vmem:[#allocation5 + $0x628] sm:$0xff]
        %v657 = vld [vmem:[#allocation5 + $0x630] sm:$0xff]
        %v658 = vld [vmem:[#allocation5 + $0x638] sm:$0xff]
        %v659 = vld [vmem:[#allocation5 + $0x640] sm:$0xff]
        %v660 = vld [vmem:[#allocation5 + $0x648] sm:$0xff]
        %v661 = vld [vmem:[#allocation5 + $0x650] sm:$0xff]
        %v662 = vld [vmem:[#allocation5 + $0x658] sm:$0xff]
        %v663 = vld [vmem:[#allocation5 + $0x660] sm:$0xff]
        %v664 = vld [vmem:[#allocation5 + $0x668] sm:$0xff]
        %v665 = vld [vmem:[#allocation5 + $0x670] sm:$0xff]
        %v666 = vld [vmem:[#allocation5 + $0x678] sm:$0xff]
        %v667 = vld [vmem:[#allocation5 + $0x680] sm:$0xff]
        %v668 = vld [vmem:[#allocation5 + $0x688] sm:$0xff]
        %v669 = vld [vmem:[#allocation5 + $0x690] sm:$0xff]
        %v670 = vld [vmem:[#allocation5 + $0x698] sm:$0xff]
        %v671 = vld [vmem:[#allocation5 + $0x6a0] sm:$0xff]
        %v672 = vld [vmem:[#allocation5 + $0x6a8] sm:$0xff]
        %v673 = vld [vmem:[#allocation5 + $0x6b0] sm:$0xff]
        %v674 = vld [vmem:[#allocation5 + $0x6b8] sm:$0xff]
        %v675 = vld [vmem:[#allocation5 + $0x6c0] sm:$0xff]
        %v676 = vld [vmem:[#allocation5 + $0x6c8] sm:$0xff]
        %v677 = vld [vmem:[#allocation5 + $0x6d0] sm:$0xff]
        %v678 = vld [vmem:[#allocation5 + $0x6d8] sm:$0xff]
        %v679 = vld [vmem:[#allocation5 + $0x6e0] sm:$0xff]
        %v680 = vld [vmem:[#allocation5 + $0x6e8] sm:$0xff]
        %v681 = vld [vmem:[#allocation5 + $0x6f0] sm:$0xff]
        %v682 = vld [vmem:[#allocation5 + $0x6f8] sm:$0xff]
        %v683 = vld [vmem:[#allocation5 + $0x700] sm:$0xff]
        %v684 = vld [vmem:[#allocation5 + $0x708] sm:$0xff]
        %v685 = vld [vmem:[#allocation5 + $0x710] sm:$0xff]
        %v686 = vld [vmem:[#allocation5 + $0x718] sm:$0xff]
        %v687 = vld [vmem:[#allocation5 + $0x720] sm:$0xff]
        %v688 = vld [vmem:[#allocation5 + $0x728] sm:$0xff]
        %v689 = vld [vmem:[#allocation5 + $0x730] sm:$0xff]
        %v690 = vld [vmem:[#allocation5 + $0x738] sm:$0xff]
        %v691 = vld [vmem:[#allocation5 + $0x740] sm:$0xff]
        %v692 = vld [vmem:[#allocation5 + $0x748] sm:$0xff]
        %v693 = vld [vmem:[#allocation5 + $0x750] sm:$0xff]
        %v694 = vld [vmem:[#allocation5 + $0x758] sm:$0xff]
        %v695 = vld [vmem:[#allocation5 + $0x760] sm:$0xff]
        %v696 = vld [vmem:[#allocation5 + $0x768] sm:$0xff]
        %v697 = vld [vmem:[#allocation5 + $0x770] sm:$0xff]
        %v698 = vld [vmem:[#allocation5 + $0x778] sm:$0xff]
        %v699 = vld [vmem:[#allocation5 + $0x780] sm:$0xff]
        %v700 = vld [vmem:[#allocation5 + $0x788] sm:$0xff]
        %v701 = vld [vmem:[#allocation5 + $0x790] sm:$0xff]
        %v702 = vld [vmem:[#allocation5 + $0x798] sm:$0xff]
        %v703 = vld [vmem:[#allocation5 + $0x7a0] sm:$0xff]
        %v704 = vld [vmem:[#allocation5 + $0x7a8] sm:$0xff]
        %v705 = vld [vmem:[#allocation5 + $0x7b0] sm:$0xff]
        %v706 = vld [vmem:[#allocation5 + $0x7b8] sm:$0xff]
        %v707 = vld [vmem:[#allocation5 + $0x7c0] sm:$0xff]
        %v708 = vld [vmem:[#allocation5 + $0x7c8] sm:$0xff]
        %v709 = vld [vmem:[#allocation5 + $0x7d0] sm:$0xff]
        %v710 = vld [vmem:[#allocation5 + $0x7d8] sm:$0xff]
        %v711 = vld [vmem:[#allocation5 + $0x7e0] sm:$0xff]
        %v712 = vld [vmem:[#allocation5 + $0x7e8] sm:$0xff]
        %v713 = vld [vmem:[#allocation5 + $0x7f0] sm:$0xff]
        %v714 = vld [vmem:[#allocation5 + $0x7f8] sm:$0xff]
        %v715 = vld [vmem:[#allocation7] sm:$0xf]
        %v717 = vperm.slane %v715, 0
        %v718 = vperm.slane %v715, 1
        %v719 = vperm.slane %v715, 2
        %v720 = vperm.slane %v715, 3
        %v733 = vunpack.c.l.b16 %v451
        %v734 = vunpack.c.h.b16 %v451
        %v735 = vunpack.c.l.b16 %v452
        %v736 = vunpack.c.h.b16 %v452
        %v737 = vunpack.c.l.b16 %v453
        %v738 = vunpack.c.h.b16 %v453
        %v739 = vunpack.c.l.b16 %v454
        %v740 = vunpack.c.h.b16 %v454
        %v741 = vunpack.c.l.b16 %v455
        %v742 = vunpack.c.h.b16 %v455
        %v743 = vunpack.c.l.b16 %v456
        %v744 = vunpack.c.h.b16 %v456
        %v745 = vunpack.c.l.b16 %v457
        %v746 = vunpack.c.h.b16 %v457
        %v747 = vunpack.c.l.b16 %v458
        %v748 = vunpack.c.h.b16 %v458
        %v749 = vpack.c.b16 %v741, %v733
        %v750 = vpack.c.b16 %v742, %v734
        %v751 = vpack.c.b16 %v743, %v735
        %v752 = vpack.c.b16 %v744, %v736
        %v753 = vpack.c.b16 %v745, %v737
        %v754 = vpack.c.b16 %v746, %v738
        %v755 = vpack.c.b16 %v747, %v739
        %v756 = vpack.c.b16 %v748, %v740
        %v1021 = vunpack.c.l.b16 %v459
        %v1022 = vunpack.c.h.b16 %v459
        %v1023 = vunpack.c.l.b16 %v460
        %v1024 = vunpack.c.h.b16 %v460
        %v1025 = vunpack.c.l.b16 %v461
        %v1026 = vunpack.c.h.b16 %v461
        %v1027 = vunpack.c.l.b16 %v462
        %v1028 = vunpack.c.h.b16 %v462
        %v1029 = vunpack.c.l.b16 %v463
        %v1030 = vunpack.c.h.b16 %v463
        %v1031 = vunpack.c.l.b16 %v464
        %v1032 = vunpack.c.h.b16 %v464
        %v1033 = vunpack.c.l.b16 %v465
        %v1034 = vunpack.c.h.b16 %v465
        %v1035 = vunpack.c.l.b16 %v466
        %v1036 = vunpack.c.h.b16 %v466
        %v1037 = vunpack.c.l.b16 %v467
        %v1038 = vunpack.c.h.b16 %v467
        %v1039 = vunpack.c.l.b16 %v468
        %v1040 = vunpack.c.h.b16 %v468
        %v1041 = vunpack.c.l.b16 %v469
        %v1042 = vunpack.c.h.b16 %v469
        %v1043 = vunpack.c.l.b16 %v470
        %v1044 = vunpack.c.h.b16 %v470
        %v1045 = vunpack.c.l.b16 %v471
        %v1046 = vunpack.c.h.b16 %v471
        %v1047 = vunpack.c.l.b16 %v472
        %v1048 = vunpack.c.h.b16 %v472
        %v1049 = vunpack.c.l.b16 %v473
        %v1050 = vunpack.c.h.b16 %v473
        %v1051 = vunpack.c.l.b16 %v474
        %v1052 = vunpack.c.h.b16 %v474
        %v1053 = vunpack.c.l.b16 %v475
        %v1054 = vunpack.c.h.b16 %v475
        %v1055 = vunpack.c.l.b16 %v476
        %v1056 = vunpack.c.h.b16 %v476
        %v1057 = vunpack.c.l.b16 %v477
        %v1058 = vunpack.c.h.b16 %v477
        %v1059 = vunpack.c.l.b16 %v478
        %v1060 = vunpack.c.h.b16 %v478
        %v1061 = vunpack.c.l.b16 %v479
        %v1062 = vunpack.c.h.b16 %v479
        %v1063 = vunpack.c.l.b16 %v480
        %v1064 = vunpack.c.h.b16 %v480
        %v1065 = vunpack.c.l.b16 %v481
        %v1066 = vunpack.c.h.b16 %v481
        %v1067 = vunpack.c.l.b16 %v482
        %v1068 = vunpack.c.h.b16 %v482
        %v1069 = vunpack.c.l.b16 %v483
        %v1070 = vunpack.c.h.b16 %v483
        %v1071 = vunpack.c.l.b16 %v484
        %v1072 = vunpack.c.h.b16 %v484
        %v1073 = vunpack.c.l.b16 %v485
        %v1074 = vunpack.c.h.b16 %v485
        %v1075 = vunpack.c.l.b16 %v486
        %v1076 = vunpack.c.h.b16 %v486
        %v1077 = vunpack.c.l.b16 %v487
        %v1078 = vunpack.c.h.b16 %v487
        %v1079 = vunpack.c.l.b16 %v488
        %v1080 = vunpack.c.h.b16 %v488
        %v1081 = vunpack.c.l.b16 %v489
        %v1082 = vunpack.c.h.b16 %v489
        %v1083 = vunpack.c.l.b16 %v490
        %v1084 = vunpack.c.h.b16 %v490
        %v1085 = vunpack.c.l.b16 %v491
        %v1086 = vunpack.c.h.b16 %v491
        %v1087 = vunpack.c.l.b16 %v492
        %v1088 = vunpack.c.h.b16 %v492
        %v1089 = vunpack.c.l.b16 %v493
        %v1090 = vunpack.c.h.b16 %v493
        %v1091 = vunpack.c.l.b16 %v494
        %v1092 = vunpack.c.h.b16 %v494
        %v1093 = vunpack.c.l.b16 %v495
        %v1094 = vunpack.c.h.b16 %v495
        %v1095 = vunpack.c.l.b16 %v496
        %v1096 = vunpack.c.h.b16 %v496
        %v1097 = vunpack.c.l.b16 %v497
        %v1098 = vunpack.c.h.b16 %v497
        %v1099 = vunpack.c.l.b16 %v498
        %v1100 = vunpack.c.h.b16 %v498
        %v1101 = vunpack.c.l.b16 %v499
        %v1102 = vunpack.c.h.b16 %v499
        %v1103 = vunpack.c.l.b16 %v500
        %v1104 = vunpack.c.h.b16 %v500
        %v1105 = vunpack.c.l.b16 %v501
        %v1106 = vunpack.c.h.b16 %v501
        %v1107 = vunpack.c.l.b16 %v502
        %v1108 = vunpack.c.h.b16 %v502
        %v1109 = vunpack.c.l.b16 %v503
        %v1110 = vunpack.c.h.b16 %v503
        %v1111 = vunpack.c.l.b16 %v504
        %v1112 = vunpack.c.h.b16 %v504
        %v1113 = vunpack.c.l.b16 %v505
        %v1114 = vunpack.c.h.b16 %v505
        %v1115 = vunpack.c.l.b16 %v506
        %v1116 = vunpack.c.h.b16 %v506
        %v1117 = vunpack.c.l.b16 %v507
        %v1118 = vunpack.c.h.b16 %v507
        %v1119 = vunpack.c.l.b16 %v508
        %v1120 = vunpack.c.h.b16 %v508
        %v1121 = vunpack.c.l.b16 %v509
        %v1122 = vunpack.c.h.b16 %v509
        %v1123 = vunpack.c.l.b16 %v510
        %v1124 = vunpack.c.h.b16 %v510
        %v1125 = vunpack.c.l.b16 %v511
        %v1126 = vunpack.c.h.b16 %v511
        %v1127 = vunpack.c.l.b16 %v512
        %v1128 = vunpack.c.h.b16 %v512
        %v1129 = vunpack.c.l.b16 %v513
        %v1130 = vunpack.c.h.b16 %v513
        %v1131 = vunpack.c.l.b16 %v514
        %v1132 = vunpack.c.h.b16 %v514
        %v1133 = vunpack.c.l.b16 %v515
        %v1134 = vunpack.c.h.b16 %v515
        %v1135 = vunpack.c.l.b16 %v516
        %v1136 = vunpack.c.h.b16 %v516
        %v1137 = vunpack.c.l.b16 %v517
        %v1138 = vunpack.c.h.b16 %v517
        %v1139 = vunpack.c.l.b16 %v518
        %v1140 = vunpack.c.h.b16 %v518
        %v1141 = vunpack.c.l.b16 %v519
        %v1142 = vunpack.c.h.b16 %v519
        %v1143 = vunpack.c.l.b16 %v520
        %v1144 = vunpack.c.h.b16 %v520
        %v1145 = vunpack.c.l.b16 %v521
        %v1146 = vunpack.c.h.b16 %v521
        %v1147 = vunpack.c.l.b16 %v522
        %v1148 = vunpack.c.h.b16 %v522
        %v1149 = vunpack.c.l.b16 %v523
        %v1150 = vunpack.c.h.b16 %v523
        %v1151 = vunpack.c.l.b16 %v524
        %v1152 = vunpack.c.h.b16 %v524
        %v1153 = vunpack.c.l.b16 %v525
        %v1154 = vunpack.c.h.b16 %v525
        %v1155 = vunpack.c.l.b16 %v526
        %v1156 = vunpack.c.h.b16 %v526
        %v1157 = vunpack.c.l.b16 %v527
        %v1158 = vunpack.c.h.b16 %v527
        %v1159 = vunpack.c.l.b16 %v528
        %v1160 = vunpack.c.h.b16 %v528
        %v1161 = vunpack.c.l.b16 %v529
        %v1162 = vunpack.c.h.b16 %v529
        %v1163 = vunpack.c.l.b16 %v530
        %v1164 = vunpack.c.h.b16 %v530
        %v1165 = vunpack.c.l.b16 %v531
        %v1166 = vunpack.c.h.b16 %v531
        %v1167 = vunpack.c.l.b16 %v532
        %v1168 = vunpack.c.h.b16 %v532
        %v1169 = vunpack.c.l.b16 %v533
        %v1170 = vunpack.c.h.b16 %v533
        %v1171 = vunpack.c.l.b16 %v534
        %v1172 = vunpack.c.h.b16 %v534
        %v1173 = vunpack.c.l.b16 %v535
        %v1174 = vunpack.c.h.b16 %v535
        %v1175 = vunpack.c.l.b16 %v536
        %v1176 = vunpack.c.h.b16 %v536
        %v1177 = vunpack.c.l.b16 %v537
        %v1178 = vunpack.c.h.b16 %v537
        %v1179 = vunpack.c.l.b16 %v538
        %v1180 = vunpack.c.h.b16 %v538
        %v1181 = vunpack.c.l.b16 %v539
        %v1182 = vunpack.c.h.b16 %v539
        %v1183 = vunpack.c.l.b16 %v540
        %v1184 = vunpack.c.h.b16 %v540
        %v1185 = vunpack.c.l.b16 %v541
        %v1186 = vunpack.c.h.b16 %v541
        %v1187 = vunpack.c.l.b16 %v542
        %v1188 = vunpack.c.h.b16 %v542
        %v1189 = vunpack.c.l.b16 %v543
        %v1190 = vunpack.c.h.b16 %v543
        %v1191 = vunpack.c.l.b16 %v544
        %v1192 = vunpack.c.h.b16 %v544
        %v1193 = vunpack.c.l.b16 %v545
        %v1194 = vunpack.c.h.b16 %v545
        %v1195 = vunpack.c.l.b16 %v546
        %v1196 = vunpack.c.h.b16 %v546
        %v1197 = vunpack.c.l.b16 %v547
        %v1198 = vunpack.c.h.b16 %v547
        %v1199 = vunpack.c.l.b16 %v548
        %v1200 = vunpack.c.h.b16 %v548
        %v1201 = vunpack.c.l.b16 %v549
        %v1202 = vunpack.c.h.b16 %v549
        %v1203 = vunpack.c.l.b16 %v550
        %v1204 = vunpack.c.h.b16 %v550
        %v1205 = vunpack.c.l.b16 %v551
        %v1206 = vunpack.c.h.b16 %v551
        %v1207 = vunpack.c.l.b16 %v552
        %v1208 = vunpack.c.h.b16 %v552
        %v1209 = vunpack.c.l.b16 %v553
        %v1210 = vunpack.c.h.b16 %v553
        %v1211 = vunpack.c.l.b16 %v554
        %v1212 = vunpack.c.h.b16 %v554
        %v1213 = vunpack.c.l.b16 %v555
        %v1214 = vunpack.c.h.b16 %v555
        %v1215 = vunpack.c.l.b16 %v556
        %v1216 = vunpack.c.h.b16 %v556
        %v1217 = vunpack.c.l.b16 %v557
        %v1218 = vunpack.c.h.b16 %v557
        %v1219 = vunpack.c.l.b16 %v558
        %v1220 = vunpack.c.h.b16 %v558
        %v1221 = vunpack.c.l.b16 %v559
        %v1222 = vunpack.c.h.b16 %v559
        %v1223 = vunpack.c.l.b16 %v560
        %v1224 = vunpack.c.h.b16 %v560
        %v1225 = vunpack.c.l.b16 %v561
        %v1226 = vunpack.c.h.b16 %v561
        %v1227 = vunpack.c.l.b16 %v562
        %v1228 = vunpack.c.h.b16 %v562
        %v1229 = vunpack.c.l.b16 %v563
        %v1230 = vunpack.c.h.b16 %v563
        %v1231 = vunpack.c.l.b16 %v564
        %v1232 = vunpack.c.h.b16 %v564
        %v1233 = vunpack.c.l.b16 %v565
        %v1234 = vunpack.c.h.b16 %v565
        %v1235 = vunpack.c.l.b16 %v566
        %v1236 = vunpack.c.h.b16 %v566
        %v1237 = vunpack.c.l.b16 %v567
        %v1238 = vunpack.c.h.b16 %v567
        %v1239 = vunpack.c.l.b16 %v568
        %v1240 = vunpack.c.h.b16 %v568
        %v1241 = vunpack.c.l.b16 %v569
        %v1242 = vunpack.c.h.b16 %v569
        %v1243 = vunpack.c.l.b16 %v570
        %v1244 = vunpack.c.h.b16 %v570
        %v1245 = vunpack.c.l.b16 %v571
        %v1246 = vunpack.c.h.b16 %v571
        %v1247 = vunpack.c.l.b16 %v572
        %v1248 = vunpack.c.h.b16 %v572
        %v1249 = vunpack.c.l.b16 %v573
        %v1250 = vunpack.c.h.b16 %v573
        %v1251 = vunpack.c.l.b16 %v574
        %v1252 = vunpack.c.h.b16 %v574
        %v1253 = vunpack.c.l.b16 %v575
        %v1254 = vunpack.c.h.b16 %v575
        %v1255 = vunpack.c.l.b16 %v576
        %v1256 = vunpack.c.h.b16 %v576
        %v1257 = vunpack.c.l.b16 %v577
        %v1258 = vunpack.c.h.b16 %v577
        %v1259 = vunpack.c.l.b16 %v578
        %v1260 = vunpack.c.h.b16 %v578
        %v1261 = vunpack.c.l.b16 %v579
        %v1262 = vunpack.c.h.b16 %v579
        %v1263 = vunpack.c.l.b16 %v580
        %v1264 = vunpack.c.h.b16 %v580
        %v1265 = vunpack.c.l.b16 %v581
        %v1266 = vunpack.c.h.b16 %v581
        %v1267 = vunpack.c.l.b16 %v582
        %v1268 = vunpack.c.h.b16 %v582
        %v1269 = vunpack.c.l.b16 %v583
        %v1270 = vunpack.c.h.b16 %v583
        %v1271 = vunpack.c.l.b16 %v584
        %v1272 = vunpack.c.h.b16 %v584
        %v1273 = vunpack.c.l.b16 %v585
        %v1274 = vunpack.c.h.b16 %v585
        %v1275 = vunpack.c.l.b16 %v586
        %v1276 = vunpack.c.h.b16 %v586
        %v1277 = vunpack.c.l.b16 %v587
        %v1278 = vunpack.c.h.b16 %v587
        %v1279 = vunpack.c.l.b16 %v588
        %v1280 = vunpack.c.h.b16 %v588
        %v1281 = vunpack.c.l.b16 %v589
        %v1282 = vunpack.c.h.b16 %v589
        %v1283 = vunpack.c.l.b16 %v590
        %v1284 = vunpack.c.h.b16 %v590
        %v1285 = vunpack.c.l.b16 %v591
        %v1286 = vunpack.c.h.b16 %v591
        %v1287 = vunpack.c.l.b16 %v592
        %v1288 = vunpack.c.h.b16 %v592
        %v1289 = vunpack.c.l.b16 %v593
        %v1290 = vunpack.c.h.b16 %v593
        %v1291 = vunpack.c.l.b16 %v594
        %v1292 = vunpack.c.h.b16 %v594
        %v1293 = vunpack.c.l.b16 %v595
        %v1294 = vunpack.c.h.b16 %v595
        %v1295 = vunpack.c.l.b16 %v596
        %v1296 = vunpack.c.h.b16 %v596
        %v1297 = vunpack.c.l.b16 %v597
        %v1298 = vunpack.c.h.b16 %v597
        %v1299 = vunpack.c.l.b16 %v598
        %v1300 = vunpack.c.h.b16 %v598
        %v1301 = vunpack.c.l.b16 %v599
        %v1302 = vunpack.c.h.b16 %v599
        %v1303 = vunpack.c.l.b16 %v600
        %v1304 = vunpack.c.h.b16 %v600
        %v1305 = vunpack.c.l.b16 %v601
        %v1306 = vunpack.c.h.b16 %v601
        %v1307 = vunpack.c.l.b16 %v602
        %v1308 = vunpack.c.h.b16 %v602
        %v1309 = vunpack.c.l.b16 %v603
        %v1310 = vunpack.c.h.b16 %v603
        %v1311 = vunpack.c.l.b16 %v604
        %v1312 = vunpack.c.h.b16 %v604
        %v1313 = vunpack.c.l.b16 %v605
        %v1314 = vunpack.c.h.b16 %v605
        %v1315 = vunpack.c.l.b16 %v606
        %v1316 = vunpack.c.h.b16 %v606
        %v1317 = vunpack.c.l.b16 %v607
        %v1318 = vunpack.c.h.b16 %v607
        %v1319 = vunpack.c.l.b16 %v608
        %v1320 = vunpack.c.h.b16 %v608
        %v1321 = vunpack.c.l.b16 %v609
        %v1322 = vunpack.c.h.b16 %v609
        %v1323 = vunpack.c.l.b16 %v610
        %v1324 = vunpack.c.h.b16 %v610
        %v1325 = vunpack.c.l.b16 %v611
        %v1326 = vunpack.c.h.b16 %v611
        %v1327 = vunpack.c.l.b16 %v612
        %v1328 = vunpack.c.h.b16 %v612
        %v1329 = vunpack.c.l.b16 %v613
        %v1330 = vunpack.c.h.b16 %v613
        %v1331 = vunpack.c.l.b16 %v614
        %v1332 = vunpack.c.h.b16 %v614
        %v1333 = vunpack.c.l.b16 %v615
        %v1334 = vunpack.c.h.b16 %v615
        %v1335 = vunpack.c.l.b16 %v616
        %v1336 = vunpack.c.h.b16 %v616
        %v1337 = vunpack.c.l.b16 %v617
        %v1338 = vunpack.c.h.b16 %v617
        %v1339 = vunpack.c.l.b16 %v618
        %v1340 = vunpack.c.h.b16 %v618
        %v1341 = vunpack.c.l.b16 %v619
        %v1342 = vunpack.c.h.b16 %v619
        %v1343 = vunpack.c.l.b16 %v620
        %v1344 = vunpack.c.h.b16 %v620
        %v1345 = vunpack.c.l.b16 %v621
        %v1346 = vunpack.c.h.b16 %v621
        %v1347 = vunpack.c.l.b16 %v622
        %v1348 = vunpack.c.h.b16 %v622
        %v1349 = vunpack.c.l.b16 %v623
        %v1350 = vunpack.c.h.b16 %v623
        %v1351 = vunpack.c.l.b16 %v624
        %v1352 = vunpack.c.h.b16 %v624
        %v1353 = vunpack.c.l.b16 %v625
        %v1354 = vunpack.c.h.b16 %v625
        %v1355 = vunpack.c.l.b16 %v626
        %v1356 = vunpack.c.h.b16 %v626
        %v1357 = vunpack.c.l.b16 %v627
        %v1358 = vunpack.c.h.b16 %v627
        %v1359 = vunpack.c.l.b16 %v628
        %v1360 = vunpack.c.h.b16 %v628
        %v1361 = vunpack.c.l.b16 %v629
        %v1362 = vunpack.c.h.b16 %v629
        %v1363 = vunpack.c.l.b16 %v630
        %v1364 = vunpack.c.h.b16 %v630
        %v1365 = vunpack.c.l.b16 %v631
        %v1366 = vunpack.c.h.b16 %v631
        %v1367 = vunpack.c.l.b16 %v632
        %v1368 = vunpack.c.h.b16 %v632
        %v1369 = vunpack.c.l.b16 %v633
        %v1370 = vunpack.c.h.b16 %v633
        %v1371 = vunpack.c.l.b16 %v634
        %v1372 = vunpack.c.h.b16 %v634
        %v1373 = vunpack.c.l.b16 %v635
        %v1374 = vunpack.c.h.b16 %v635
        %v1375 = vunpack.c.l.b16 %v636
        %v1376 = vunpack.c.h.b16 %v636
        %v1377 = vunpack.c.l.b16 %v637
        %v1378 = vunpack.c.h.b16 %v637
        %v1379 = vunpack.c.l.b16 %v638
        %v1380 = vunpack.c.h.b16 %v638
        %v1381 = vunpack.c.l.b16 %v639
        %v1382 = vunpack.c.h.b16 %v639
        %v1383 = vunpack.c.l.b16 %v640
        %v1384 = vunpack.c.h.b16 %v640
        %v1385 = vunpack.c.l.b16 %v641
        %v1386 = vunpack.c.h.b16 %v641
        %v1387 = vunpack.c.l.b16 %v642
        %v1388 = vunpack.c.h.b16 %v642
        %v1389 = vunpack.c.l.b16 %v643
        %v1390 = vunpack.c.h.b16 %v643
        %v1391 = vunpack.c.l.b16 %v644
        %v1392 = vunpack.c.h.b16 %v644
        %v1393 = vunpack.c.l.b16 %v645
        %v1394 = vunpack.c.h.b16 %v645
        %v1395 = vunpack.c.l.b16 %v646
        %v1396 = vunpack.c.h.b16 %v646
        %v1397 = vunpack.c.l.b16 %v647
        %v1398 = vunpack.c.h.b16 %v647
        %v1399 = vunpack.c.l.b16 %v648
        %v1400 = vunpack.c.h.b16 %v648
        %v1401 = vunpack.c.l.b16 %v649
        %v1402 = vunpack.c.h.b16 %v649
        %v1403 = vunpack.c.l.b16 %v650
        %v1404 = vunpack.c.h.b16 %v650
        %v1405 = vunpack.c.l.b16 %v651
        %v1406 = vunpack.c.h.b16 %v651
        %v1407 = vunpack.c.l.b16 %v652
        %v1408 = vunpack.c.h.b16 %v652
        %v1409 = vunpack.c.l.b16 %v653
        %v1410 = vunpack.c.h.b16 %v653
        %v1411 = vunpack.c.l.b16 %v654
        %v1412 = vunpack.c.h.b16 %v654
        %v1413 = vunpack.c.l.b16 %v655
        %v1414 = vunpack.c.h.b16 %v655
        %v1415 = vunpack.c.l.b16 %v656
        %v1416 = vunpack.c.h.b16 %v656
        %v1417 = vunpack.c.l.b16 %v657
        %v1418 = vunpack.c.h.b16 %v657
        %v1419 = vunpack.c.l.b16 %v658
        %v1420 = vunpack.c.h.b16 %v658
        %v1421 = vunpack.c.l.b16 %v659
        %v1422 = vunpack.c.h.b16 %v659
        %v1423 = vunpack.c.l.b16 %v660
        %v1424 = vunpack.c.h.b16 %v660
        %v1425 = vunpack.c.l.b16 %v661
        %v1426 = vunpack.c.h.b16 %v661
        %v1427 = vunpack.c.l.b16 %v662
        %v1428 = vunpack.c.h.b16 %v662
        %v1429 = vunpack.c.l.b16 %v663
        %v1430 = vunpack.c.h.b16 %v663
        %v1431 = vunpack.c.l.b16 %v664
        %v1432 = vunpack.c.h.b16 %v664
        %v1433 = vunpack.c.l.b16 %v665
        %v1434 = vunpack.c.h.b16 %v665
        %v1435 = vunpack.c.l.b16 %v666
        %v1436 = vunpack.c.h.b16 %v666
        %v1437 = vunpack.c.l.b16 %v667
        %v1438 = vunpack.c.h.b16 %v667
        %v1439 = vunpack.c.l.b16 %v668
        %v1440 = vunpack.c.h.b16 %v668
        %v1441 = vunpack.c.l.b16 %v669
        %v1442 = vunpack.c.h.b16 %v669
        %v1443 = vunpack.c.l.b16 %v670
        %v1444 = vunpack.c.h.b16 %v670
        %v1445 = vunpack.c.l.b16 %v671
        %v1446 = vunpack.c.h.b16 %v671
        %v1447 = vunpack.c.l.b16 %v672
        %v1448 = vunpack.c.h.b16 %v672
        %v1449 = vunpack.c.l.b16 %v673
        %v1450 = vunpack.c.h.b16 %v673
        %v1451 = vunpack.c.l.b16 %v674
        %v1452 = vunpack.c.h.b16 %v674
        %v1453 = vunpack.c.l.b16 %v675
        %v1454 = vunpack.c.h.b16 %v675
        %v1455 = vunpack.c.l.b16 %v676
        %v1456 = vunpack.c.h.b16 %v676
        %v1457 = vunpack.c.l.b16 %v677
        %v1458 = vunpack.c.h.b16 %v677
        %v1459 = vunpack.c.l.b16 %v678
        %v1460 = vunpack.c.h.b16 %v678
        %v1461 = vunpack.c.l.b16 %v679
        %v1462 = vunpack.c.h.b16 %v679
        %v1463 = vunpack.c.l.b16 %v680
        %v1464 = vunpack.c.h.b16 %v680
        %v1465 = vunpack.c.l.b16 %v681
        %v1466 = vunpack.c.h.b16 %v681
        %v1467 = vunpack.c.l.b16 %v682
        %v1468 = vunpack.c.h.b16 %v682
        %v1469 = vunpack.c.l.b16 %v683
        %v1470 = vunpack.c.h.b16 %v683
        %v1471 = vunpack.c.l.b16 %v684
        %v1472 = vunpack.c.h.b16 %v684
        %v1473 = vunpack.c.l.b16 %v685
        %v1474 = vunpack.c.h.b16 %v685
        %v1475 = vunpack.c.l.b16 %v686
        %v1476 = vunpack.c.h.b16 %v686
        %v1477 = vunpack.c.l.b16 %v687
        %v1478 = vunpack.c.h.b16 %v687
        %v1479 = vunpack.c.l.b16 %v688
        %v1480 = vunpack.c.h.b16 %v688
        %v1481 = vunpack.c.l.b16 %v689
        %v1482 = vunpack.c.h.b16 %v689
        %v1483 = vunpack.c.l.b16 %v690
        %v1484 = vunpack.c.h.b16 %v690
        %v1485 = vunpack.c.l.b16 %v691
        %v1486 = vunpack.c.h.b16 %v691
        %v1487 = vunpack.c.l.b16 %v692
        %v1488 = vunpack.c.h.b16 %v692
        %v1489 = vunpack.c.l.b16 %v693
        %v1490 = vunpack.c.h.b16 %v693
        %v1491 = vunpack.c.l.b16 %v694
        %v1492 = vunpack.c.h.b16 %v694
        %v1493 = vunpack.c.l.b16 %v695
        %v1494 = vunpack.c.h.b16 %v695
        %v1495 = vunpack.c.l.b16 %v696
        %v1496 = vunpack.c.h.b16 %v696
        %v1497 = vunpack.c.l.b16 %v697
        %v1498 = vunpack.c.h.b16 %v697
        %v1499 = vunpack.c.l.b16 %v698
        %v1500 = vunpack.c.h.b16 %v698
        %v1501 = vunpack.c.l.b16 %v699
        %v1502 = vunpack.c.h.b16 %v699
        %v1503 = vunpack.c.l.b16 %v700
        %v1504 = vunpack.c.h.b16 %v700
        %v1505 = vunpack.c.l.b16 %v701
        %v1506 = vunpack.c.h.b16 %v701
        %v1507 = vunpack.c.l.b16 %v702
        %v1508 = vunpack.c.h.b16 %v702
        %v1509 = vunpack.c.l.b16 %v703
        %v1510 = vunpack.c.h.b16 %v703
        %v1511 = vunpack.c.l.b16 %v704
        %v1512 = vunpack.c.h.b16 %v704
        %v1513 = vunpack.c.l.b16 %v705
        %v1514 = vunpack.c.h.b16 %v705
        %v1515 = vunpack.c.l.b16 %v706
        %v1516 = vunpack.c.h.b16 %v706
        %v1517 = vunpack.c.l.b16 %v707
        %v1518 = vunpack.c.h.b16 %v707
        %v1519 = vunpack.c.l.b16 %v708
        %v1520 = vunpack.c.h.b16 %v708
        %v1521 = vunpack.c.l.b16 %v709
        %v1522 = vunpack.c.h.b16 %v709
        %v1523 = vunpack.c.l.b16 %v710
        %v1524 = vunpack.c.h.b16 %v710
        %v1525 = vunpack.c.l.b16 %v711
        %v1526 = vunpack.c.h.b16 %v711
        %v1527 = vunpack.c.l.b16 %v712
        %v1528 = vunpack.c.h.b16 %v712
        %v1529 = vunpack.c.l.b16 %v713
        %v1530 = vunpack.c.h.b16 %v713
        %v1531 = vunpack.c.l.b16 %v714
        %v1532 = vunpack.c.h.b16 %v714
        %v1533 = vpack.c.b16 %v1025, %v1021
        %v1534 = vpack.c.b16 %v1026, %v1022
        %v1535 = vpack.c.b16 %v1027, %v1023
        %v1536 = vpack.c.b16 %v1028, %v1024
        %v1537 = vpack.c.b16 %v1033, %v1029
        %v1538 = vpack.c.b16 %v1034, %v1030
        %v1539 = vpack.c.b16 %v1035, %v1031
        %v1540 = vpack.c.b16 %v1036, %v1032
        %v1541 = vpack.c.b16 %v1041, %v1037
        %v1542 = vpack.c.b16 %v1042, %v1038
        %v1543 = vpack.c.b16 %v1043, %v1039
        %v1544 = vpack.c.b16 %v1044, %v1040
        %v1545 = vpack.c.b16 %v1049, %v1045
        %v1546 = vpack.c.b16 %v1050, %v1046
        %v1547 = vpack.c.b16 %v1051, %v1047
        %v1548 = vpack.c.b16 %v1052, %v1048
        %v1549 = vpack.c.b16 %v1057, %v1053
        %v1550 = vpack.c.b16 %v1058, %v1054
        %v1551 = vpack.c.b16 %v1059, %v1055
        %v1552 = vpack.c.b16 %v1060, %v1056
        %v1553 = vpack.c.b16 %v1065, %v1061
        %v1554 = vpack.c.b16 %v1066, %v1062
        %v1555 = vpack.c.b16 %v1067, %v1063
        %v1556 = vpack.c.b16 %v1068, %v1064
        %v1557 = vpack.c.b16 %v1073, %v1069
        %v1558 = vpack.c.b16 %v1074, %v1070
        %v1559 = vpack.c.b16 %v1075, %v1071
        %v1560 = vpack.c.b16 %v1076, %v1072
        %v1561 = vpack.c.b16 %v1081, %v1077
        %v1562 = vpack.c.b16 %v1082, %v1078
        %v1563 = vpack.c.b16 %v1083, %v1079
        %v1564 = vpack.c.b16 %v1084, %v1080
        %v1565 = vpack.c.b16 %v1089, %v1085
        %v1566 = vpack.c.b16 %v1090, %v1086
        %v1567 = vpack.c.b16 %v1091, %v1087
        %v1568 = vpack.c.b16 %v1092, %v1088
        %v1569 = vpack.c.b16 %v1097, %v1093
        %v1570 = vpack.c.b16 %v1098, %v1094
        %v1571 = vpack.c.b16 %v1099, %v1095
        %v1572 = vpack.c.b16 %v1100, %v1096
        %v1573 = vpack.c.b16 %v1105, %v1101
        %v1574 = vpack.c.b16 %v1106, %v1102
        %v1575 = vpack.c.b16 %v1107, %v1103
        %v1576 = vpack.c.b16 %v1108, %v1104
        %v1577 = vpack.c.b16 %v1113, %v1109
        %v1578 = vpack.c.b16 %v1114, %v1110
        %v1579 = vpack.c.b16 %v1115, %v1111
        %v1580 = vpack.c.b16 %v1116, %v1112
        %v1581 = vpack.c.b16 %v1121, %v1117
        %v1582 = vpack.c.b16 %v1122, %v1118
        %v1583 = vpack.c.b16 %v1123, %v1119
        %v1584 = vpack.c.b16 %v1124, %v1120
        %v1585 = vpack.c.b16 %v1129, %v1125
        %v1586 = vpack.c.b16 %v1130, %v1126
        %v1587 = vpack.c.b16 %v1131, %v1127
        %v1588 = vpack.c.b16 %v1132, %v1128
        %v1589 = vpack.c.b16 %v1137, %v1133
        %v1590 = vpack.c.b16 %v1138, %v1134
        %v1591 = vpack.c.b16 %v1139, %v1135
        %v1592 = vpack.c.b16 %v1140, %v1136
        %v1593 = vpack.c.b16 %v1145, %v1141
        %v1594 = vpack.c.b16 %v1146, %v1142
        %v1595 = vpack.c.b16 %v1147, %v1143
        %v1596 = vpack.c.b16 %v1148, %v1144
        %v1597 = vpack.c.b16 %v1153, %v1149
        %v1598 = vpack.c.b16 %v1154, %v1150
        %v1599 = vpack.c.b16 %v1155, %v1151
        %v1600 = vpack.c.b16 %v1156, %v1152
        %v1601 = vpack.c.b16 %v1161, %v1157
        %v1602 = vpack.c.b16 %v1162, %v1158
        %v1603 = vpack.c.b16 %v1163, %v1159
        %v1604 = vpack.c.b16 %v1164, %v1160
        %v1605 = vpack.c.b16 %v1169, %v1165
        %v1606 = vpack.c.b16 %v1170, %v1166
        %v1607 = vpack.c.b16 %v1171, %v1167
        %v1608 = vpack.c.b16 %v1172, %v1168
        %v1609 = vpack.c.b16 %v1177, %v1173
        %v1610 = vpack.c.b16 %v1178, %v1174
        %v1611 = vpack.c.b16 %v1179, %v1175
        %v1612 = vpack.c.b16 %v1180, %v1176
        %v1613 = vpack.c.b16 %v1185, %v1181
        %v1614 = vpack.c.b16 %v1186, %v1182
        %v1615 = vpack.c.b16 %v1187, %v1183
        %v1616 = vpack.c.b16 %v1188, %v1184
        %v1617 = vpack.c.b16 %v1193, %v1189
        %v1618 = vpack.c.b16 %v1194, %v1190
        %v1619 = vpack.c.b16 %v1195, %v1191
        %v1620 = vpack.c.b16 %v1196, %v1192
        %v1621 = vpack.c.b16 %v1201, %v1197
        %v1622 = vpack.c.b16 %v1202, %v1198
        %v1623 = vpack.c.b16 %v1203, %v1199
        %v1624 = vpack.c.b16 %v1204, %v1200
        %v1625 = vpack.c.b16 %v1209, %v1205
        %v1626 = vpack.c.b16 %v1210, %v1206
        %v1627 = vpack.c.b16 %v1211, %v1207
        %v1628 = vpack.c.b16 %v1212, %v1208
        %v1629 = vpack.c.b16 %v1217, %v1213
        %v1630 = vpack.c.b16 %v1218, %v1214
        %v1631 = vpack.c.b16 %v1219, %v1215
        %v1632 = vpack.c.b16 %v1220, %v1216
        %v1633 = vpack.c.b16 %v1225, %v1221
        %v1634 = vpack.c.b16 %v1226, %v1222
        %v1635 = vpack.c.b16 %v1227, %v1223
        %v1636 = vpack.c.b16 %v1228, %v1224
        %v1637 = vpack.c.b16 %v1233, %v1229
        %v1638 = vpack.c.b16 %v1234, %v1230
        %v1639 = vpack.c.b16 %v1235, %v1231
        %v1640 = vpack.c.b16 %v1236, %v1232
        %v1641 = vpack.c.b16 %v1241, %v1237
        %v1642 = vpack.c.b16 %v1242, %v1238
        %v1643 = vpack.c.b16 %v1243, %v1239
        %v1644 = vpack.c.b16 %v1244, %v1240
        %v1645 = vpack.c.b16 %v1249, %v1245
        %v1646 = vpack.c.b16 %v1250, %v1246
        %v1647 = vpack.c.b16 %v1251, %v1247
        %v1648 = vpack.c.b16 %v1252, %v1248
        %v1649 = vpack.c.b16 %v1257, %v1253
        %v1650 = vpack.c.b16 %v1258, %v1254
        %v1651 = vpack.c.b16 %v1259, %v1255
        %v1652 = vpack.c.b16 %v1260, %v1256
        %v1653 = vpack.c.b16 %v1265, %v1261
        %v1654 = vpack.c.b16 %v1266, %v1262
        %v1655 = vpack.c.b16 %v1267, %v1263
        %v1656 = vpack.c.b16 %v1268, %v1264
        %v1657 = vpack.c.b16 %v1273, %v1269
        %v1658 = vpack.c.b16 %v1274, %v1270
        %v1659 = vpack.c.b16 %v1275, %v1271
        %v1660 = vpack.c.b16 %v1276, %v1272
        %v1661 = vpack.c.b16 %v1281, %v1277
        %v1662 = vpack.c.b16 %v1282, %v1278
        %v1663 = vpack.c.b16 %v1283, %v1279
        %v1664 = vpack.c.b16 %v1284, %v1280
        %v1665 = vpack.c.b16 %v1289, %v1285
        %v1666 = vpack.c.b16 %v1290, %v1286
        %v1667 = vpack.c.b16 %v1291, %v1287
        %v1668 = vpack.c.b16 %v1292, %v1288
        %v1669 = vpack.c.b16 %v1297, %v1293
        %v1670 = vpack.c.b16 %v1298, %v1294
        %v1671 = vpack.c.b16 %v1299, %v1295
        %v1672 = vpack.c.b16 %v1300, %v1296
        %v1673 = vpack.c.b16 %v1305, %v1301
        %v1674 = vpack.c.b16 %v1306, %v1302
        %v1675 = vpack.c.b16 %v1307, %v1303
        %v1676 = vpack.c.b16 %v1308, %v1304
        %v1677 = vpack.c.b16 %v1313, %v1309
        %v1678 = vpack.c.b16 %v1314, %v1310
        %v1679 = vpack.c.b16 %v1315, %v1311
        %v1680 = vpack.c.b16 %v1316, %v1312
        %v1681 = vpack.c.b16 %v1321, %v1317
        %v1682 = vpack.c.b16 %v1322, %v1318
        %v1683 = vpack.c.b16 %v1323, %v1319
        %v1684 = vpack.c.b16 %v1324, %v1320
        %v1685 = vpack.c.b16 %v1329, %v1325
        %v1686 = vpack.c.b16 %v1330, %v1326
        %v1687 = vpack.c.b16 %v1331, %v1327
        %v1688 = vpack.c.b16 %v1332, %v1328
        %v1689 = vpack.c.b16 %v1337, %v1333
        %v1690 = vpack.c.b16 %v1338, %v1334
        %v1691 = vpack.c.b16 %v1339, %v1335
        %v1692 = vpack.c.b16 %v1340, %v1336
        %v1693 = vpack.c.b16 %v1345, %v1341
        %v1694 = vpack.c.b16 %v1346, %v1342
        %v1695 = vpack.c.b16 %v1347, %v1343
        %v1696 = vpack.c.b16 %v1348, %v1344
        %v1697 = vpack.c.b16 %v1353, %v1349
        %v1698 = vpack.c.b16 %v1354, %v1350
        %v1699 = vpack.c.b16 %v1355, %v1351
        %v1700 = vpack.c.b16 %v1356, %v1352
        %v1701 = vpack.c.b16 %v1361, %v1357
        %v1702 = vpack.c.b16 %v1362, %v1358
        %v1703 = vpack.c.b16 %v1363, %v1359
        %v1704 = vpack.c.b16 %v1364, %v1360
        %v1705 = vpack.c.b16 %v1369, %v1365
        %v1706 = vpack.c.b16 %v1370, %v1366
        %v1707 = vpack.c.b16 %v1371, %v1367
        %v1708 = vpack.c.b16 %v1372, %v1368
        %v1709 = vpack.c.b16 %v1377, %v1373
        %v1710 = vpack.c.b16 %v1378, %v1374
        %v1711 = vpack.c.b16 %v1379, %v1375
        %v1712 = vpack.c.b16 %v1380, %v1376
        %v1713 = vpack.c.b16 %v1385, %v1381
        %v1714 = vpack.c.b16 %v1386, %v1382
        %v1715 = vpack.c.b16 %v1387, %v1383
        %v1716 = vpack.c.b16 %v1388, %v1384
        %v1717 = vpack.c.b16 %v1393, %v1389
        %v1718 = vpack.c.b16 %v1394, %v1390
        %v1719 = vpack.c.b16 %v1395, %v1391
        %v1720 = vpack.c.b16 %v1396, %v1392
        %v1721 = vpack.c.b16 %v1401, %v1397
        %v1722 = vpack.c.b16 %v1402, %v1398
        %v1723 = vpack.c.b16 %v1403, %v1399
        %v1724 = vpack.c.b16 %v1404, %v1400
        %v1725 = vpack.c.b16 %v1409, %v1405
        %v1726 = vpack.c.b16 %v1410, %v1406
        %v1727 = vpack.c.b16 %v1411, %v1407
        %v1728 = vpack.c.b16 %v1412, %v1408
        %v1729 = vpack.c.b16 %v1417, %v1413
        %v1730 = vpack.c.b16 %v1418, %v1414
        %v1731 = vpack.c.b16 %v1419, %v1415
        %v1732 = vpack.c.b16 %v1420, %v1416
        %v1733 = vpack.c.b16 %v1425, %v1421
        %v1734 = vpack.c.b16 %v1426, %v1422
        %v1735 = vpack.c.b16 %v1427, %v1423
        %v1736 = vpack.c.b16 %v1428, %v1424
        %v1737 = vpack.c.b16 %v1433, %v1429
        %v1738 = vpack.c.b16 %v1434, %v1430
        %v1739 = vpack.c.b16 %v1435, %v1431
        %v1740 = vpack.c.b16 %v1436, %v1432
        %v1741 = vpack.c.b16 %v1441, %v1437
        %v1742 = vpack.c.b16 %v1442, %v1438
        %v1743 = vpack.c.b16 %v1443, %v1439
        %v1744 = vpack.c.b16 %v1444, %v1440
        %v1745 = vpack.c.b16 %v1449, %v1445
        %v1746 = vpack.c.b16 %v1450, %v1446
        %v1747 = vpack.c.b16 %v1451, %v1447
        %v1748 = vpack.c.b16 %v1452, %v1448
        %v1749 = vpack.c.b16 %v1457, %v1453
        %v1750 = vpack.c.b16 %v1458, %v1454
        %v1751 = vpack.c.b16 %v1459, %v1455
        %v1752 = vpack.c.b16 %v1460, %v1456
        %v1753 = vpack.c.b16 %v1465, %v1461
        %v1754 = vpack.c.b16 %v1466, %v1462
        %v1755 = vpack.c.b16 %v1467, %v1463
        %v1756 = vpack.c.b16 %v1468, %v1464
        %v1757 = vpack.c.b16 %v1473, %v1469
        %v1758 = vpack.c.b16 %v1474, %v1470
        %v1759 = vpack.c.b16 %v1475, %v1471
        %v1760 = vpack.c.b16 %v1476, %v1472
        %v1761 = vpack.c.b16 %v1481, %v1477
        %v1762 = vpack.c.b16 %v1482, %v1478
        %v1763 = vpack.c.b16 %v1483, %v1479
        %v1764 = vpack.c.b16 %v1484, %v1480
        %v1765 = vpack.c.b16 %v1489, %v1485
        %v1766 = vpack.c.b16 %v1490, %v1486
        %v1767 = vpack.c.b16 %v1491, %v1487
        %v1768 = vpack.c.b16 %v1492, %v1488
        %v1769 = vpack.c.b16 %v1497, %v1493
        %v1770 = vpack.c.b16 %v1498, %v1494
        %v1771 = vpack.c.b16 %v1499, %v1495
        %v1772 = vpack.c.b16 %v1500, %v1496
        %v1773 = vpack.c.b16 %v1505, %v1501
        %v1774 = vpack.c.b16 %v1506, %v1502
        %v1775 = vpack.c.b16 %v1507, %v1503
        %v1776 = vpack.c.b16 %v1508, %v1504
        %v1777 = vpack.c.b16 %v1513, %v1509
        %v1778 = vpack.c.b16 %v1514, %v1510
        %v1779 = vpack.c.b16 %v1515, %v1511
        %v1780 = vpack.c.b16 %v1516, %v1512
        %v1781 = vpack.c.b16 %v1521, %v1517
        %v1782 = vpack.c.b16 %v1522, %v1518
        %v1783 = vpack.c.b16 %v1523, %v1519
        %v1784 = vpack.c.b16 %v1524, %v1520
        %v1785 = vpack.c.b16 %v1529, %v1525
        %v1786 = vpack.c.b16 %v1530, %v1526
        %v1787 = vpack.c.b16 %v1531, %v1527
        %v1788 = vpack.c.b16 %v1532, %v1528
        %2045 = vmatpush.bf16.msra.mxu0 %v1561
        %2046 = vmatpush.bf16.msra.mxu0 %v1557
        %2047 = vmatpush.bf16.msra.mxu0 %v1553
        %2048 = vmatpush.bf16.msra.mxu0 %v1549
        %2049 = vmatpush.bf16.msra.mxu0 %v1545
        %2050 = vmatpush.bf16.msra.mxu0 %v1541
        %2051 = vmatpush.bf16.msra.mxu0 %v1537
        %2052 = vmatpush.bf16.msra.mxu0 %v1533
        %2053 = vmatmul.bf16.gmra.mxu0 %v749
        %v2054 = vpop.f32.mrf.mxu0
        %v2055 = vadd.f32 %v717, %v2054
        %v2056 = vpop.f32.mrf.mxu0
        %v2057 = vadd.f32 %v717, %v2056
        %2058 = vdwg.mxu0
        %2059 = vmatpush.bf16.msra.mxu0 %v1593
        %2060 = vmatpush.bf16.msra.mxu0 %v1589
        %2061 = vmatpush.bf16.msra.mxu0 %v1585
        %2062 = vmatpush.bf16.msra.mxu0 %v1581
        %2063 = vmatpush.bf16.msra.mxu0 %v1577
        %2064 = vmatpush.bf16.msra.mxu0 %v1573
        %2065 = vmatpush.bf16.msra.mxu0 %v1569
        %2066 = vmatpush.bf16.msra.mxu0 %v1565
        %2067 = vmatmul.bf16.gmra.mxu0 %v750
        %v2068 = vpop.f32.mrf.mxu0
        %v2069 = vadd.f32 %v2055, %v2068
        %v2070 = vpop.f32.mrf.mxu0
        %v2071 = vadd.f32 %v2057, %v2070
        %2072 = vdwg.mxu0
        %2073 = vmatpush.bf16.msra.mxu0 %v1625
        %2074 = vmatpush.bf16.msra.mxu0 %v1621
        %2075 = vmatpush.bf16.msra.mxu0 %v1617
        %2076 = vmatpush.bf16.msra.mxu0 %v1613
        %2077 = vmatpush.bf16.msra.mxu0 %v1609
        %2078 = vmatpush.bf16.msra.mxu0 %v1605
        %2079 = vmatpush.bf16.msra.mxu0 %v1601
        %2080 = vmatpush.bf16.msra.mxu0 %v1597
        %2081 = vmatmul.bf16.gmra.mxu0 %v751
        %v2082 = vpop.f32.mrf.mxu0
        %v2083 = vadd.f32 %v2069, %v2082
        %v2084 = vpop.f32.mrf.mxu0
        %v2085 = vadd.f32 %v2071, %v2084
        %2086 = vdwg.mxu0
        %2087 = vmatpush.bf16.msra.mxu0 %v1657
        %2088 = vmatpush.bf16.msra.mxu0 %v1653
        %2089 = vmatpush.bf16.msra.mxu0 %v1649
        %2090 = vmatpush.bf16.msra.mxu0 %v1645
        %2091 = vmatpush.bf16.msra.mxu0 %v1641
        %2092 = vmatpush.bf16.msra.mxu0 %v1637
        %2093 = vmatpush.bf16.msra.mxu0 %v1633
        %2094 = vmatpush.bf16.msra.mxu0 %v1629
        %2095 = vmatmul.bf16.gmra.mxu0 %v752
        %v2096 = vpop.f32.mrf.mxu0
        %v2097 = vadd.f32 %v2083, %v2096
        %v2098 = vpop.f32.mrf.mxu0
        %v2099 = vadd.f32 %v2085, %v2098
        %2100 = vdwg.mxu0
        %2101 = vmatpush.bf16.msra.mxu0 %v1689
        %2102 = vmatpush.bf16.msra.mxu0 %v1685
        %2103 = vmatpush.bf16.msra.mxu0 %v1681
        %2104 = vmatpush.bf16.msra.mxu0 %v1677
        %2105 = vmatpush.bf16.msra.mxu0 %v1673
        %2106 = vmatpush.bf16.msra.mxu0 %v1669
        %2107 = vmatpush.bf16.msra.mxu0 %v1665
        %2108 = vmatpush.bf16.msra.mxu0 %v1661
        %2109 = vmatmul.bf16.gmra.mxu0 %v753
        %v2110 = vpop.f32.mrf.mxu0
        %v2111 = vadd.f32 %v2097, %v2110
        %v2112 = vpop.f32.mrf.mxu0
        %v2113 = vadd.f32 %v2099, %v2112
        %2114 = vdwg.mxu0
        %2115 = vmatpush.bf16.msra.mxu0 %v1721
        %2116 = vmatpush.bf16.msra.mxu0 %v1717
        %2117 = vmatpush.bf16.msra.mxu0 %v1713
        %2118 = vmatpush.bf16.msra.mxu0 %v1709
        %2119 = vmatpush.bf16.msra.mxu0 %v1705
        %2120 = vmatpush.bf16.msra.mxu0 %v1701
        %2121 = vmatpush.bf16.msra.mxu0 %v1697
        %2122 = vmatpush.bf16.msra.mxu0 %v1693
        %2123 = vmatmul.bf16.gmra.mxu0 %v754
        %v2124 = vpop.f32.mrf.mxu0
        %v2125 = vadd.f32 %v2111, %v2124
        %v2126 = vpop.f32.mrf.mxu0
        %v2127 = vadd.f32 %v2113, %v2126
        %2128 = vdwg.mxu0
        %2129 = vmatpush.bf16.msra.mxu0 %v1753
        %2130 = vmatpush.bf16.msra.mxu0 %v1749
        %2131 = vmatpush.bf16.msra.mxu0 %v1745
        %2132 = vmatpush.bf16.msra.mxu0 %v1741
        %2133 = vmatpush.bf16.msra.mxu0 %v1737
        %2134 = vmatpush.bf16.msra.mxu0 %v1733
        %2135 = vmatpush.bf16.msra.mxu0 %v1729
        %2136 = vmatpush.bf16.msra.mxu0 %v1725
        %2137 = vmatmul.bf16.gmra.mxu0 %v755
        %v2138 = vpop.f32.mrf.mxu0
        %v2139 = vadd.f32 %v2125, %v2138
        %v2140 = vpop.f32.mrf.mxu0
        %v2141 = vadd.f32 %v2127, %v2140
        %2142 = vdwg.mxu0
        %2143 = vmatpush.bf16.msra.mxu0 %v1785
        %2144 = vmatpush.bf16.msra.mxu0 %v1781
        %2145 = vmatpush.bf16.msra.mxu0 %v1777
        %2146 = vmatpush.bf16.msra.mxu0 %v1773
        %2147 = vmatpush.bf16.msra.mxu0 %v1769
        %2148 = vmatpush.bf16.msra.mxu0 %v1765
        %2149 = vmatpush.bf16.msra.mxu0 %v1761
        %2150 = vmatpush.bf16.msra.mxu0 %v1757
        %2151 = vmatmul.bf16.gmra.mxu0 %v756
        %v2152 = vpop.f32.mrf.mxu0
        %v2153 = vadd.f32 %v2139, %v2152
        %v2154 = vpop.f32.mrf.mxu0
        %v2155 = vadd.f32 %v2141, %v2154
        %2156 = vdwg.mxu0
        %2157 = vmatpush.bf16.msra.mxu0 %v1562
        %2158 = vmatpush.bf16.msra.mxu0 %v1558
        %2159 = vmatpush.bf16.msra.mxu0 %v1554
        %2160 = vmatpush.bf16.msra.mxu0 %v1550
        %2161 = vmatpush.bf16.msra.mxu0 %v1546
        %2162 = vmatpush.bf16.msra.mxu0 %v1542
        %2163 = vmatpush.bf16.msra.mxu0 %v1538
        %2164 = vmatpush.bf16.msra.mxu0 %v1534
        %2165 = vmatmul.bf16.gmra.mxu0 %v749
        %v2166 = vpop.f32.mrf.mxu0
        %v2167 = vadd.f32 %v718, %v2166
        %v2168 = vpop.f32.mrf.mxu0
        %v2169 = vadd.f32 %v718, %v2168
        %2170 = vdwg.mxu0
        %2171 = vmatpush.bf16.msra.mxu0 %v1594
        %2172 = vmatpush.bf16.msra.mxu0 %v1590
        %2173 = vmatpush.bf16.msra.mxu0 %v1586
        %2174 = vmatpush.bf16.msra.mxu0 %v1582
        %2175 = vmatpush.bf16.msra.mxu0 %v1578
        %2176 = vmatpush.bf16.msra.mxu0 %v1574
        %2177 = vmatpush.bf16.msra.mxu0 %v1570
        %2178 = vmatpush.bf16.msra.mxu0 %v1566
        %2179 = vmatmul.bf16.gmra.mxu0 %v750
        %v2180 = vpop.f32.mrf.mxu0
        %v2181 = vadd.f32 %v2167, %v2180
        %v2182 = vpop.f32.mrf.mxu0
        %v2183 = vadd.f32 %v2169, %v2182
        %2184 = vdwg.mxu0
        %2185 = vmatpush.bf16.msra.mxu0 %v1626
        %2186 = vmatpush.bf16.msra.mxu0 %v1622
        %2187 = vmatpush.bf16.msra.mxu0 %v1618
        %2188 = vmatpush.bf16.msra.mxu0 %v1614
        %2189 = vmatpush.bf16.msra.mxu0 %v1610
        %2190 = vmatpush.bf16.msra.mxu0 %v1606
        %2191 = vmatpush.bf16.msra.mxu0 %v1602
        %2192 = vmatpush.bf16.msra.mxu0 %v1598
        %2193 = vmatmul.bf16.gmra.mxu0 %v751
        %v2194 = vpop.f32.mrf.mxu0
        %v2195 = vadd.f32 %v2181, %v2194
        %v2196 = vpop.f32.mrf.mxu0
        %v2197 = vadd.f32 %v2183, %v2196
        %2198 = vdwg.mxu0
        %2199 = vmatpush.bf16.msra.mxu0 %v1658
        %2200 = vmatpush.bf16.msra.mxu0 %v1654
        %2201 = vmatpush.bf16.msra.mxu0 %v1650
        %2202 = vmatpush.bf16.msra.mxu0 %v1646
        %2203 = vmatpush.bf16.msra.mxu0 %v1642
        %2204 = vmatpush.bf16.msra.mxu0 %v1638
        %2205 = vmatpush.bf16.msra.mxu0 %v1634
        %2206 = vmatpush.bf16.msra.mxu0 %v1630
        %2207 = vmatmul.bf16.gmra.mxu0 %v752
        %v2208 = vpop.f32.mrf.mxu0
        %v2209 = vadd.f32 %v2195, %v2208
        %v2210 = vpop.f32.mrf.mxu0
        %v2211 = vadd.f32 %v2197, %v2210
        %2212 = vdwg.mxu0
        %2213 = vmatpush.bf16.msra.mxu0 %v1690
        %2214 = vmatpush.bf16.msra.mxu0 %v1686
        %2215 = vmatpush.bf16.msra.mxu0 %v1682
        %2216 = vmatpush.bf16.msra.mxu0 %v1678
        %2217 = vmatpush.bf16.msra.mxu0 %v1674
        %2218 = vmatpush.bf16.msra.mxu0 %v1670
        %2219 = vmatpush.bf16.msra.mxu0 %v1666
        %2220 = vmatpush.bf16.msra.mxu0 %v1662
        %2221 = vmatmul.bf16.gmra.mxu0 %v753
        %v2222 = vpop.f32.mrf.mxu0
        %v2223 = vadd.f32 %v2209, %v2222
        %v2224 = vpop.f32.mrf.mxu0
        %v2225 = vadd.f32 %v2211, %v2224
        %2226 = vdwg.mxu0
        %2227 = vmatpush.bf16.msra.mxu0 %v1722
        %2228 = vmatpush.bf16.msra.mxu0 %v1718
        %2229 = vmatpush.bf16.msra.mxu0 %v1714
        %2230 = vmatpush.bf16.msra.mxu0 %v1710
        %2231 = vmatpush.bf16.msra.mxu0 %v1706
        %2232 = vmatpush.bf16.msra.mxu0 %v1702
        %2233 = vmatpush.bf16.msra.mxu0 %v1698
        %2234 = vmatpush.bf16.msra.mxu0 %v1694
        %2235 = vmatmul.bf16.gmra.mxu0 %v754
        %v2236 = vpop.f32.mrf.mxu0
        %v2237 = vadd.f32 %v2223, %v2236
        %v2238 = vpop.f32.mrf.mxu0
        %v2239 = vadd.f32 %v2225, %v2238
        %2240 = vdwg.mxu0
        %2241 = vmatpush.bf16.msra.mxu0 %v1754
        %2242 = vmatpush.bf16.msra.mxu0 %v1750
        %2243 = vmatpush.bf16.msra.mxu0 %v1746
        %2244 = vmatpush.bf16.msra.mxu0 %v1742
        %2245 = vmatpush.bf16.msra.mxu0 %v1738
        %2246 = vmatpush.bf16.msra.mxu0 %v1734
        %2247 = vmatpush.bf16.msra.mxu0 %v1730
        %2248 = vmatpush.bf16.msra.mxu0 %v1726
        %2249 = vmatmul.bf16.gmra.mxu0 %v755
        %v2250 = vpop.f32.mrf.mxu0
        %v2251 = vadd.f32 %v2237, %v2250
        %v2252 = vpop.f32.mrf.mxu0
        %v2253 = vadd.f32 %v2239, %v2252
        %2254 = vdwg.mxu0
        %2255 = vmatpush.bf16.msra.mxu0 %v1786
        %2256 = vmatpush.bf16.msra.mxu0 %v1782
        %2257 = vmatpush.bf16.msra.mxu0 %v1778
        %2258 = vmatpush.bf16.msra.mxu0 %v1774
        %2259 = vmatpush.bf16.msra.mxu0 %v1770
        %2260 = vmatpush.bf16.msra.mxu0 %v1766
        %2261 = vmatpush.bf16.msra.mxu0 %v1762
        %2262 = vmatpush.bf16.msra.mxu0 %v1758
        %2263 = vmatmul.bf16.gmra.mxu0 %v756
        %v2264 = vpop.f32.mrf.mxu0
        %v2265 = vadd.f32 %v2251, %v2264
        %v2266 = vpop.f32.mrf.mxu0
        %v2267 = vadd.f32 %v2253, %v2266
        %2268 = vdwg.mxu0
        %2269 = vmatpush.bf16.msra.mxu0 %v1563
        %2270 = vmatpush.bf16.msra.mxu0 %v1559
        %2271 = vmatpush.bf16.msra.mxu0 %v1555
        %2272 = vmatpush.bf16.msra.mxu0 %v1551
        %2273 = vmatpush.bf16.msra.mxu0 %v1547
        %2274 = vmatpush.bf16.msra.mxu0 %v1543
        %2275 = vmatpush.bf16.msra.mxu0 %v1539
        %2276 = vmatpush.bf16.msra.mxu0 %v1535
        %2277 = vmatmul.bf16.gmra.mxu0 %v749
        %v2278 = vpop.f32.mrf.mxu0
        %v2279 = vadd.f32 %v719, %v2278
        %v2280 = vpop.f32.mrf.mxu0
        %v2281 = vadd.f32 %v719, %v2280
        %2282 = vdwg.mxu0
        %2283 = vmatpush.bf16.msra.mxu0 %v1595
        %2284 = vmatpush.bf16.msra.mxu0 %v1591
        %2285 = vmatpush.bf16.msra.mxu0 %v1587
        %2286 = vmatpush.bf16.msra.mxu0 %v1583
        %2287 = vmatpush.bf16.msra.mxu0 %v1579
        %2288 = vmatpush.bf16.msra.mxu0 %v1575
        %2289 = vmatpush.bf16.msra.mxu0 %v1571
        %2290 = vmatpush.bf16.msra.mxu0 %v1567
        %2291 = vmatmul.bf16.gmra.mxu0 %v750
        %v2292 = vpop.f32.mrf.mxu0
        %v2293 = vadd.f32 %v2279, %v2292
        %v2294 = vpop.f32.mrf.mxu0
        %v2295 = vadd.f32 %v2281, %v2294
        %2296 = vdwg.mxu0
        %2297 = vmatpush.bf16.msra.mxu0 %v1627
        %2298 = vmatpush.bf16.msra.mxu0 %v1623
        %2299 = vmatpush.bf16.msra.mxu0 %v1619
        %2300 = vmatpush.bf16.msra.mxu0 %v1615
        %2301 = vmatpush.bf16.msra.mxu0 %v1611
        %2302 = vmatpush.bf16.msra.mxu0 %v1607
        %2303 = vmatpush.bf16.msra.mxu0 %v1603
        %2304 = vmatpush.bf16.msra.mxu0 %v1599
        %2305 = vmatmul.bf16.gmra.mxu0 %v751
        %v2306 = vpop.f32.mrf.mxu0
        %v2307 = vadd.f32 %v2293, %v2306
        %v2308 = vpop.f32.mrf.mxu0
        %v2309 = vadd.f32 %v2295, %v2308
        %2310 = vdwg.mxu0
        %2311 = vmatpush.bf16.msra.mxu0 %v1659
        %2312 = vmatpush.bf16.msra.mxu0 %v1655
        %2313 = vmatpush.bf16.msra.mxu0 %v1651
        %2314 = vmatpush.bf16.msra.mxu0 %v1647
        %2315 = vmatpush.bf16.msra.mxu0 %v1643
        %2316 = vmatpush.bf16.msra.mxu0 %v1639
        %2317 = vmatpush.bf16.msra.mxu0 %v1635
        %2318 = vmatpush.bf16.msra.mxu0 %v1631
        %2319 = vmatmul.bf16.gmra.mxu0 %v752
        %v2320 = vpop.f32.mrf.mxu0
        %v2321 = vadd.f32 %v2307, %v2320
        %v2322 = vpop.f32.mrf.mxu0
        %v2323 = vadd.f32 %v2309, %v2322
        %2324 = vdwg.mxu0
        %2325 = vmatpush.bf16.msra.mxu0 %v1691
        %2326 = vmatpush.bf16.msra.mxu0 %v1687
        %2327 = vmatpush.bf16.msra.mxu0 %v1683
        %2328 = vmatpush.bf16.msra.mxu0 %v1679
        %2329 = vmatpush.bf16.msra.mxu0 %v1675
        %2330 = vmatpush.bf16.msra.mxu0 %v1671
        %2331 = vmatpush.bf16.msra.mxu0 %v1667
        %2332 = vmatpush.bf16.msra.mxu0 %v1663
        %2333 = vmatmul.bf16.gmra.mxu0 %v753
        %v2334 = vpop.f32.mrf.mxu0
        %v2335 = vadd.f32 %v2321, %v2334
        %v2336 = vpop.f32.mrf.mxu0
        %v2337 = vadd.f32 %v2323, %v2336
        %2338 = vdwg.mxu0
        %2339 = vmatpush.bf16.msra.mxu0 %v1723
        %2340 = vmatpush.bf16.msra.mxu0 %v1719
        %2341 = vmatpush.bf16.msra.mxu0 %v1715
        %2342 = vmatpush.bf16.msra.mxu0 %v1711
        %2343 = vmatpush.bf16.msra.mxu0 %v1707
        %2344 = vmatpush.bf16.msra.mxu0 %v1703
        %2345 = vmatpush.bf16.msra.mxu0 %v1699
        %2346 = vmatpush.bf16.msra.mxu0 %v1695
        %2347 = vmatmul.bf16.gmra.mxu0 %v754
        %v2348 = vpop.f32.mrf.mxu0
        %v2349 = vadd.f32 %v2335, %v2348
        %v2350 = vpop.f32.mrf.mxu0
        %v2351 = vadd.f32 %v2337, %v2350
        %2352 = vdwg.mxu0
        %2353 = vmatpush.bf16.msra.mxu0 %v1755
        %2354 = vmatpush.bf16.msra.mxu0 %v1751
        %2355 = vmatpush.bf16.msra.mxu0 %v1747
        %2356 = vmatpush.bf16.msra.mxu0 %v1743
        %2357 = vmatpush.bf16.msra.mxu0 %v1739
        %2358 = vmatpush.bf16.msra.mxu0 %v1735
        %2359 = vmatpush.bf16.msra.mxu0 %v1731
        %2360 = vmatpush.bf16.msra.mxu0 %v1727
        %2361 = vmatmul.bf16.gmra.mxu0 %v755
        %v2362 = vpop.f32.mrf.mxu0
        %v2363 = vadd.f32 %v2349, %v2362
        %v2364 = vpop.f32.mrf.mxu0
        %v2365 = vadd.f32 %v2351, %v2364
        %2366 = vdwg.mxu0
        %2367 = vmatpush.bf16.msra.mxu0 %v1787
        %2368 = vmatpush.bf16.msra.mxu0 %v1783
        %2369 = vmatpush.bf16.msra.mxu0 %v1779
        %2370 = vmatpush.bf16.msra.mxu0 %v1775
        %2371 = vmatpush.bf16.msra.mxu0 %v1771
        %2372 = vmatpush.bf16.msra.mxu0 %v1767
        %2373 = vmatpush.bf16.msra.mxu0 %v1763
        %2374 = vmatpush.bf16.msra.mxu0 %v1759
        %2375 = vmatmul.bf16.gmra.mxu0 %v756
        %v2376 = vpop.f32.mrf.mxu0
        %v2377 = vadd.f32 %v2363, %v2376
        %v2378 = vpop.f32.mrf.mxu0
        %v2379 = vadd.f32 %v2365, %v2378
        %2380 = vdwg.mxu0
        %2381 = vmatpush.bf16.msra.mxu0 %v1564
        %2382 = vmatpush.bf16.msra.mxu0 %v1560
        %2383 = vmatpush.bf16.msra.mxu0 %v1556
        %2384 = vmatpush.bf16.msra.mxu0 %v1552
        %2385 = vmatpush.bf16.msra.mxu0 %v1548
        %2386 = vmatpush.bf16.msra.mxu0 %v1544
        %2387 = vmatpush.bf16.msra.mxu0 %v1540
        %2388 = vmatpush.bf16.msra.mxu0 %v1536
        %2389 = vmatmul.bf16.gmra.mxu0 %v749
        %v2390 = vpop.f32.mrf.mxu0
        %v2391 = vadd.f32 %v720, %v2390
        %v2392 = vpop.f32.mrf.mxu0
        %v2393 = vadd.f32 %v720, %v2392
        %2394 = vdwg.mxu0
        %2395 = vmatpush.bf16.msra.mxu0 %v1596
        %2396 = vmatpush.bf16.msra.mxu0 %v1592
        %2397 = vmatpush.bf16.msra.mxu0 %v1588
        %2398 = vmatpush.bf16.msra.mxu0 %v1584
        %2399 = vmatpush.bf16.msra.mxu0 %v1580
        %2400 = vmatpush.bf16.msra.mxu0 %v1576
        %2401 = vmatpush.bf16.msra.mxu0 %v1572
        %2402 = vmatpush.bf16.msra.mxu0 %v1568
        %2403 = vmatmul.bf16.gmra.mxu0 %v750
        %v2404 = vpop.f32.mrf.mxu0
        %v2405 = vadd.f32 %v2391, %v2404
        %v2406 = vpop.f32.mrf.mxu0
        %v2407 = vadd.f32 %v2393, %v2406
        %2408 = vdwg.mxu0
        %2409 = vmatpush.bf16.msra.mxu0 %v1628
        %2410 = vmatpush.bf16.msra.mxu0 %v1624
        %2411 = vmatpush.bf16.msra.mxu0 %v1620
        %2412 = vmatpush.bf16.msra.mxu0 %v1616
        %2413 = vmatpush.bf16.msra.mxu0 %v1612
        %2414 = vmatpush.bf16.msra.mxu0 %v1608
        %2415 = vmatpush.bf16.msra.mxu0 %v1604
        %2416 = vmatpush.bf16.msra.mxu0 %v1600
        %2417 = vmatmul.bf16.gmra.mxu0 %v751
        %v2418 = vpop.f32.mrf.mxu0
        %v2419 = vadd.f32 %v2405, %v2418
        %v2420 = vpop.f32.mrf.mxu0
        %v2421 = vadd.f32 %v2407, %v2420
        %2422 = vdwg.mxu0
        %2423 = vmatpush.bf16.msra.mxu0 %v1660
        %2424 = vmatpush.bf16.msra.mxu0 %v1656
        %2425 = vmatpush.bf16.msra.mxu0 %v1652
        %2426 = vmatpush.bf16.msra.mxu0 %v1648
        %2427 = vmatpush.bf16.msra.mxu0 %v1644
        %2428 = vmatpush.bf16.msra.mxu0 %v1640
        %2429 = vmatpush.bf16.msra.mxu0 %v1636
        %2430 = vmatpush.bf16.msra.mxu0 %v1632
        %2431 = vmatmul.bf16.gmra.mxu0 %v752
        %v2432 = vpop.f32.mrf.mxu0
        %v2433 = vadd.f32 %v2419, %v2432
        %v2434 = vpop.f32.mrf.mxu0
        %v2435 = vadd.f32 %v2421, %v2434
        %2436 = vdwg.mxu0
        %2437 = vmatpush.bf16.msra.mxu0 %v1692
        %2438 = vmatpush.bf16.msra.mxu0 %v1688
        %2439 = vmatpush.bf16.msra.mxu0 %v1684
        %2440 = vmatpush.bf16.msra.mxu0 %v1680
        %2441 = vmatpush.bf16.msra.mxu0 %v1676
        %2442 = vmatpush.bf16.msra.mxu0 %v1672
        %2443 = vmatpush.bf16.msra.mxu0 %v1668
        %2444 = vmatpush.bf16.msra.mxu0 %v1664
        %2445 = vmatmul.bf16.gmra.mxu0 %v753
        %v2446 = vpop.f32.mrf.mxu0
        %v2447 = vadd.f32 %v2433, %v2446
        %v2448 = vpop.f32.mrf.mxu0
        %v2449 = vadd.f32 %v2435, %v2448
        %2450 = vdwg.mxu0
        %2451 = vmatpush.bf16.msra.mxu0 %v1724
        %2452 = vmatpush.bf16.msra.mxu0 %v1720
        %2453 = vmatpush.bf16.msra.mxu0 %v1716
        %2454 = vmatpush.bf16.msra.mxu0 %v1712
        %2455 = vmatpush.bf16.msra.mxu0 %v1708
        %2456 = vmatpush.bf16.msra.mxu0 %v1704
        %2457 = vmatpush.bf16.msra.mxu0 %v1700
        %2458 = vmatpush.bf16.msra.mxu0 %v1696
        %2459 = vmatmul.bf16.gmra.mxu0 %v754
        %v2460 = vpop.f32.mrf.mxu0
        %v2461 = vadd.f32 %v2447, %v2460
        %v2462 = vpop.f32.mrf.mxu0
        %v2463 = vadd.f32 %v2449, %v2462
        %2464 = vdwg.mxu0
        %2465 = vmatpush.bf16.msra.mxu0 %v1756
        %2466 = vmatpush.bf16.msra.mxu0 %v1752
        %2467 = vmatpush.bf16.msra.mxu0 %v1748
        %2468 = vmatpush.bf16.msra.mxu0 %v1744
        %2469 = vmatpush.bf16.msra.mxu0 %v1740
        %2470 = vmatpush.bf16.msra.mxu0 %v1736
        %2471 = vmatpush.bf16.msra.mxu0 %v1732
        %2472 = vmatpush.bf16.msra.mxu0 %v1728
        %2473 = vmatmul.bf16.gmra.mxu0 %v755
        %v2474 = vpop.f32.mrf.mxu0
        %v2475 = vadd.f32 %v2461, %v2474
        %v2476 = vpop.f32.mrf.mxu0
        %v2477 = vadd.f32 %v2463, %v2476
        %2478 = vdwg.mxu0
        %2479 = vmatpush.bf16.msra.mxu0 %v1788
        %2480 = vmatpush.bf16.msra.mxu0 %v1784
        %2481 = vmatpush.bf16.msra.mxu0 %v1780
        %2482 = vmatpush.bf16.msra.mxu0 %v1776
        %2483 = vmatpush.bf16.msra.mxu0 %v1772
        %2484 = vmatpush.bf16.msra.mxu0 %v1768
        %2485 = vmatpush.bf16.msra.mxu0 %v1764
        %2486 = vmatpush.bf16.msra.mxu0 %v1760
        %2487 = vmatmul.bf16.gmra.mxu0 %v756
        %v2488 = vpop.f32.mrf.mxu0
        %v2489 = vadd.f32 %v2475, %v2488
        %v2490 = vpop.f32.mrf.mxu0
        %v2491 = vadd.f32 %v2477, %v2490
        %2492 = vdwg.mxu0
        %v2493 = vmax.f32 %v2153, 0.0
        %v2494 = vmax.f32 %v2265, 0.0
        %v2495 = vmax.f32 %v2377, 0.0
        %v2496 = vmax.f32 %v2489, 0.0
        %v2497 = vmax.f32 %v2155, 0.0
        %v2498 = vmax.f32 %v2267, 0.0
        %v2499 = vmax.f32 %v2379, 0.0
        %v2500 = vmax.f32 %v2491, 0.0
        %v2501 = vpack.c.bf16 %v2497, %v2493
        %v2502 = vpack.c.bf16 %v2498, %v2494
        %v2503 = vpack.c.bf16 %v2499, %v2495
        %v2504 = vpack.c.bf16 %v2500, %v2496
        %v2505 = vld [vmem:[#allocation8] sm:$0xff]
        %v2506 = vld [vmem:[#allocation8 + $0x8] sm:$0xff]
        %v2507 = vld [vmem:[#allocation8 + $0x10] sm:$0xff]
        %v2508 = vld [vmem:[#allocation8 + $0x18] sm:$0xff]
        %v2509 = vld [vmem:[#allocation8 + $0x20] sm:$0xff]
        %v2510 = vld [vmem:[#allocation8 + $0x28] sm:$0xff]
        %v2511 = vld [vmem:[#allocation8 + $0x30] sm:$0xff]
        %v2512 = vld [vmem:[#allocation8 + $0x38] sm:$0xff]
        %v2513 = vld [vmem:[#allocation8 + $0x40] sm:$0xff]
        %v2514 = vld [vmem:[#allocation8 + $0x48] sm:$0xff]
        %v2515 = vld [vmem:[#allocation8 + $0x50] sm:$0xff]
        %v2516 = vld [vmem:[#allocation8 + $0x58] sm:$0xff]
        %v2517 = vld [vmem:[#allocation8 + $0x60] sm:$0xff]
        %v2518 = vld [vmem:[#allocation8 + $0x68] sm:$0xff]
        %v2519 = vld [vmem:[#allocation8 + $0x70] sm:$0xff]
        %v2520 = vld [vmem:[#allocation8 + $0x78] sm:$0xff]
        %v2521 = vld [vmem:[#allocation8 + $0x80] sm:$0xff]
        %v2522 = vld [vmem:[#allocation8 + $0x88] sm:$0xff]
        %v2523 = vld [vmem:[#allocation8 + $0x90] sm:$0xff]
        %v2524 = vld [vmem:[#allocation8 + $0x98] sm:$0xff]
        %v2525 = vld [vmem:[#allocation8 + $0xa0] sm:$0xff]
        %v2526 = vld [vmem:[#allocation8 + $0xa8] sm:$0xff]
        %v2527 = vld [vmem:[#allocation8 + $0xb0] sm:$0xff]
        %v2528 = vld [vmem:[#allocation8 + $0xb8] sm:$0xff]
        %v2529 = vld [vmem:[#allocation8 + $0xc0] sm:$0xff]
        %v2530 = vld [vmem:[#allocation8 + $0xc8] sm:$0xff]
        %v2531 = vld [vmem:[#allocation8 + $0xd0] sm:$0xff]
        %v2532 = vld [vmem:[#allocation8 + $0xd8] sm:$0xff]
        %v2533 = vld [vmem:[#allocation8 + $0xe0] sm:$0xff]
        %v2534 = vld [vmem:[#allocation8 + $0xe8] sm:$0xff]
        %v2535 = vld [vmem:[#allocation8 + $0xf0] sm:$0xff]
        %v2536 = vld [vmem:[#allocation8 + $0xf8] sm:$0xff]
        %v2537 = vld [vmem:[#allocation8 + $0x100] sm:$0xff]
        %v2538 = vld [vmem:[#allocation8 + $0x108] sm:$0xff]
        %v2539 = vld [vmem:[#allocation8 + $0x110] sm:$0xff]
        %v2540 = vld [vmem:[#allocation8 + $0x118] sm:$0xff]
        %v2541 = vld [vmem:[#allocation8 + $0x120] sm:$0xff]
        %v2542 = vld [vmem:[#allocation8 + $0x128] sm:$0xff]
        %v2543 = vld [vmem:[#allocation8 + $0x130] sm:$0xff]
        %v2544 = vld [vmem:[#allocation8 + $0x138] sm:$0xff]
        %v2545 = vld [vmem:[#allocation8 + $0x140] sm:$0xff]
        %v2546 = vld [vmem:[#allocation8 + $0x148] sm:$0xff]
        %v2547 = vld [vmem:[#allocation8 + $0x150] sm:$0xff]
        %v2548 = vld [vmem:[#allocation8 + $0x158] sm:$0xff]
        %v2549 = vld [vmem:[#allocation8 + $0x160] sm:$0xff]
        %v2550 = vld [vmem:[#allocation8 + $0x168] sm:$0xff]
        %v2551 = vld [vmem:[#allocation8 + $0x170] sm:$0xff]
        %v2552 = vld [vmem:[#allocation8 + $0x178] sm:$0xff]
        %v2553 = vld [vmem:[#allocation8 + $0x180] sm:$0xff]
        %v2554 = vld [vmem:[#allocation8 + $0x188] sm:$0xff]
        %v2555 = vld [vmem:[#allocation8 + $0x190] sm:$0xff]
        %v2556 = vld [vmem:[#allocation8 + $0x198] sm:$0xff]
        %v2557 = vld [vmem:[#allocation8 + $0x1a0] sm:$0xff]
        %v2558 = vld [vmem:[#allocation8 + $0x1a8] sm:$0xff]
        %v2559 = vld [vmem:[#allocation8 + $0x1b0] sm:$0xff]
        %v2560 = vld [vmem:[#allocation8 + $0x1b8] sm:$0xff]
        %v2561 = vld [vmem:[#allocation8 + $0x1c0] sm:$0xff]
        %v2562 = vld [vmem:[#allocation8 + $0x1c8] sm:$0xff]
        %v2563 = vld [vmem:[#allocation8 + $0x1d0] sm:$0xff]
        %v2564 = vld [vmem:[#allocation8 + $0x1d8] sm:$0xff]
        %v2565 = vld [vmem:[#allocation8 + $0x1e0] sm:$0xff]
        %v2566 = vld [vmem:[#allocation8 + $0x1e8] sm:$0xff]
        %v2567 = vld [vmem:[#allocation8 + $0x1f0] sm:$0xff]
        %v2568 = vld [vmem:[#allocation8 + $0x1f8] sm:$0xff]
        %v2569 = vld [vmem:[#allocation8 + $0x200] sm:$0xff]
        %v2570 = vld [vmem:[#allocation8 + $0x208] sm:$0xff]
        %v2571 = vld [vmem:[#allocation8 + $0x210] sm:$0xff]
        %v2572 = vld [vmem:[#allocation8 + $0x218] sm:$0xff]
        %v2573 = vld [vmem:[#allocation8 + $0x220] sm:$0xff]
        %v2574 = vld [vmem:[#allocation8 + $0x228] sm:$0xff]
        %v2575 = vld [vmem:[#allocation8 + $0x230] sm:$0xff]
        %v2576 = vld [vmem:[#allocation8 + $0x238] sm:$0xff]
        %v2577 = vld [vmem:[#allocation8 + $0x240] sm:$0xff]
        %v2578 = vld [vmem:[#allocation8 + $0x248] sm:$0xff]
        %v2579 = vld [vmem:[#allocation8 + $0x250] sm:$0xff]
        %v2580 = vld [vmem:[#allocation8 + $0x258] sm:$0xff]
        %v2581 = vld [vmem:[#allocation8 + $0x260] sm:$0xff]
        %v2582 = vld [vmem:[#allocation8 + $0x268] sm:$0xff]
        %v2583 = vld [vmem:[#allocation8 + $0x270] sm:$0xff]
        %v2584 = vld [vmem:[#allocation8 + $0x278] sm:$0xff]
        %v2585 = vld [vmem:[#allocation8 + $0x280] sm:$0xff]
        %v2586 = vld [vmem:[#allocation8 + $0x288] sm:$0xff]
        %v2587 = vld [vmem:[#allocation8 + $0x290] sm:$0xff]
        %v2588 = vld [vmem:[#allocation8 + $0x298] sm:$0xff]
        %v2589 = vld [vmem:[#allocation8 + $0x2a0] sm:$0xff]
        %v2590 = vld [vmem:[#allocation8 + $0x2a8] sm:$0xff]
        %v2591 = vld [vmem:[#allocation8 + $0x2b0] sm:$0xff]
        %v2592 = vld [vmem:[#allocation8 + $0x2b8] sm:$0xff]
        %v2593 = vld [vmem:[#allocation8 + $0x2c0] sm:$0xff]
        %v2594 = vld [vmem:[#allocation8 + $0x2c8] sm:$0xff]
        %v2595 = vld [vmem:[#allocation8 + $0x2d0] sm:$0xff]
        %v2596 = vld [vmem:[#allocation8 + $0x2d8] sm:$0xff]
        %v2597 = vld [vmem:[#allocation8 + $0x2e0] sm:$0xff]
        %v2598 = vld [vmem:[#allocation8 + $0x2e8] sm:$0xff]
        %v2599 = vld [vmem:[#allocation8 + $0x2f0] sm:$0xff]
        %v2600 = vld [vmem:[#allocation8 + $0x2f8] sm:$0xff]
        %v2601 = vld [vmem:[#allocation8 + $0x300] sm:$0xff]
        %v2602 = vld [vmem:[#allocation8 + $0x308] sm:$0xff]
        %v2603 = vld [vmem:[#allocation8 + $0x310] sm:$0xff]
        %v2604 = vld [vmem:[#allocation8 + $0x318] sm:$0xff]
        %v2605 = vld [vmem:[#allocation8 + $0x320] sm:$0xff]
        %v2606 = vld [vmem:[#allocation8 + $0x328] sm:$0xff]
        %v2607 = vld [vmem:[#allocation8 + $0x330] sm:$0xff]
        %v2608 = vld [vmem:[#allocation8 + $0x338] sm:$0xff]
        %v2609 = vld [vmem:[#allocation8 + $0x340] sm:$0xff]
        %v2610 = vld [vmem:[#allocation8 + $0x348] sm:$0xff]
        %v2611 = vld [vmem:[#allocation8 + $0x350] sm:$0xff]
        %v2612 = vld [vmem:[#allocation8 + $0x358] sm:$0xff]
        %v2613 = vld [vmem:[#allocation8 + $0x360] sm:$0xff]
        %v2614 = vld [vmem:[#allocation8 + $0x368] sm:$0xff]
        %v2615 = vld [vmem:[#allocation8 + $0x370] sm:$0xff]
        %v2616 = vld [vmem:[#allocation8 + $0x378] sm:$0xff]
        %v2617 = vld [vmem:[#allocation8 + $0x380] sm:$0xff]
        %v2618 = vld [vmem:[#allocation8 + $0x388] sm:$0xff]
        %v2619 = vld [vmem:[#allocation8 + $0x390] sm:$0xff]
        %v2620 = vld [vmem:[#allocation8 + $0x398] sm:$0xff]
        %v2621 = vld [vmem:[#allocation8 + $0x3a0] sm:$0xff]
        %v2622 = vld [vmem:[#allocation8 + $0x3a8] sm:$0xff]
        %v2623 = vld [vmem:[#allocation8 + $0x3b0] sm:$0xff]
        %v2624 = vld [vmem:[#allocation8 + $0x3b8] sm:$0xff]
        %v2625 = vld [vmem:[#allocation8 + $0x3c0] sm:$0xff]
        %v2626 = vld [vmem:[#allocation8 + $0x3c8] sm:$0xff]
        %v2627 = vld [vmem:[#allocation8 + $0x3d0] sm:$0xff]
        %v2628 = vld [vmem:[#allocation8 + $0x3d8] sm:$0xff]
        %v2629 = vld [vmem:[#allocation8 + $0x3e0] sm:$0xff]
        %v2630 = vld [vmem:[#allocation8 + $0x3e8] sm:$0xff]
        %v2631 = vld [vmem:[#allocation8 + $0x3f0] sm:$0xff]
        %v2632 = vld [vmem:[#allocation8 + $0x3f8] sm:$0xff]
        %v2633 = vld [vmem:[#allocation8 + $0x400] sm:$0xff]
        %v2634 = vld [vmem:[#allocation8 + $0x408] sm:$0xff]
        %v2635 = vld [vmem:[#allocation8 + $0x410] sm:$0xff]
        %v2636 = vld [vmem:[#allocation8 + $0x418] sm:$0xff]
        %v2637 = vld [vmem:[#allocation8 + $0x420] sm:$0xff]
        %v2638 = vld [vmem:[#allocation8 + $0x428] sm:$0xff]
        %v2639 = vld [vmem:[#allocation8 + $0x430] sm:$0xff]
        %v2640 = vld [vmem:[#allocation8 + $0x438] sm:$0xff]
        %v2641 = vld [vmem:[#allocation8 + $0x440] sm:$0xff]
        %v2642 = vld [vmem:[#allocation8 + $0x448] sm:$0xff]
        %v2643 = vld [vmem:[#allocation8 + $0x450] sm:$0xff]
        %v2644 = vld [vmem:[#allocation8 + $0x458] sm:$0xff]
        %v2645 = vld [vmem:[#allocation8 + $0x460] sm:$0xff]
        %v2646 = vld [vmem:[#allocation8 + $0x468] sm:$0xff]
        %v2647 = vld [vmem:[#allocation8 + $0x470] sm:$0xff]
        %v2648 = vld [vmem:[#allocation8 + $0x478] sm:$0xff]
        %v2649 = vld [vmem:[#allocation8 + $0x480] sm:$0xff]
        %v2650 = vld [vmem:[#allocation8 + $0x488] sm:$0xff]
        %v2651 = vld [vmem:[#allocation8 + $0x490] sm:$0xff]
        %v2652 = vld [vmem:[#allocation8 + $0x498] sm:$0xff]
        %v2653 = vld [vmem:[#allocation8 + $0x4a0] sm:$0xff]
        %v2654 = vld [vmem:[#allocation8 + $0x4a8] sm:$0xff]
        %v2655 = vld [vmem:[#allocation8 + $0x4b0] sm:$0xff]
        %v2656 = vld [vmem:[#allocation8 + $0x4b8] sm:$0xff]
        %v2657 = vld [vmem:[#allocation8 + $0x4c0] sm:$0xff]
        %v2658 = vld [vmem:[#allocation8 + $0x4c8] sm:$0xff]
        %v2659 = vld [vmem:[#allocation8 + $0x4d0] sm:$0xff]
        %v2660 = vld [vmem:[#allocation8 + $0x4d8] sm:$0xff]
        %v2661 = vld [vmem:[#allocation8 + $0x4e0] sm:$0xff]
        %v2662 = vld [vmem:[#allocation8 + $0x4e8] sm:$0xff]
        %v2663 = vld [vmem:[#allocation8 + $0x4f0] sm:$0xff]
        %v2664 = vld [vmem:[#allocation8 + $0x4f8] sm:$0xff]
        %v2665 = vld [vmem:[#allocation8 + $0x500] sm:$0xff]
        %v2666 = vld [vmem:[#allocation8 + $0x508] sm:$0xff]
        %v2667 = vld [vmem:[#allocation8 + $0x510] sm:$0xff]
        %v2668 = vld [vmem:[#allocation8 + $0x518] sm:$0xff]
        %v2669 = vld [vmem:[#allocation8 + $0x520] sm:$0xff]
        %v2670 = vld [vmem:[#allocation8 + $0x528] sm:$0xff]
        %v2671 = vld [vmem:[#allocation8 + $0x530] sm:$0xff]
        %v2672 = vld [vmem:[#allocation8 + $0x538] sm:$0xff]
        %v2673 = vld [vmem:[#allocation8 + $0x540] sm:$0xff]
        %v2674 = vld [vmem:[#allocation8 + $0x548] sm:$0xff]
        %v2675 = vld [vmem:[#allocation8 + $0x550] sm:$0xff]
        %v2676 = vld [vmem:[#allocation8 + $0x558] sm:$0xff]
        %v2677 = vld [vmem:[#allocation8 + $0x560] sm:$0xff]
        %v2678 = vld [vmem:[#allocation8 + $0x568] sm:$0xff]
        %v2679 = vld [vmem:[#allocation8 + $0x570] sm:$0xff]
        %v2680 = vld [vmem:[#allocation8 + $0x578] sm:$0xff]
        %v2681 = vld [vmem:[#allocation8 + $0x580] sm:$0xff]
        %v2682 = vld [vmem:[#allocation8 + $0x588] sm:$0xff]
        %v2683 = vld [vmem:[#allocation8 + $0x590] sm:$0xff]
        %v2684 = vld [vmem:[#allocation8 + $0x598] sm:$0xff]
        %v2685 = vld [vmem:[#allocation8 + $0x5a0] sm:$0xff]
        %v2686 = vld [vmem:[#allocation8 + $0x5a8] sm:$0xff]
        %v2687 = vld [vmem:[#allocation8 + $0x5b0] sm:$0xff]
        %v2688 = vld [vmem:[#allocation8 + $0x5b8] sm:$0xff]
        %v2689 = vld [vmem:[#allocation8 + $0x5c0] sm:$0xff]
        %v2690 = vld [vmem:[#allocation8 + $0x5c8] sm:$0xff]
        %v2691 = vld [vmem:[#allocation8 + $0x5d0] sm:$0xff]
        %v2692 = vld [vmem:[#allocation8 + $0x5d8] sm:$0xff]
        %v2693 = vld [vmem:[#allocation8 + $0x5e0] sm:$0xff]
        %v2694 = vld [vmem:[#allocation8 + $0x5e8] sm:$0xff]
        %v2695 = vld [vmem:[#allocation8 + $0x5f0] sm:$0xff]
        %v2696 = vld [vmem:[#allocation8 + $0x5f8] sm:$0xff]
        %v2697 = vld [vmem:[#allocation8 + $0x600] sm:$0xff]
        %v2698 = vld [vmem:[#allocation8 + $0x608] sm:$0xff]
        %v2699 = vld [vmem:[#allocation8 + $0x610] sm:$0xff]
        %v2700 = vld [vmem:[#allocation8 + $0x618] sm:$0xff]
        %v2701 = vld [vmem:[#allocation8 + $0x620] sm:$0xff]
        %v2702 = vld [vmem:[#allocation8 + $0x628] sm:$0xff]
        %v2703 = vld [vmem:[#allocation8 + $0x630] sm:$0xff]
        %v2704 = vld [vmem:[#allocation8 + $0x638] sm:$0xff]
        %v2705 = vld [vmem:[#allocation8 + $0x640] sm:$0xff]
        %v2706 = vld [vmem:[#allocation8 + $0x648] sm:$0xff]
        %v2707 = vld [vmem:[#allocation8 + $0x650] sm:$0xff]
        %v2708 = vld [vmem:[#allocation8 + $0x658] sm:$0xff]
        %v2709 = vld [vmem:[#allocation8 + $0x660] sm:$0xff]
        %v2710 = vld [vmem:[#allocation8 + $0x668] sm:$0xff]
        %v2711 = vld [vmem:[#allocation8 + $0x670] sm:$0xff]
        %v2712 = vld [vmem:[#allocation8 + $0x678] sm:$0xff]
        %v2713 = vld [vmem:[#allocation8 + $0x680] sm:$0xff]
        %v2714 = vld [vmem:[#allocation8 + $0x688] sm:$0xff]
        %v2715 = vld [vmem:[#allocation8 + $0x690] sm:$0xff]
        %v2716 = vld [vmem:[#allocation8 + $0x698] sm:$0xff]
        %v2717 = vld [vmem:[#allocation8 + $0x6a0] sm:$0xff]
        %v2718 = vld [vmem:[#allocation8 + $0x6a8] sm:$0xff]
        %v2719 = vld [vmem:[#allocation8 + $0x6b0] sm:$0xff]
        %v2720 = vld [vmem:[#allocation8 + $0x6b8] sm:$0xff]
        %v2721 = vld [vmem:[#allocation8 + $0x6c0] sm:$0xff]
        %v2722 = vld [vmem:[#allocation8 + $0x6c8] sm:$0xff]
        %v2723 = vld [vmem:[#allocation8 + $0x6d0] sm:$0xff]
        %v2724 = vld [vmem:[#allocation8 + $0x6d8] sm:$0xff]
        %v2725 = vld [vmem:[#allocation8 + $0x6e0] sm:$0xff]
        %v2726 = vld [vmem:[#allocation8 + $0x6e8] sm:$0xff]
        %v2727 = vld [vmem:[#allocation8 + $0x6f0] sm:$0xff]
        %v2728 = vld [vmem:[#allocation8 + $0x6f8] sm:$0xff]
        %v2729 = vld [vmem:[#allocation8 + $0x700] sm:$0xff]
        %v2730 = vld [vmem:[#allocation8 + $0x708] sm:$0xff]
        %v2731 = vld [vmem:[#allocation8 + $0x710] sm:$0xff]
        %v2732 = vld [vmem:[#allocation8 + $0x718] sm:$0xff]
        %v2733 = vld [vmem:[#allocation8 + $0x720] sm:$0xff]
        %v2734 = vld [vmem:[#allocation8 + $0x728] sm:$0xff]
        %v2735 = vld [vmem:[#allocation8 + $0x730] sm:$0xff]
        %v2736 = vld [vmem:[#allocation8 + $0x738] sm:$0xff]
        %v2737 = vld [vmem:[#allocation8 + $0x740] sm:$0xff]
        %v2738 = vld [vmem:[#allocation8 + $0x748] sm:$0xff]
        %v2739 = vld [vmem:[#allocation8 + $0x750] sm:$0xff]
        %v2740 = vld [vmem:[#allocation8 + $0x758] sm:$0xff]
        %v2741 = vld [vmem:[#allocation8 + $0x760] sm:$0xff]
        %v2742 = vld [vmem:[#allocation8 + $0x768] sm:$0xff]
        %v2743 = vld [vmem:[#allocation8 + $0x770] sm:$0xff]
        %v2744 = vld [vmem:[#allocation8 + $0x778] sm:$0xff]
        %v2745 = vld [vmem:[#allocation8 + $0x780] sm:$0xff]
        %v2746 = vld [vmem:[#allocation8 + $0x788] sm:$0xff]
        %v2747 = vld [vmem:[#allocation8 + $0x790] sm:$0xff]
        %v2748 = vld [vmem:[#allocation8 + $0x798] sm:$0xff]
        %v2749 = vld [vmem:[#allocation8 + $0x7a0] sm:$0xff]
        %v2750 = vld [vmem:[#allocation8 + $0x7a8] sm:$0xff]
        %v2751 = vld [vmem:[#allocation8 + $0x7b0] sm:$0xff]
        %v2752 = vld [vmem:[#allocation8 + $0x7b8] sm:$0xff]
        %v2753 = vld [vmem:[#allocation8 + $0x7c0] sm:$0xff]
        %v2754 = vld [vmem:[#allocation8 + $0x7c8] sm:$0xff]
        %v2755 = vld [vmem:[#allocation8 + $0x7d0] sm:$0xff]
        %v2756 = vld [vmem:[#allocation8 + $0x7d8] sm:$0xff]
        %v2757 = vld [vmem:[#allocation8 + $0x7e0] sm:$0xff]
        %v2758 = vld [vmem:[#allocation8 + $0x7e8] sm:$0xff]
        %v2759 = vld [vmem:[#allocation8 + $0x7f0] sm:$0xff]
        %v2760 = vld [vmem:[#allocation8 + $0x7f8] sm:$0xff]
        %v2761 = vld [vmem:[#allocation10] sm:$0xff]
        %v2763 = vperm.slane %v2761, 0
        %v2764 = vperm.slane %v2761, 1
        %v2765 = vperm.slane %v2761, 2
        %v2766 = vperm.slane %v2761, 3
        %v2767 = vperm.slane %v2761, 4
        %v2768 = vperm.slane %v2761, 5
        %v2769 = vperm.slane %v2761, 6
        %v2770 = vperm.slane %v2761, 7
        %v3035 = vunpack.c.l.b16 %v2505
        %v3036 = vunpack.c.h.b16 %v2505
        %v3037 = vunpack.c.l.b16 %v2506
        %v3038 = vunpack.c.h.b16 %v2506
        %v3039 = vunpack.c.l.b16 %v2507
        %v3040 = vunpack.c.h.b16 %v2507
        %v3041 = vunpack.c.l.b16 %v2508
        %v3042 = vunpack.c.h.b16 %v2508
        %v3043 = vunpack.c.l.b16 %v2509
        %v3044 = vunpack.c.h.b16 %v2509
        %v3045 = vunpack.c.l.b16 %v2510
        %v3046 = vunpack.c.h.b16 %v2510
        %v3047 = vunpack.c.l.b16 %v2511
        %v3048 = vunpack.c.h.b16 %v2511
        %v3049 = vunpack.c.l.b16 %v2512
        %v3050 = vunpack.c.h.b16 %v2512
        %v3051 = vunpack.c.l.b16 %v2513
        %v3052 = vunpack.c.h.b16 %v2513
        %v3053 = vunpack.c.l.b16 %v2514
        %v3054 = vunpack.c.h.b16 %v2514
        %v3055 = vunpack.c.l.b16 %v2515
        %v3056 = vunpack.c.h.b16 %v2515
        %v3057 = vunpack.c.l.b16 %v2516
        %v3058 = vunpack.c.h.b16 %v2516
        %v3059 = vunpack.c.l.b16 %v2517
        %v3060 = vunpack.c.h.b16 %v2517
        %v3061 = vunpack.c.l.b16 %v2518
        %v3062 = vunpack.c.h.b16 %v2518
        %v3063 = vunpack.c.l.b16 %v2519
        %v3064 = vunpack.c.h.b16 %v2519
        %v3065 = vunpack.c.l.b16 %v2520
        %v3066 = vunpack.c.h.b16 %v2520
        %v3067 = vunpack.c.l.b16 %v2521
        %v3068 = vunpack.c.h.b16 %v2521
        %v3069 = vunpack.c.l.b16 %v2522
        %v3070 = vunpack.c.h.b16 %v2522
        %v3071 = vunpack.c.l.b16 %v2523
        %v3072 = vunpack.c.h.b16 %v2523
        %v3073 = vunpack.c.l.b16 %v2524
        %v3074 = vunpack.c.h.b16 %v2524
        %v3075 = vunpack.c.l.b16 %v2525
        %v3076 = vunpack.c.h.b16 %v2525
        %v3077 = vunpack.c.l.b16 %v2526
        %v3078 = vunpack.c.h.b16 %v2526
        %v3079 = vunpack.c.l.b16 %v2527
        %v3080 = vunpack.c.h.b16 %v2527
        %v3081 = vunpack.c.l.b16 %v2528
        %v3082 = vunpack.c.h.b16 %v2528
        %v3083 = vunpack.c.l.b16 %v2529
        %v3084 = vunpack.c.h.b16 %v2529
        %v3085 = vunpack.c.l.b16 %v2530
        %v3086 = vunpack.c.h.b16 %v2530
        %v3087 = vunpack.c.l.b16 %v2531
        %v3088 = vunpack.c.h.b16 %v2531
        %v3089 = vunpack.c.l.b16 %v2532
        %v3090 = vunpack.c.h.b16 %v2532
        %v3091 = vunpack.c.l.b16 %v2533
        %v3092 = vunpack.c.h.b16 %v2533
        %v3093 = vunpack.c.l.b16 %v2534
        %v3094 = vunpack.c.h.b16 %v2534
        %v3095 = vunpack.c.l.b16 %v2535
        %v3096 = vunpack.c.h.b16 %v2535
        %v3097 = vunpack.c.l.b16 %v2536
        %v3098 = vunpack.c.h.b16 %v2536
        %v3099 = vunpack.c.l.b16 %v2537
        %v3100 = vunpack.c.h.b16 %v2537
        %v3101 = vunpack.c.l.b16 %v2538
        %v3102 = vunpack.c.h.b16 %v2538
        %v3103 = vunpack.c.l.b16 %v2539
        %v3104 = vunpack.c.h.b16 %v2539
        %v3105 = vunpack.c.l.b16 %v2540
        %v3106 = vunpack.c.h.b16 %v2540
        %v3107 = vunpack.c.l.b16 %v2541
        %v3108 = vunpack.c.h.b16 %v2541
        %v3109 = vunpack.c.l.b16 %v2542
        %v3110 = vunpack.c.h.b16 %v2542
        %v3111 = vunpack.c.l.b16 %v2543
        %v3112 = vunpack.c.h.b16 %v2543
        %v3113 = vunpack.c.l.b16 %v2544
        %v3114 = vunpack.c.h.b16 %v2544
        %v3115 = vunpack.c.l.b16 %v2545
        %v3116 = vunpack.c.h.b16 %v2545
        %v3117 = vunpack.c.l.b16 %v2546
        %v3118 = vunpack.c.h.b16 %v2546
        %v3119 = vunpack.c.l.b16 %v2547
        %v3120 = vunpack.c.h.b16 %v2547
        %v3121 = vunpack.c.l.b16 %v2548
        %v3122 = vunpack.c.h.b16 %v2548
        %v3123 = vunpack.c.l.b16 %v2549
        %v3124 = vunpack.c.h.b16 %v2549
        %v3125 = vunpack.c.l.b16 %v2550
        %v3126 = vunpack.c.h.b16 %v2550
        %v3127 = vunpack.c.l.b16 %v2551
        %v3128 = vunpack.c.h.b16 %v2551
        %v3129 = vunpack.c.l.b16 %v2552
        %v3130 = vunpack.c.h.b16 %v2552
        %v3131 = vunpack.c.l.b16 %v2553
        %v3132 = vunpack.c.h.b16 %v2553
        %v3133 = vunpack.c.l.b16 %v2554
        %v3134 = vunpack.c.h.b16 %v2554
        %v3135 = vunpack.c.l.b16 %v2555
        %v3136 = vunpack.c.h.b16 %v2555
        %v3137 = vunpack.c.l.b16 %v2556
        %v3138 = vunpack.c.h.b16 %v2556
        %v3139 = vunpack.c.l.b16 %v2557
        %v3140 = vunpack.c.h.b16 %v2557
        %v3141 = vunpack.c.l.b16 %v2558
        %v3142 = vunpack.c.h.b16 %v2558
        %v3143 = vunpack.c.l.b16 %v2559
        %v3144 = vunpack.c.h.b16 %v2559
        %v3145 = vunpack.c.l.b16 %v2560
        %v3146 = vunpack.c.h.b16 %v2560
        %v3147 = vunpack.c.l.b16 %v2561
        %v3148 = vunpack.c.h.b16 %v2561
        %v3149 = vunpack.c.l.b16 %v2562
        %v3150 = vunpack.c.h.b16 %v2562
        %v3151 = vunpack.c.l.b16 %v2563
        %v3152 = vunpack.c.h.b16 %v2563
        %v3153 = vunpack.c.l.b16 %v2564
        %v3154 = vunpack.c.h.b16 %v2564
        %v3155 = vunpack.c.l.b16 %v2565
        %v3156 = vunpack.c.h.b16 %v2565
        %v3157 = vunpack.c.l.b16 %v2566
        %v3158 = vunpack.c.h.b16 %v2566
        %v3159 = vunpack.c.l.b16 %v2567
        %v3160 = vunpack.c.h.b16 %v2567
        %v3161 = vunpack.c.l.b16 %v2568
        %v3162 = vunpack.c.h.b16 %v2568
        %v3163 = vunpack.c.l.b16 %v2569
        %v3164 = vunpack.c.h.b16 %v2569
        %v3165 = vunpack.c.l.b16 %v2570
        %v3166 = vunpack.c.h.b16 %v2570
        %v3167 = vunpack.c.l.b16 %v2571
        %v3168 = vunpack.c.h.b16 %v2571
        %v3169 = vunpack.c.l.b16 %v2572
        %v3170 = vunpack.c.h.b16 %v2572
        %v3171 = vunpack.c.l.b16 %v2573
        %v3172 = vunpack.c.h.b16 %v2573
        %v3173 = vunpack.c.l.b16 %v2574
        %v3174 = vunpack.c.h.b16 %v2574
        %v3175 = vunpack.c.l.b16 %v2575
        %v3176 = vunpack.c.h.b16 %v2575
        %v3177 = vunpack.c.l.b16 %v2576
        %v3178 = vunpack.c.h.b16 %v2576
        %v3179 = vunpack.c.l.b16 %v2577
        %v3180 = vunpack.c.h.b16 %v2577
        %v3181 = vunpack.c.l.b16 %v2578
        %v3182 = vunpack.c.h.b16 %v2578
        %v3183 = vunpack.c.l.b16 %v2579
        %v3184 = vunpack.c.h.b16 %v2579
        %v3185 = vunpack.c.l.b16 %v2580
        %v3186 = vunpack.c.h.b16 %v2580
        %v3187 = vunpack.c.l.b16 %v2581
        %v3188 = vunpack.c.h.b16 %v2581
        %v3189 = vunpack.c.l.b16 %v2582
        %v3190 = vunpack.c.h.b16 %v2582
        %v3191 = vunpack.c.l.b16 %v2583
        %v3192 = vunpack.c.h.b16 %v2583
        %v3193 = vunpack.c.l.b16 %v2584
        %v3194 = vunpack.c.h.b16 %v2584
        %v3195 = vunpack.c.l.b16 %v2585
        %v3196 = vunpack.c.h.b16 %v2585
        %v3197 = vunpack.c.l.b16 %v2586
        %v3198 = vunpack.c.h.b16 %v2586
        %v3199 = vunpack.c.l.b16 %v2587
        %v3200 = vunpack.c.h.b16 %v2587
        %v3201 = vunpack.c.l.b16 %v2588
        %v3202 = vunpack.c.h.b16 %v2588
        %v3203 = vunpack.c.l.b16 %v2589
        %v3204 = vunpack.c.h.b16 %v2589
        %v3205 = vunpack.c.l.b16 %v2590
        %v3206 = vunpack.c.h.b16 %v2590
        %v3207 = vunpack.c.l.b16 %v2591
        %v3208 = vunpack.c.h.b16 %v2591
        %v3209 = vunpack.c.l.b16 %v2592
        %v3210 = vunpack.c.h.b16 %v2592
        %v3211 = vunpack.c.l.b16 %v2593
        %v3212 = vunpack.c.h.b16 %v2593
        %v3213 = vunpack.c.l.b16 %v2594
        %v3214 = vunpack.c.h.b16 %v2594
        %v3215 = vunpack.c.l.b16 %v2595
        %v3216 = vunpack.c.h.b16 %v2595
        %v3217 = vunpack.c.l.b16 %v2596
        %v3218 = vunpack.c.h.b16 %v2596
        %v3219 = vunpack.c.l.b16 %v2597
        %v3220 = vunpack.c.h.b16 %v2597
        %v3221 = vunpack.c.l.b16 %v2598
        %v3222 = vunpack.c.h.b16 %v2598
        %v3223 = vunpack.c.l.b16 %v2599
        %v3224 = vunpack.c.h.b16 %v2599
        %v3225 = vunpack.c.l.b16 %v2600
        %v3226 = vunpack.c.h.b16 %v2600
        %v3227 = vunpack.c.l.b16 %v2601
        %v3228 = vunpack.c.h.b16 %v2601
        %v3229 = vunpack.c.l.b16 %v2602
        %v3230 = vunpack.c.h.b16 %v2602
        %v3231 = vunpack.c.l.b16 %v2603
        %v3232 = vunpack.c.h.b16 %v2603
        %v3233 = vunpack.c.l.b16 %v2604
        %v3234 = vunpack.c.h.b16 %v2604
        %v3235 = vunpack.c.l.b16 %v2605
        %v3236 = vunpack.c.h.b16 %v2605
        %v3237 = vunpack.c.l.b16 %v2606
        %v3238 = vunpack.c.h.b16 %v2606
        %v3239 = vunpack.c.l.b16 %v2607
        %v3240 = vunpack.c.h.b16 %v2607
        %v3241 = vunpack.c.l.b16 %v2608
        %v3242 = vunpack.c.h.b16 %v2608
        %v3243 = vunpack.c.l.b16 %v2609
        %v3244 = vunpack.c.h.b16 %v2609
        %v3245 = vunpack.c.l.b16 %v2610
        %v3246 = vunpack.c.h.b16 %v2610
        %v3247 = vunpack.c.l.b16 %v2611
        %v3248 = vunpack.c.h.b16 %v2611
        %v3249 = vunpack.c.l.b16 %v2612
        %v3250 = vunpack.c.h.b16 %v2612
        %v3251 = vunpack.c.l.b16 %v2613
        %v3252 = vunpack.c.h.b16 %v2613
        %v3253 = vunpack.c.l.b16 %v2614
        %v3254 = vunpack.c.h.b16 %v2614
        %v3255 = vunpack.c.l.b16 %v2615
        %v3256 = vunpack.c.h.b16 %v2615
        %v3257 = vunpack.c.l.b16 %v2616
        %v3258 = vunpack.c.h.b16 %v2616
        %v3259 = vunpack.c.l.b16 %v2617
        %v3260 = vunpack.c.h.b16 %v2617
        %v3261 = vunpack.c.l.b16 %v2618
        %v3262 = vunpack.c.h.b16 %v2618
        %v3263 = vunpack.c.l.b16 %v2619
        %v3264 = vunpack.c.h.b16 %v2619
        %v3265 = vunpack.c.l.b16 %v2620
        %v3266 = vunpack.c.h.b16 %v2620
        %v3267 = vunpack.c.l.b16 %v2621
        %v3268 = vunpack.c.h.b16 %v2621
        %v3269 = vunpack.c.l.b16 %v2622
        %v3270 = vunpack.c.h.b16 %v2622
        %v3271 = vunpack.c.l.b16 %v2623
        %v3272 = vunpack.c.h.b16 %v2623
        %v3273 = vunpack.c.l.b16 %v2624
        %v3274 = vunpack.c.h.b16 %v2624
        %v3275 = vunpack.c.l.b16 %v2625
        %v3276 = vunpack.c.h.b16 %v2625
        %v3277 = vunpack.c.l.b16 %v2626
        %v3278 = vunpack.c.h.b16 %v2626
        %v3279 = vunpack.c.l.b16 %v2627
        %v3280 = vunpack.c.h.b16 %v2627
        %v3281 = vunpack.c.l.b16 %v2628
        %v3282 = vunpack.c.h.b16 %v2628
        %v3283 = vunpack.c.l.b16 %v2629
        %v3284 = vunpack.c.h.b16 %v2629
        %v3285 = vunpack.c.l.b16 %v2630
        %v3286 = vunpack.c.h.b16 %v2630
        %v3287 = vunpack.c.l.b16 %v2631
        %v3288 = vunpack.c.h.b16 %v2631
        %v3289 = vunpack.c.l.b16 %v2632
        %v3290 = vunpack.c.h.b16 %v2632
        %v3291 = vunpack.c.l.b16 %v2633
        %v3292 = vunpack.c.h.b16 %v2633
        %v3293 = vunpack.c.l.b16 %v2634
        %v3294 = vunpack.c.h.b16 %v2634
        %v3295 = vunpack.c.l.b16 %v2635
        %v3296 = vunpack.c.h.b16 %v2635
        %v3297 = vunpack.c.l.b16 %v2636
        %v3298 = vunpack.c.h.b16 %v2636
        %v3299 = vunpack.c.l.b16 %v2637
        %v3300 = vunpack.c.h.b16 %v2637
        %v3301 = vunpack.c.l.b16 %v2638
        %v3302 = vunpack.c.h.b16 %v2638
        %v3303 = vunpack.c.l.b16 %v2639
        %v3304 = vunpack.c.h.b16 %v2639
        %v3305 = vunpack.c.l.b16 %v2640
        %v3306 = vunpack.c.h.b16 %v2640
        %v3307 = vunpack.c.l.b16 %v2641
        %v3308 = vunpack.c.h.b16 %v2641
        %v3309 = vunpack.c.l.b16 %v2642
        %v3310 = vunpack.c.h.b16 %v2642
        %v3311 = vunpack.c.l.b16 %v2643
        %v3312 = vunpack.c.h.b16 %v2643
        %v3313 = vunpack.c.l.b16 %v2644
        %v3314 = vunpack.c.h.b16 %v2644
        %v3315 = vunpack.c.l.b16 %v2645
        %v3316 = vunpack.c.h.b16 %v2645
        %v3317 = vunpack.c.l.b16 %v2646
        %v3318 = vunpack.c.h.b16 %v2646
        %v3319 = vunpack.c.l.b16 %v2647
        %v3320 = vunpack.c.h.b16 %v2647
        %v3321 = vunpack.c.l.b16 %v2648
        %v3322 = vunpack.c.h.b16 %v2648
        %v3323 = vunpack.c.l.b16 %v2649
        %v3324 = vunpack.c.h.b16 %v2649
        %v3325 = vunpack.c.l.b16 %v2650
        %v3326 = vunpack.c.h.b16 %v2650
        %v3327 = vunpack.c.l.b16 %v2651
        %v3328 = vunpack.c.h.b16 %v2651
        %v3329 = vunpack.c.l.b16 %v2652
        %v3330 = vunpack.c.h.b16 %v2652
        %v3331 = vunpack.c.l.b16 %v2653
        %v3332 = vunpack.c.h.b16 %v2653
        %v3333 = vunpack.c.l.b16 %v2654
        %v3334 = vunpack.c.h.b16 %v2654
        %v3335 = vunpack.c.l.b16 %v2655
        %v3336 = vunpack.c.h.b16 %v2655
        %v3337 = vunpack.c.l.b16 %v2656
        %v3338 = vunpack.c.h.b16 %v2656
        %v3339 = vunpack.c.l.b16 %v2657
        %v3340 = vunpack.c.h.b16 %v2657
        %v3341 = vunpack.c.l.b16 %v2658
        %v3342 = vunpack.c.h.b16 %v2658
        %v3343 = vunpack.c.l.b16 %v2659
        %v3344 = vunpack.c.h.b16 %v2659
        %v3345 = vunpack.c.l.b16 %v2660
        %v3346 = vunpack.c.h.b16 %v2660
        %v3347 = vunpack.c.l.b16 %v2661
        %v3348 = vunpack.c.h.b16 %v2661
        %v3349 = vunpack.c.l.b16 %v2662
        %v3350 = vunpack.c.h.b16 %v2662
        %v3351 = vunpack.c.l.b16 %v2663
        %v3352 = vunpack.c.h.b16 %v2663
        %v3353 = vunpack.c.l.b16 %v2664
        %v3354 = vunpack.c.h.b16 %v2664
        %v3355 = vunpack.c.l.b16 %v2665
        %v3356 = vunpack.c.h.b16 %v2665
        %v3357 = vunpack.c.l.b16 %v2666
        %v3358 = vunpack.c.h.b16 %v2666
        %v3359 = vunpack.c.l.b16 %v2667
        %v3360 = vunpack.c.h.b16 %v2667
        %v3361 = vunpack.c.l.b16 %v2668
        %v3362 = vunpack.c.h.b16 %v2668
        %v3363 = vunpack.c.l.b16 %v2669
        %v3364 = vunpack.c.h.b16 %v2669
        %v3365 = vunpack.c.l.b16 %v2670
        %v3366 = vunpack.c.h.b16 %v2670
        %v3367 = vunpack.c.l.b16 %v2671
        %v3368 = vunpack.c.h.b16 %v2671
        %v3369 = vunpack.c.l.b16 %v2672
        %v3370 = vunpack.c.h.b16 %v2672
        %v3371 = vunpack.c.l.b16 %v2673
        %v3372 = vunpack.c.h.b16 %v2673
        %v3373 = vunpack.c.l.b16 %v2674
        %v3374 = vunpack.c.h.b16 %v2674
        %v3375 = vunpack.c.l.b16 %v2675
        %v3376 = vunpack.c.h.b16 %v2675
        %v3377 = vunpack.c.l.b16 %v2676
        %v3378 = vunpack.c.h.b16 %v2676
        %v3379 = vunpack.c.l.b16 %v2677
        %v3380 = vunpack.c.h.b16 %v2677
        %v3381 = vunpack.c.l.b16 %v2678
        %v3382 = vunpack.c.h.b16 %v2678
        %v3383 = vunpack.c.l.b16 %v2679
        %v3384 = vunpack.c.h.b16 %v2679
        %v3385 = vunpack.c.l.b16 %v2680
        %v3386 = vunpack.c.h.b16 %v2680
        %v3387 = vunpack.c.l.b16 %v2681
        %v3388 = vunpack.c.h.b16 %v2681
        %v3389 = vunpack.c.l.b16 %v2682
        %v3390 = vunpack.c.h.b16 %v2682
        %v3391 = vunpack.c.l.b16 %v2683
        %v3392 = vunpack.c.h.b16 %v2683
        %v3393 = vunpack.c.l.b16 %v2684
        %v3394 = vunpack.c.h.b16 %v2684
        %v3395 = vunpack.c.l.b16 %v2685
        %v3396 = vunpack.c.h.b16 %v2685
        %v3397 = vunpack.c.l.b16 %v2686
        %v3398 = vunpack.c.h.b16 %v2686
        %v3399 = vunpack.c.l.b16 %v2687
        %v3400 = vunpack.c.h.b16 %v2687
        %v3401 = vunpack.c.l.b16 %v2688
        %v3402 = vunpack.c.h.b16 %v2688
        %v3403 = vunpack.c.l.b16 %v2689
        %v3404 = vunpack.c.h.b16 %v2689
        %v3405 = vunpack.c.l.b16 %v2690
        %v3406 = vunpack.c.h.b16 %v2690
        %v3407 = vunpack.c.l.b16 %v2691
        %v3408 = vunpack.c.h.b16 %v2691
        %v3409 = vunpack.c.l.b16 %v2692
        %v3410 = vunpack.c.h.b16 %v2692
        %v3411 = vunpack.c.l.b16 %v2693
        %v3412 = vunpack.c.h.b16 %v2693
        %v3413 = vunpack.c.l.b16 %v2694
        %v3414 = vunpack.c.h.b16 %v2694
        %v3415 = vunpack.c.l.b16 %v2695
        %v3416 = vunpack.c.h.b16 %v2695
        %v3417 = vunpack.c.l.b16 %v2696
        %v3418 = vunpack.c.h.b16 %v2696
        %v3419 = vunpack.c.l.b16 %v2697
        %v3420 = vunpack.c.h.b16 %v2697
        %v3421 = vunpack.c.l.b16 %v2698
        %v3422 = vunpack.c.h.b16 %v2698
        %v3423 = vunpack.c.l.b16 %v2699
        %v3424 = vunpack.c.h.b16 %v2699
        %v3425 = vunpack.c.l.b16 %v2700
        %v3426 = vunpack.c.h.b16 %v2700
        %v3427 = vunpack.c.l.b16 %v2701
        %v3428 = vunpack.c.h.b16 %v2701
        %v3429 = vunpack.c.l.b16 %v2702
        %v3430 = vunpack.c.h.b16 %v2702
        %v3431 = vunpack.c.l.b16 %v2703
        %v3432 = vunpack.c.h.b16 %v2703
        %v3433 = vunpack.c.l.b16 %v2704
        %v3434 = vunpack.c.h.b16 %v2704
        %v3435 = vunpack.c.l.b16 %v2705
        %v3436 = vunpack.c.h.b16 %v2705
        %v3437 = vunpack.c.l.b16 %v2706
        %v3438 = vunpack.c.h.b16 %v2706
        %v3439 = vunpack.c.l.b16 %v2707
        %v3440 = vunpack.c.h.b16 %v2707
        %v3441 = vunpack.c.l.b16 %v2708
        %v3442 = vunpack.c.h.b16 %v2708
        %v3443 = vunpack.c.l.b16 %v2709
        %v3444 = vunpack.c.h.b16 %v2709
        %v3445 = vunpack.c.l.b16 %v2710
        %v3446 = vunpack.c.h.b16 %v2710
        %v3447 = vunpack.c.l.b16 %v2711
        %v3448 = vunpack.c.h.b16 %v2711
        %v3449 = vunpack.c.l.b16 %v2712
        %v3450 = vunpack.c.h.b16 %v2712
        %v3451 = vunpack.c.l.b16 %v2713
        %v3452 = vunpack.c.h.b16 %v2713
        %v3453 = vunpack.c.l.b16 %v2714
        %v3454 = vunpack.c.h.b16 %v2714
        %v3455 = vunpack.c.l.b16 %v2715
        %v3456 = vunpack.c.h.b16 %v2715
        %v3457 = vunpack.c.l.b16 %v2716
        %v3458 = vunpack.c.h.b16 %v2716
        %v3459 = vunpack.c.l.b16 %v2717
        %v3460 = vunpack.c.h.b16 %v2717
        %v3461 = vunpack.c.l.b16 %v2718
        %v3462 = vunpack.c.h.b16 %v2718
        %v3463 = vunpack.c.l.b16 %v2719
        %v3464 = vunpack.c.h.b16 %v2719
        %v3465 = vunpack.c.l.b16 %v2720
        %v3466 = vunpack.c.h.b16 %v2720
        %v3467 = vunpack.c.l.b16 %v2721
        %v3468 = vunpack.c.h.b16 %v2721
        %v3469 = vunpack.c.l.b16 %v2722
        %v3470 = vunpack.c.h.b16 %v2722
        %v3471 = vunpack.c.l.b16 %v2723
        %v3472 = vunpack.c.h.b16 %v2723
        %v3473 = vunpack.c.l.b16 %v2724
        %v3474 = vunpack.c.h.b16 %v2724
        %v3475 = vunpack.c.l.b16 %v2725
        %v3476 = vunpack.c.h.b16 %v2725
        %v3477 = vunpack.c.l.b16 %v2726
        %v3478 = vunpack.c.h.b16 %v2726
        %v3479 = vunpack.c.l.b16 %v2727
        %v3480 = vunpack.c.h.b16 %v2727
        %v3481 = vunpack.c.l.b16 %v2728
        %v3482 = vunpack.c.h.b16 %v2728
        %v3483 = vunpack.c.l.b16 %v2729
        %v3484 = vunpack.c.h.b16 %v2729
        %v3485 = vunpack.c.l.b16 %v2730
        %v3486 = vunpack.c.h.b16 %v2730
        %v3487 = vunpack.c.l.b16 %v2731
        %v3488 = vunpack.c.h.b16 %v2731
        %v3489 = vunpack.c.l.b16 %v2732
        %v3490 = vunpack.c.h.b16 %v2732
        %v3491 = vunpack.c.l.b16 %v2733
        %v3492 = vunpack.c.h.b16 %v2733
        %v3493 = vunpack.c.l.b16 %v2734
        %v3494 = vunpack.c.h.b16 %v2734
        %v3495 = vunpack.c.l.b16 %v2735
        %v3496 = vunpack.c.h.b16 %v2735
        %v3497 = vunpack.c.l.b16 %v2736
        %v3498 = vunpack.c.h.b16 %v2736
        %v3499 = vunpack.c.l.b16 %v2737
        %v3500 = vunpack.c.h.b16 %v2737
        %v3501 = vunpack.c.l.b16 %v2738
        %v3502 = vunpack.c.h.b16 %v2738
        %v3503 = vunpack.c.l.b16 %v2739
        %v3504 = vunpack.c.h.b16 %v2739
        %v3505 = vunpack.c.l.b16 %v2740
        %v3506 = vunpack.c.h.b16 %v2740
        %v3507 = vunpack.c.l.b16 %v2741
        %v3508 = vunpack.c.h.b16 %v2741
        %v3509 = vunpack.c.l.b16 %v2742
        %v3510 = vunpack.c.h.b16 %v2742
        %v3511 = vunpack.c.l.b16 %v2743
        %v3512 = vunpack.c.h.b16 %v2743
        %v3513 = vunpack.c.l.b16 %v2744
        %v3514 = vunpack.c.h.b16 %v2744
        %v3515 = vunpack.c.l.b16 %v2745
        %v3516 = vunpack.c.h.b16 %v2745
        %v3517 = vunpack.c.l.b16 %v2746
        %v3518 = vunpack.c.h.b16 %v2746
        %v3519 = vunpack.c.l.b16 %v2747
        %v3520 = vunpack.c.h.b16 %v2747
        %v3521 = vunpack.c.l.b16 %v2748
        %v3522 = vunpack.c.h.b16 %v2748
        %v3523 = vunpack.c.l.b16 %v2749
        %v3524 = vunpack.c.h.b16 %v2749
        %v3525 = vunpack.c.l.b16 %v2750
        %v3526 = vunpack.c.h.b16 %v2750
        %v3527 = vunpack.c.l.b16 %v2751
        %v3528 = vunpack.c.h.b16 %v2751
        %v3529 = vunpack.c.l.b16 %v2752
        %v3530 = vunpack.c.h.b16 %v2752
        %v3531 = vunpack.c.l.b16 %v2753
        %v3532 = vunpack.c.h.b16 %v2753
        %v3533 = vunpack.c.l.b16 %v2754
        %v3534 = vunpack.c.h.b16 %v2754
        %v3535 = vunpack.c.l.b16 %v2755
        %v3536 = vunpack.c.h.b16 %v2755
        %v3537 = vunpack.c.l.b16 %v2756
        %v3538 = vunpack.c.h.b16 %v2756
        %v3539 = vunpack.c.l.b16 %v2757
        %v3540 = vunpack.c.h.b16 %v2757
        %v3541 = vunpack.c.l.b16 %v2758
        %v3542 = vunpack.c.h.b16 %v2758
        %v3543 = vunpack.c.l.b16 %v2759
        %v3544 = vunpack.c.h.b16 %v2759
        %v3545 = vunpack.c.l.b16 %v2760
        %v3546 = vunpack.c.h.b16 %v2760
        %v3547 = vpack.c.b16 %v3043, %v3035
        %v3548 = vpack.c.b16 %v3044, %v3036
        %v3549 = vpack.c.b16 %v3045, %v3037
        %v3550 = vpack.c.b16 %v3046, %v3038
        %v3551 = vpack.c.b16 %v3047, %v3039
        %v3552 = vpack.c.b16 %v3048, %v3040
        %v3553 = vpack.c.b16 %v3049, %v3041
        %v3554 = vpack.c.b16 %v3050, %v3042
        %v3555 = vpack.c.b16 %v3059, %v3051
        %v3556 = vpack.c.b16 %v3060, %v3052
        %v3557 = vpack.c.b16 %v3061, %v3053
        %v3558 = vpack.c.b16 %v3062, %v3054
        %v3559 = vpack.c.b16 %v3063, %v3055
        %v3560 = vpack.c.b16 %v3064, %v3056
        %v3561 = vpack.c.b16 %v3065, %v3057
        %v3562 = vpack.c.b16 %v3066, %v3058
        %v3563 = vpack.c.b16 %v3075, %v3067
        %v3564 = vpack.c.b16 %v3076, %v3068
        %v3565 = vpack.c.b16 %v3077, %v3069
        %v3566 = vpack.c.b16 %v3078, %v3070
        %v3567 = vpack.c.b16 %v3079, %v3071
        %v3568 = vpack.c.b16 %v3080, %v3072
        %v3569 = vpack.c.b16 %v3081, %v3073
        %v3570 = vpack.c.b16 %v3082, %v3074
        %v3571 = vpack.c.b16 %v3091, %v3083
        %v3572 = vpack.c.b16 %v3092, %v3084
        %v3573 = vpack.c.b16 %v3093, %v3085
        %v3574 = vpack.c.b16 %v3094, %v3086
        %v3575 = vpack.c.b16 %v3095, %v3087
        %v3576 = vpack.c.b16 %v3096, %v3088
        %v3577 = vpack.c.b16 %v3097, %v3089
        %v3578 = vpack.c.b16 %v3098, %v3090
        %v3579 = vpack.c.b16 %v3107, %v3099
        %v3580 = vpack.c.b16 %v3108, %v3100
        %v3581 = vpack.c.b16 %v3109, %v3101
        %v3582 = vpack.c.b16 %v3110, %v3102
        %v3583 = vpack.c.b16 %v3111, %v3103
        %v3584 = vpack.c.b16 %v3112, %v3104
        %v3585 = vpack.c.b16 %v3113, %v3105
        %v3586 = vpack.c.b16 %v3114, %v3106
        %v3587 = vpack.c.b16 %v3123, %v3115
        %v3588 = vpack.c.b16 %v3124, %v3116
        %v3589 = vpack.c.b16 %v3125, %v3117
        %v3590 = vpack.c.b16 %v3126, %v3118
        %v3591 = vpack.c.b16 %v3127, %v3119
        %v3592 = vpack.c.b16 %v3128, %v3120
        %v3593 = vpack.c.b16 %v3129, %v3121
        %v3594 = vpack.c.b16 %v3130, %v3122
        %v3595 = vpack.c.b16 %v3139, %v3131
        %v3596 = vpack.c.b16 %v3140, %v3132
        %v3597 = vpack.c.b16 %v3141, %v3133
        %v3598 = vpack.c.b16 %v3142, %v3134
        %v3599 = vpack.c.b16 %v3143, %v3135
        %v3600 = vpack.c.b16 %v3144, %v3136
        %v3601 = vpack.c.b16 %v3145, %v3137
        %v3602 = vpack.c.b16 %v3146, %v3138
        %v3603 = vpack.c.b16 %v3155, %v3147
        %v3604 = vpack.c.b16 %v3156, %v3148
        %v3605 = vpack.c.b16 %v3157, %v3149
        %v3606 = vpack.c.b16 %v3158, %v3150
        %v3607 = vpack.c.b16 %v3159, %v3151
        %v3608 = vpack.c.b16 %v3160, %v3152
        %v3609 = vpack.c.b16 %v3161, %v3153
        %v3610 = vpack.c.b16 %v3162, %v3154
        %v3611 = vpack.c.b16 %v3171, %v3163
        %v3612 = vpack.c.b16 %v3172, %v3164
        %v3613 = vpack.c.b16 %v3173, %v3165
        %v3614 = vpack.c.b16 %v3174, %v3166
        %v3615 = vpack.c.b16 %v3175, %v3167
        %v3616 = vpack.c.b16 %v3176, %v3168
        %v3617 = vpack.c.b16 %v3177, %v3169
        %v3618 = vpack.c.b16 %v3178, %v3170
        %v3619 = vpack.c.b16 %v3187, %v3179
        %v3620 = vpack.c.b16 %v3188, %v3180
        %v3621 = vpack.c.b16 %v3189, %v3181
        %v3622 = vpack.c.b16 %v3190, %v3182
        %v3623 = vpack.c.b16 %v3191, %v3183
        %v3624 = vpack.c.b16 %v3192, %v3184
        %v3625 = vpack.c.b16 %v3193, %v3185
        %v3626 = vpack.c.b16 %v3194, %v3186
        %v3627 = vpack.c.b16 %v3203, %v3195
        %v3628 = vpack.c.b16 %v3204, %v3196
        %v3629 = vpack.c.b16 %v3205, %v3197
        %v3630 = vpack.c.b16 %v3206, %v3198
        %v3631 = vpack.c.b16 %v3207, %v3199
        %v3632 = vpack.c.b16 %v3208, %v3200
        %v3633 = vpack.c.b16 %v3209, %v3201
        %v3634 = vpack.c.b16 %v3210, %v3202
        %v3635 = vpack.c.b16 %v3219, %v3211
        %v3636 = vpack.c.b16 %v3220, %v3212
        %v3637 = vpack.c.b16 %v3221, %v3213
        %v3638 = vpack.c.b16 %v3222, %v3214
        %v3639 = vpack.c.b16 %v3223, %v3215
        %v3640 = vpack.c.b16 %v3224, %v3216
        %v3641 = vpack.c.b16 %v3225, %v3217
        %v3642 = vpack.c.b16 %v3226, %v3218
        %v3643 = vpack.c.b16 %v3235, %v3227
        %v3644 = vpack.c.b16 %v3236, %v3228
        %v3645 = vpack.c.b16 %v3237, %v3229
        %v3646 = vpack.c.b16 %v3238, %v3230
        %v3647 = vpack.c.b16 %v3239, %v3231
        %v3648 = vpack.c.b16 %v3240, %v3232
        %v3649 = vpack.c.b16 %v3241, %v3233
        %v3650 = vpack.c.b16 %v3242, %v3234
        %v3651 = vpack.c.b16 %v3251, %v3243
        %v3652 = vpack.c.b16 %v3252, %v3244
        %v3653 = vpack.c.b16 %v3253, %v3245
        %v3654 = vpack.c.b16 %v3254, %v3246
        %v3655 = vpack.c.b16 %v3255, %v3247
        %v3656 = vpack.c.b16 %v3256, %v3248
        %v3657 = vpack.c.b16 %v3257, %v3249
        %v3658 = vpack.c.b16 %v3258, %v3250
        %v3659 = vpack.c.b16 %v3267, %v3259
        %v3660 = vpack.c.b16 %v3268, %v3260
        %v3661 = vpack.c.b16 %v3269, %v3261
        %v3662 = vpack.c.b16 %v3270, %v3262
        %v3663 = vpack.c.b16 %v3271, %v3263
        %v3664 = vpack.c.b16 %v3272, %v3264
        %v3665 = vpack.c.b16 %v3273, %v3265
        %v3666 = vpack.c.b16 %v3274, %v3266
        %v3667 = vpack.c.b16 %v3283, %v3275
        %v3668 = vpack.c.b16 %v3284, %v3276
        %v3669 = vpack.c.b16 %v3285, %v3277
        %v3670 = vpack.c.b16 %v3286, %v3278
        %v3671 = vpack.c.b16 %v3287, %v3279
        %v3672 = vpack.c.b16 %v3288, %v3280
        %v3673 = vpack.c.b16 %v3289, %v3281
        %v3674 = vpack.c.b16 %v3290, %v3282
        %v3675 = vpack.c.b16 %v3299, %v3291
        %v3676 = vpack.c.b16 %v3300, %v3292
        %v3677 = vpack.c.b16 %v3301, %v3293
        %v3678 = vpack.c.b16 %v3302, %v3294
        %v3679 = vpack.c.b16 %v3303, %v3295
        %v3680 = vpack.c.b16 %v3304, %v3296
        %v3681 = vpack.c.b16 %v3305, %v3297
        %v3682 = vpack.c.b16 %v3306, %v3298
        %v3683 = vpack.c.b16 %v3315, %v3307
        %v3684 = vpack.c.b16 %v3316, %v3308
        %v3685 = vpack.c.b16 %v3317, %v3309
        %v3686 = vpack.c.b16 %v3318, %v3310
        %v3687 = vpack.c.b16 %v3319, %v3311
        %v3688 = vpack.c.b16 %v3320, %v3312
        %v3689 = vpack.c.b16 %v3321, %v3313
        %v3690 = vpack.c.b16 %v3322, %v3314
        %v3691 = vpack.c.b16 %v3331, %v3323
        %v3692 = vpack.c.b16 %v3332, %v3324
        %v3693 = vpack.c.b16 %v3333, %v3325
        %v3694 = vpack.c.b16 %v3334, %v3326
        %v3695 = vpack.c.b16 %v3335, %v3327
        %v3696 = vpack.c.b16 %v3336, %v3328
        %v3697 = vpack.c.b16 %v3337, %v3329
        %v3698 = vpack.c.b16 %v3338, %v3330
        %v3699 = vpack.c.b16 %v3347, %v3339
        %v3700 = vpack.c.b16 %v3348, %v3340
        %v3701 = vpack.c.b16 %v3349, %v3341
        %v3702 = vpack.c.b16 %v3350, %v3342
        %v3703 = vpack.c.b16 %v3351, %v3343
        %v3704 = vpack.c.b16 %v3352, %v3344
        %v3705 = vpack.c.b16 %v3353, %v3345
        %v3706 = vpack.c.b16 %v3354, %v3346
        %v3707 = vpack.c.b16 %v3363, %v3355
        %v3708 = vpack.c.b16 %v3364, %v3356
        %v3709 = vpack.c.b16 %v3365, %v3357
        %v3710 = vpack.c.b16 %v3366, %v3358
        %v3711 = vpack.c.b16 %v3367, %v3359
        %v3712 = vpack.c.b16 %v3368, %v3360
        %v3713 = vpack.c.b16 %v3369, %v3361
        %v3714 = vpack.c.b16 %v3370, %v3362
        %v3715 = vpack.c.b16 %v3379, %v3371
        %v3716 = vpack.c.b16 %v3380, %v3372
        %v3717 = vpack.c.b16 %v3381, %v3373
        %v3718 = vpack.c.b16 %v3382, %v3374
        %v3719 = vpack.c.b16 %v3383, %v3375
        %v3720 = vpack.c.b16 %v3384, %v3376
        %v3721 = vpack.c.b16 %v3385, %v3377
        %v3722 = vpack.c.b16 %v3386, %v3378
        %v3723 = vpack.c.b16 %v3395, %v3387
        %v3724 = vpack.c.b16 %v3396, %v3388
        %v3725 = vpack.c.b16 %v3397, %v3389
        %v3726 = vpack.c.b16 %v3398, %v3390
        %v3727 = vpack.c.b16 %v3399, %v3391
        %v3728 = vpack.c.b16 %v3400, %v3392
        %v3729 = vpack.c.b16 %v3401, %v3393
        %v3730 = vpack.c.b16 %v3402, %v3394
        %v3731 = vpack.c.b16 %v3411, %v3403
        %v3732 = vpack.c.b16 %v3412, %v3404
        %v3733 = vpack.c.b16 %v3413, %v3405
        %v3734 = vpack.c.b16 %v3414, %v3406
        %v3735 = vpack.c.b16 %v3415, %v3407
        %v3736 = vpack.c.b16 %v3416, %v3408
        %v3737 = vpack.c.b16 %v3417, %v3409
        %v3738 = vpack.c.b16 %v3418, %v3410
        %v3739 = vpack.c.b16 %v3427, %v3419
        %v3740 = vpack.c.b16 %v3428, %v3420
        %v3741 = vpack.c.b16 %v3429, %v3421
        %v3742 = vpack.c.b16 %v3430, %v3422
        %v3743 = vpack.c.b16 %v3431, %v3423
        %v3744 = vpack.c.b16 %v3432, %v3424
        %v3745 = vpack.c.b16 %v3433, %v3425
        %v3746 = vpack.c.b16 %v3434, %v3426
        %v3747 = vpack.c.b16 %v3443, %v3435
        %v3748 = vpack.c.b16 %v3444, %v3436
        %v3749 = vpack.c.b16 %v3445, %v3437
        %v3750 = vpack.c.b16 %v3446, %v3438
        %v3751 = vpack.c.b16 %v3447, %v3439
        %v3752 = vpack.c.b16 %v3448, %v3440
        %v3753 = vpack.c.b16 %v3449, %v3441
        %v3754 = vpack.c.b16 %v3450, %v3442
        %v3755 = vpack.c.b16 %v3459, %v3451
        %v3756 = vpack.c.b16 %v3460, %v3452
        %v3757 = vpack.c.b16 %v3461, %v3453
        %v3758 = vpack.c.b16 %v3462, %v3454
        %v3759 = vpack.c.b16 %v3463, %v3455
        %v3760 = vpack.c.b16 %v3464, %v3456
        %v3761 = vpack.c.b16 %v3465, %v3457
        %v3762 = vpack.c.b16 %v3466, %v3458
        %v3763 = vpack.c.b16 %v3475, %v3467
        %v3764 = vpack.c.b16 %v3476, %v3468
        %v3765 = vpack.c.b16 %v3477, %v3469
        %v3766 = vpack.c.b16 %v3478, %v3470
        %v3767 = vpack.c.b16 %v3479, %v3471
        %v3768 = vpack.c.b16 %v3480, %v3472
        %v3769 = vpack.c.b16 %v3481, %v3473
        %v3770 = vpack.c.b16 %v3482, %v3474
        %v3771 = vpack.c.b16 %v3491, %v3483
        %v3772 = vpack.c.b16 %v3492, %v3484
        %v3773 = vpack.c.b16 %v3493, %v3485
        %v3774 = vpack.c.b16 %v3494, %v3486
        %v3775 = vpack.c.b16 %v3495, %v3487
        %v3776 = vpack.c.b16 %v3496, %v3488
        %v3777 = vpack.c.b16 %v3497, %v3489
        %v3778 = vpack.c.b16 %v3498, %v3490
        %v3779 = vpack.c.b16 %v3507, %v3499
        %v3780 = vpack.c.b16 %v3508, %v3500
        %v3781 = vpack.c.b16 %v3509, %v3501
        %v3782 = vpack.c.b16 %v3510, %v3502
        %v3783 = vpack.c.b16 %v3511, %v3503
        %v3784 = vpack.c.b16 %v3512, %v3504
        %v3785 = vpack.c.b16 %v3513, %v3505
        %v3786 = vpack.c.b16 %v3514, %v3506
        %v3787 = vpack.c.b16 %v3523, %v3515
        %v3788 = vpack.c.b16 %v3524, %v3516
        %v3789 = vpack.c.b16 %v3525, %v3517
        %v3790 = vpack.c.b16 %v3526, %v3518
        %v3791 = vpack.c.b16 %v3527, %v3519
        %v3792 = vpack.c.b16 %v3528, %v3520
        %v3793 = vpack.c.b16 %v3529, %v3521
        %v3794 = vpack.c.b16 %v3530, %v3522
        %v3795 = vpack.c.b16 %v3539, %v3531
        %v3796 = vpack.c.b16 %v3540, %v3532
        %v3797 = vpack.c.b16 %v3541, %v3533
        %v3798 = vpack.c.b16 %v3542, %v3534
        %v3799 = vpack.c.b16 %v3543, %v3535
        %v3800 = vpack.c.b16 %v3544, %v3536
        %v3801 = vpack.c.b16 %v3545, %v3537
        %v3802 = vpack.c.b16 %v3546, %v3538
        %4059 = vmatpush.bf16.msra.mxu0 %v3603
        %4060 = vmatpush.bf16.msra.mxu0 %v3595
        %4061 = vmatpush.bf16.msra.mxu0 %v3587
        %4062 = vmatpush.bf16.msra.mxu0 %v3579
        %4063 = vmatpush.bf16.msra.mxu0 %v3571
        %4064 = vmatpush.bf16.msra.mxu0 %v3563
        %4065 = vmatpush.bf16.msra.mxu0 %v3555
        %4066 = vmatpush.bf16.msra.mxu0 %v3547
        %4067 = vmatmul.bf16.gmra.mxu0 %v2501
        %v4068 = vpop.f32.mrf.mxu0
        %v4069 = vadd.f32 %v2763, %v4068
        %v4070 = vpop.f32.mrf.mxu0
        %v4071 = vadd.f32 %v2763, %v4070
        %4072 = vdwg.mxu0
        %4073 = vmatpush.bf16.msra.mxu0 %v3667
        %4074 = vmatpush.bf16.msra.mxu0 %v3659
        %4075 = vmatpush.bf16.msra.mxu0 %v3651
        %4076 = vmatpush.bf16.msra.mxu0 %v3643
        %4077 = vmatpush.bf16.msra.mxu0 %v3635
        %4078 = vmatpush.bf16.msra.mxu0 %v3627
        %4079 = vmatpush.bf16.msra.mxu0 %v3619
        %4080 = vmatpush.bf16.msra.mxu0 %v3611
        %4081 = vmatmul.bf16.gmra.mxu0 %v2502
        %v4082 = vpop.f32.mrf.mxu0
        %v4083 = vadd.f32 %v4069, %v4082
        %v4084 = vpop.f32.mrf.mxu0
        %v4085 = vadd.f32 %v4071, %v4084
        %4086 = vdwg.mxu0
        %4087 = vmatpush.bf16.msra.mxu0 %v3731
        %4088 = vmatpush.bf16.msra.mxu0 %v3723
        %4089 = vmatpush.bf16.msra.mxu0 %v3715
        %4090 = vmatpush.bf16.msra.mxu0 %v3707
        %4091 = vmatpush.bf16.msra.mxu0 %v3699
        %4092 = vmatpush.bf16.msra.mxu0 %v3691
        %4093 = vmatpush.bf16.msra.mxu0 %v3683
        %4094 = vmatpush.bf16.msra.mxu0 %v3675
        %4095 = vmatmul.bf16.gmra.mxu0 %v2503
        %v4096 = vpop.f32.mrf.mxu0
        %v4097 = vadd.f32 %v4083, %v4096
        %v4098 = vpop.f32.mrf.mxu0
        %v4099 = vadd.f32 %v4085, %v4098
        %4100 = vdwg.mxu0
        %4101 = vmatpush.bf16.msra.mxu0 %v3795
        %4102 = vmatpush.bf16.msra.mxu0 %v3787
        %4103 = vmatpush.bf16.msra.mxu0 %v3779
        %4104 = vmatpush.bf16.msra.mxu0 %v3771
        %4105 = vmatpush.bf16.msra.mxu0 %v3763
        %4106 = vmatpush.bf16.msra.mxu0 %v3755
        %4107 = vmatpush.bf16.msra.mxu0 %v3747
        %4108 = vmatpush.bf16.msra.mxu0 %v3739
        %4109 = vmatmul.bf16.gmra.mxu0 %v2504
        %v4110 = vpop.f32.mrf.mxu0
        %v4111 = vadd.f32 %v4097, %v4110
        %v4112 = vpop.f32.mrf.mxu0
        %v4113 = vadd.f32 %v4099, %v4112
        %4114 = vdwg.mxu0
        %4115 = vmatpush.bf16.msra.mxu0 %v3604
        %4116 = vmatpush.bf16.msra.mxu0 %v3596
        %4117 = vmatpush.bf16.msra.mxu0 %v3588
        %4118 = vmatpush.bf16.msra.mxu0 %v3580
        %4119 = vmatpush.bf16.msra.mxu0 %v3572
        %4120 = vmatpush.bf16.msra.mxu0 %v3564
        %4121 = vmatpush.bf16.msra.mxu0 %v3556
        %4122 = vmatpush.bf16.msra.mxu0 %v3548
        %4123 = vmatmul.bf16.gmra.mxu0 %v2501
        %v4124 = vpop.f32.mrf.mxu0
        %v4125 = vadd.f32 %v2764, %v4124
        %v4126 = vpop.f32.mrf.mxu0
        %v4127 = vadd.f32 %v2764, %v4126
        %4128 = vdwg.mxu0
        %4129 = vmatpush.bf16.msra.mxu0 %v3668
        %4130 = vmatpush.bf16.msra.mxu0 %v3660
        %4131 = vmatpush.bf16.msra.mxu0 %v3652
        %4132 = vmatpush.bf16.msra.mxu0 %v3644
        %4133 = vmatpush.bf16.msra.mxu0 %v3636
        %4134 = vmatpush.bf16.msra.mxu0 %v3628
        %4135 = vmatpush.bf16.msra.mxu0 %v3620
        %4136 = vmatpush.bf16.msra.mxu0 %v3612
        %4137 = vmatmul.bf16.gmra.mxu0 %v2502
        %v4138 = vpop.f32.mrf.mxu0
        %v4139 = vadd.f32 %v4125, %v4138
        %v4140 = vpop.f32.mrf.mxu0
        %v4141 = vadd.f32 %v4127, %v4140
        %4142 = vdwg.mxu0
        %4143 = vmatpush.bf16.msra.mxu0 %v3732
        %4144 = vmatpush.bf16.msra.mxu0 %v3724
        %4145 = vmatpush.bf16.msra.mxu0 %v3716
        %4146 = vmatpush.bf16.msra.mxu0 %v3708
        %4147 = vmatpush.bf16.msra.mxu0 %v3700
        %4148 = vmatpush.bf16.msra.mxu0 %v3692
        %4149 = vmatpush.bf16.msra.mxu0 %v3684
        %4150 = vmatpush.bf16.msra.mxu0 %v3676
        %4151 = vmatmul.bf16.gmra.mxu0 %v2503
        %v4152 = vpop.f32.mrf.mxu0
        %v4153 = vadd.f32 %v4139, %v4152
        %v4154 = vpop.f32.mrf.mxu0
        %v4155 = vadd.f32 %v4141, %v4154
        %4156 = vdwg.mxu0
        %4157 = vmatpush.bf16.msra.mxu0 %v3796
        %4158 = vmatpush.bf16.msra.mxu0 %v3788
        %4159 = vmatpush.bf16.msra.mxu0 %v3780
        %4160 = vmatpush.bf16.msra.mxu0 %v3772
        %4161 = vmatpush.bf16.msra.mxu0 %v3764
        %4162 = vmatpush.bf16.msra.mxu0 %v3756
        %4163 = vmatpush.bf16.msra.mxu0 %v3748
        %4164 = vmatpush.bf16.msra.mxu0 %v3740
        %4165 = vmatmul.bf16.gmra.mxu0 %v2504
        %v4166 = vpop.f32.mrf.mxu0
        %v4167 = vadd.f32 %v4153, %v4166
        %v4168 = vpop.f32.mrf.mxu0
        %v4169 = vadd.f32 %v4155, %v4168
        %4170 = vdwg.mxu0
        %4171 = vmatpush.bf16.msra.mxu0 %v3605
        %4172 = vmatpush.bf16.msra.mxu0 %v3597
        %4173 = vmatpush.bf16.msra.mxu0 %v3589
        %4174 = vmatpush.bf16.msra.mxu0 %v3581
        %4175 = vmatpush.bf16.msra.mxu0 %v3573
        %4176 = vmatpush.bf16.msra.mxu0 %v3565
        %4177 = vmatpush.bf16.msra.mxu0 %v3557
        %4178 = vmatpush.bf16.msra.mxu0 %v3549
        %4179 = vmatmul.bf16.gmra.mxu0 %v2501
        %v4180 = vpop.f32.mrf.mxu0
        %v4181 = vadd.f32 %v2765, %v4180
        %v4182 = vpop.f32.mrf.mxu0
        %v4183 = vadd.f32 %v2765, %v4182
        %4184 = vdwg.mxu0
        %4185 = vmatpush.bf16.msra.mxu0 %v3669
        %4186 = vmatpush.bf16.msra.mxu0 %v3661
        %4187 = vmatpush.bf16.msra.mxu0 %v3653
        %4188 = vmatpush.bf16.msra.mxu0 %v3645
        %4189 = vmatpush.bf16.msra.mxu0 %v3637
        %4190 = vmatpush.bf16.msra.mxu0 %v3629
        %4191 = vmatpush.bf16.msra.mxu0 %v3621
        %4192 = vmatpush.bf16.msra.mxu0 %v3613
        %4193 = vmatmul.bf16.gmra.mxu0 %v2502
        %v4194 = vpop.f32.mrf.mxu0
        %v4195 = vadd.f32 %v4181, %v4194
        %v4196 = vpop.f32.mrf.mxu0
        %v4197 = vadd.f32 %v4183, %v4196
        %4198 = vdwg.mxu0
        %4199 = vmatpush.bf16.msra.mxu0 %v3733
        %4200 = vmatpush.bf16.msra.mxu0 %v3725
        %4201 = vmatpush.bf16.msra.mxu0 %v3717
        %4202 = vmatpush.bf16.msra.mxu0 %v3709
        %4203 = vmatpush.bf16.msra.mxu0 %v3701
        %4204 = vmatpush.bf16.msra.mxu0 %v3693
        %4205 = vmatpush.bf16.msra.mxu0 %v3685
        %4206 = vmatpush.bf16.msra.mxu0 %v3677
        %4207 = vmatmul.bf16.gmra.mxu0 %v2503
        %v4208 = vpop.f32.mrf.mxu0
        %v4209 = vadd.f32 %v4195, %v4208
        %v4210 = vpop.f32.mrf.mxu0
        %v4211 = vadd.f32 %v4197, %v4210
        %4212 = vdwg.mxu0
        %4213 = vmatpush.bf16.msra.mxu0 %v3797
        %4214 = vmatpush.bf16.msra.mxu0 %v3789
        %4215 = vmatpush.bf16.msra.mxu0 %v3781
        %4216 = vmatpush.bf16.msra.mxu0 %v3773
        %4217 = vmatpush.bf16.msra.mxu0 %v3765
        %4218 = vmatpush.bf16.msra.mxu0 %v3757
        %4219 = vmatpush.bf16.msra.mxu0 %v3749
        %4220 = vmatpush.bf16.msra.mxu0 %v3741
        %4221 = vmatmul.bf16.gmra.mxu0 %v2504
        %v4222 = vpop.f32.mrf.mxu0
        %v4223 = vadd.f32 %v4209, %v4222
        %v4224 = vpop.f32.mrf.mxu0
        %v4225 = vadd.f32 %v4211, %v4224
        %4226 = vdwg.mxu0
        %4227 = vmatpush.bf16.msra.mxu0 %v3606
        %4228 = vmatpush.bf16.msra.mxu0 %v3598
        %4229 = vmatpush.bf16.msra.mxu0 %v3590
        %4230 = vmatpush.bf16.msra.mxu0 %v3582
        %4231 = vmatpush.bf16.msra.mxu0 %v3574
        %4232 = vmatpush.bf16.msra.mxu0 %v3566
        %4233 = vmatpush.bf16.msra.mxu0 %v3558
        %4234 = vmatpush.bf16.msra.mxu0 %v3550
        %4235 = vmatmul.bf16.gmra.mxu0 %v2501
        %v4236 = vpop.f32.mrf.mxu0
        %v4237 = vadd.f32 %v2766, %v4236
        %v4238 = vpop.f32.mrf.mxu0
        %v4239 = vadd.f32 %v2766, %v4238
        %4240 = vdwg.mxu0
        %4241 = vmatpush.bf16.msra.mxu0 %v3670
        %4242 = vmatpush.bf16.msra.mxu0 %v3662
        %4243 = vmatpush.bf16.msra.mxu0 %v3654
        %4244 = vmatpush.bf16.msra.mxu0 %v3646
        %4245 = vmatpush.bf16.msra.mxu0 %v3638
        %4246 = vmatpush.bf16.msra.mxu0 %v3630
        %4247 = vmatpush.bf16.msra.mxu0 %v3622
        %4248 = vmatpush.bf16.msra.mxu0 %v3614
        %4249 = vmatmul.bf16.gmra.mxu0 %v2502
        %v4250 = vpop.f32.mrf.mxu0
        %v4251 = vadd.f32 %v4237, %v4250
        %v4252 = vpop.f32.mrf.mxu0
        %v4253 = vadd.f32 %v4239, %v4252
        %4254 = vdwg.mxu0
        %4255 = vmatpush.bf16.msra.mxu0 %v3734
        %4256 = vmatpush.bf16.msra.mxu0 %v3726
        %4257 = vmatpush.bf16.msra.mxu0 %v3718
        %4258 = vmatpush.bf16.msra.mxu0 %v3710
        %4259 = vmatpush.bf16.msra.mxu0 %v3702
        %4260 = vmatpush.bf16.msra.mxu0 %v3694
        %4261 = vmatpush.bf16.msra.mxu0 %v3686
        %4262 = vmatpush.bf16.msra.mxu0 %v3678
        %4263 = vmatmul.bf16.gmra.mxu0 %v2503
        %v4264 = vpop.f32.mrf.mxu0
        %v4265 = vadd.f32 %v4251, %v4264
        %v4266 = vpop.f32.mrf.mxu0
        %v4267 = vadd.f32 %v4253, %v4266
        %4268 = vdwg.mxu0
        %4269 = vmatpush.bf16.msra.mxu0 %v3798
        %4270 = vmatpush.bf16.msra.mxu0 %v3790
        %4271 = vmatpush.bf16.msra.mxu0 %v3782
        %4272 = vmatpush.bf16.msra.mxu0 %v3774
        %4273 = vmatpush.bf16.msra.mxu0 %v3766
        %4274 = vmatpush.bf16.msra.mxu0 %v3758
        %4275 = vmatpush.bf16.msra.mxu0 %v3750
        %4276 = vmatpush.bf16.msra.mxu0 %v3742
        %4277 = vmatmul.bf16.gmra.mxu0 %v2504
        %v4278 = vpop.f32.mrf.mxu0
        %v4279 = vadd.f32 %v4265, %v4278
        %v4280 = vpop.f32.mrf.mxu0
        %v4281 = vadd.f32 %v4267, %v4280
        %4282 = vdwg.mxu0
        %4283 = vmatpush.bf16.msra.mxu0 %v3607
        %4284 = vmatpush.bf16.msra.mxu0 %v3599
        %4285 = vmatpush.bf16.msra.mxu0 %v3591
        %4286 = vmatpush.bf16.msra.mxu0 %v3583
        %4287 = vmatpush.bf16.msra.mxu0 %v3575
        %4288 = vmatpush.bf16.msra.mxu0 %v3567
        %4289 = vmatpush.bf16.msra.mxu0 %v3559
        %4290 = vmatpush.bf16.msra.mxu0 %v3551
        %4291 = vmatmul.bf16.gmra.mxu0 %v2501
        %v4292 = vpop.f32.mrf.mxu0
        %v4293 = vadd.f32 %v2767, %v4292
        %v4294 = vpop.f32.mrf.mxu0
        %v4295 = vadd.f32 %v2767, %v4294
        %4296 = vdwg.mxu0
        %4297 = vmatpush.bf16.msra.mxu0 %v3671
        %4298 = vmatpush.bf16.msra.mxu0 %v3663
        %4299 = vmatpush.bf16.msra.mxu0 %v3655
        %4300 = vmatpush.bf16.msra.mxu0 %v3647
        %4301 = vmatpush.bf16.msra.mxu0 %v3639
        %4302 = vmatpush.bf16.msra.mxu0 %v3631
        %4303 = vmatpush.bf16.msra.mxu0 %v3623
        %4304 = vmatpush.bf16.msra.mxu0 %v3615
        %4305 = vmatmul.bf16.gmra.mxu0 %v2502
        %v4306 = vpop.f32.mrf.mxu0
        %v4307 = vadd.f32 %v4293, %v4306
        %v4308 = vpop.f32.mrf.mxu0
        %v4309 = vadd.f32 %v4295, %v4308
        %4310 = vdwg.mxu0
        %4311 = vmatpush.bf16.msra.mxu0 %v3735
        %4312 = vmatpush.bf16.msra.mxu0 %v3727
        %4313 = vmatpush.bf16.msra.mxu0 %v3719
        %4314 = vmatpush.bf16.msra.mxu0 %v3711
        %4315 = vmatpush.bf16.msra.mxu0 %v3703
        %4316 = vmatpush.bf16.msra.mxu0 %v3695
        %4317 = vmatpush.bf16.msra.mxu0 %v3687
        %4318 = vmatpush.bf16.msra.mxu0 %v3679
        %4319 = vmatmul.bf16.gmra.mxu0 %v2503
        %v4320 = vpop.f32.mrf.mxu0
        %v4321 = vadd.f32 %v4307, %v4320
        %v4322 = vpop.f32.mrf.mxu0
        %v4323 = vadd.f32 %v4309, %v4322
        %4324 = vdwg.mxu0
        %4325 = vmatpush.bf16.msra.mxu0 %v3799
        %4326 = vmatpush.bf16.msra.mxu0 %v3791
        %4327 = vmatpush.bf16.msra.mxu0 %v3783
        %4328 = vmatpush.bf16.msra.mxu0 %v3775
        %4329 = vmatpush.bf16.msra.mxu0 %v3767
        %4330 = vmatpush.bf16.msra.mxu0 %v3759
        %4331 = vmatpush.bf16.msra.mxu0 %v3751
        %4332 = vmatpush.bf16.msra.mxu0 %v3743
        %4333 = vmatmul.bf16.gmra.mxu0 %v2504
        %v4334 = vpop.f32.mrf.mxu0
        %v4335 = vadd.f32 %v4321, %v4334
        %v4336 = vpop.f32.mrf.mxu0
        %v4337 = vadd.f32 %v4323, %v4336
        %4338 = vdwg.mxu0
        %4339 = vmatpush.bf16.msra.mxu0 %v3608
        %4340 = vmatpush.bf16.msra.mxu0 %v3600
        %4341 = vmatpush.bf16.msra.mxu0 %v3592
        %4342 = vmatpush.bf16.msra.mxu0 %v3584
        %4343 = vmatpush.bf16.msra.mxu0 %v3576
        %4344 = vmatpush.bf16.msra.mxu0 %v3568
        %4345 = vmatpush.bf16.msra.mxu0 %v3560
        %4346 = vmatpush.bf16.msra.mxu0 %v3552
        %4347 = vmatmul.bf16.gmra.mxu0 %v2501
        %v4348 = vpop.f32.mrf.mxu0
        %v4349 = vadd.f32 %v2768, %v4348
        %v4350 = vpop.f32.mrf.mxu0
        %v4351 = vadd.f32 %v2768, %v4350
        %4352 = vdwg.mxu0
        %4353 = vmatpush.bf16.msra.mxu0 %v3672
        %4354 = vmatpush.bf16.msra.mxu0 %v3664
        %4355 = vmatpush.bf16.msra.mxu0 %v3656
        %4356 = vmatpush.bf16.msra.mxu0 %v3648
        %4357 = vmatpush.bf16.msra.mxu0 %v3640
        %4358 = vmatpush.bf16.msra.mxu0 %v3632
        %4359 = vmatpush.bf16.msra.mxu0 %v3624
        %4360 = vmatpush.bf16.msra.mxu0 %v3616
        %4361 = vmatmul.bf16.gmra.mxu0 %v2502
        %v4362 = vpop.f32.mrf.mxu0
        %v4363 = vadd.f32 %v4349, %v4362
        %v4364 = vpop.f32.mrf.mxu0
        %v4365 = vadd.f32 %v4351, %v4364
        %4366 = vdwg.mxu0
        %4367 = vmatpush.bf16.msra.mxu0 %v3736
        %4368 = vmatpush.bf16.msra.mxu0 %v3728
        %4369 = vmatpush.bf16.msra.mxu0 %v3720
        %4370 = vmatpush.bf16.msra.mxu0 %v3712
        %4371 = vmatpush.bf16.msra.mxu0 %v3704
        %4372 = vmatpush.bf16.msra.mxu0 %v3696
        %4373 = vmatpush.bf16.msra.mxu0 %v3688
        %4374 = vmatpush.bf16.msra.mxu0 %v3680
        %4375 = vmatmul.bf16.gmra.mxu0 %v2503
        %v4376 = vpop.f32.mrf.mxu0
        %v4377 = vadd.f32 %v4363, %v4376
        %v4378 = vpop.f32.mrf.mxu0
        %v4379 = vadd.f32 %v4365, %v4378
        %4380 = vdwg.mxu0
        %4381 = vmatpush.bf16.msra.mxu0 %v3800
        %4382 = vmatpush.bf16.msra.mxu0 %v3792
        %4383 = vmatpush.bf16.msra.mxu0 %v3784
        %4384 = vmatpush.bf16.msra.mxu0 %v3776
        %4385 = vmatpush.bf16.msra.mxu0 %v3768
        %4386 = vmatpush.bf16.msra.mxu0 %v3760
        %4387 = vmatpush.bf16.msra.mxu0 %v3752
        %4388 = vmatpush.bf16.msra.mxu0 %v3744
        %4389 = vmatmul.bf16.gmra.mxu0 %v2504
        %v4390 = vpop.f32.mrf.mxu0
        %v4391 = vadd.f32 %v4377, %v4390
        %v4392 = vpop.f32.mrf.mxu0
        %v4393 = vadd.f32 %v4379, %v4392
        %4394 = vdwg.mxu0
        %4395 = vmatpush.bf16.msra.mxu0 %v3609
        %4396 = vmatpush.bf16.msra.mxu0 %v3601
        %4397 = vmatpush.bf16.msra.mxu0 %v3593
        %4398 = vmatpush.bf16.msra.mxu0 %v3585
        %4399 = vmatpush.bf16.msra.mxu0 %v3577
        %4400 = vmatpush.bf16.msra.mxu0 %v3569
        %4401 = vmatpush.bf16.msra.mxu0 %v3561
        %4402 = vmatpush.bf16.msra.mxu0 %v3553
        %4403 = vmatmul.bf16.gmra.mxu0 %v2501
        %v4404 = vpop.f32.mrf.mxu0
        %v4405 = vadd.f32 %v2769, %v4404
        %v4406 = vpop.f32.mrf.mxu0
        %v4407 = vadd.f32 %v2769, %v4406
        %4408 = vdwg.mxu0
        %4409 = vmatpush.bf16.msra.mxu0 %v3673
        %4410 = vmatpush.bf16.msra.mxu0 %v3665
        %4411 = vmatpush.bf16.msra.mxu0 %v3657
        %4412 = vmatpush.bf16.msra.mxu0 %v3649
        %4413 = vmatpush.bf16.msra.mxu0 %v3641
        %4414 = vmatpush.bf16.msra.mxu0 %v3633
        %4415 = vmatpush.bf16.msra.mxu0 %v3625
        %4416 = vmatpush.bf16.msra.mxu0 %v3617
        %4417 = vmatmul.bf16.gmra.mxu0 %v2502
        %v4418 = vpop.f32.mrf.mxu0
        %v4419 = vadd.f32 %v4405, %v4418
        %v4420 = vpop.f32.mrf.mxu0
        %v4421 = vadd.f32 %v4407, %v4420
        %4422 = vdwg.mxu0
        %4423 = vmatpush.bf16.msra.mxu0 %v3737
        %4424 = vmatpush.bf16.msra.mxu0 %v3729
        %4425 = vmatpush.bf16.msra.mxu0 %v3721
        %4426 = vmatpush.bf16.msra.mxu0 %v3713
        %4427 = vmatpush.bf16.msra.mxu0 %v3705
        %4428 = vmatpush.bf16.msra.mxu0 %v3697
        %4429 = vmatpush.bf16.msra.mxu0 %v3689
        %4430 = vmatpush.bf16.msra.mxu0 %v3681
        %4431 = vmatmul.bf16.gmra.mxu0 %v2503
        %v4432 = vpop.f32.mrf.mxu0
        %v4433 = vadd.f32 %v4419, %v4432
        %v4434 = vpop.f32.mrf.mxu0
        %v4435 = vadd.f32 %v4421, %v4434
        %4436 = vdwg.mxu0
        %4437 = vmatpush.bf16.msra.mxu0 %v3801
        %4438 = vmatpush.bf16.msra.mxu0 %v3793
        %4439 = vmatpush.bf16.msra.mxu0 %v3785
        %4440 = vmatpush.bf16.msra.mxu0 %v3777
        %4441 = vmatpush.bf16.msra.mxu0 %v3769
        %4442 = vmatpush.bf16.msra.mxu0 %v3761
        %4443 = vmatpush.bf16.msra.mxu0 %v3753
        %4444 = vmatpush.bf16.msra.mxu0 %v3745
        %4445 = vmatmul.bf16.gmra.mxu0 %v2504
        %v4446 = vpop.f32.mrf.mxu0
        %v4447 = vadd.f32 %v4433, %v4446
        %v4448 = vpop.f32.mrf.mxu0
        %v4449 = vadd.f32 %v4435, %v4448
        %4450 = vdwg.mxu0
        %4451 = vmatpush.bf16.msra.mxu0 %v3610
        %4452 = vmatpush.bf16.msra.mxu0 %v3602
        %4453 = vmatpush.bf16.msra.mxu0 %v3594
        %4454 = vmatpush.bf16.msra.mxu0 %v3586
        %4455 = vmatpush.bf16.msra.mxu0 %v3578
        %4456 = vmatpush.bf16.msra.mxu0 %v3570
        %4457 = vmatpush.bf16.msra.mxu0 %v3562
        %4458 = vmatpush.bf16.msra.mxu0 %v3554
        %4459 = vmatmul.bf16.gmra.mxu0 %v2501
        %v4460 = vpop.f32.mrf.mxu0
        %v4461 = vadd.f32 %v2770, %v4460
        %v4462 = vpop.f32.mrf.mxu0
        %v4463 = vadd.f32 %v2770, %v4462
        %4464 = vdwg.mxu0
        %4465 = vmatpush.bf16.msra.mxu0 %v3674
        %4466 = vmatpush.bf16.msra.mxu0 %v3666
        %4467 = vmatpush.bf16.msra.mxu0 %v3658
        %4468 = vmatpush.bf16.msra.mxu0 %v3650
        %4469 = vmatpush.bf16.msra.mxu0 %v3642
        %4470 = vmatpush.bf16.msra.mxu0 %v3634
        %4471 = vmatpush.bf16.msra.mxu0 %v3626
        %4472 = vmatpush.bf16.msra.mxu0 %v3618
        %4473 = vmatmul.bf16.gmra.mxu0 %v2502
        %v4474 = vpop.f32.mrf.mxu0
        %v4475 = vadd.f32 %v4461, %v4474
        %v4476 = vpop.f32.mrf.mxu0
        %v4477 = vadd.f32 %v4463, %v4476
        %4478 = vdwg.mxu0
        %4479 = vmatpush.bf16.msra.mxu0 %v3738
        %4480 = vmatpush.bf16.msra.mxu0 %v3730
        %4481 = vmatpush.bf16.msra.mxu0 %v3722
        %4482 = vmatpush.bf16.msra.mxu0 %v3714
        %4483 = vmatpush.bf16.msra.mxu0 %v3706
        %4484 = vmatpush.bf16.msra.mxu0 %v3698
        %4485 = vmatpush.bf16.msra.mxu0 %v3690
        %4486 = vmatpush.bf16.msra.mxu0 %v3682
        %4487 = vmatmul.bf16.gmra.mxu0 %v2503
        %v4488 = vpop.f32.mrf.mxu0
        %v4489 = vadd.f32 %v4475, %v4488
        %v4490 = vpop.f32.mrf.mxu0
        %v4491 = vadd.f32 %v4477, %v4490
        %4492 = vdwg.mxu0
        %4493 = vmatpush.bf16.msra.mxu0 %v3802
        %4494 = vmatpush.bf16.msra.mxu0 %v3794
        %4495 = vmatpush.bf16.msra.mxu0 %v3786
        %4496 = vmatpush.bf16.msra.mxu0 %v3778
        %4497 = vmatpush.bf16.msra.mxu0 %v3770
        %4498 = vmatpush.bf16.msra.mxu0 %v3762
        %4499 = vmatpush.bf16.msra.mxu0 %v3754
        %4500 = vmatpush.bf16.msra.mxu0 %v3746
        %4501 = vmatmul.bf16.gmra.mxu0 %v2504
        %v4502 = vpop.f32.mrf.mxu0
        %v4503 = vadd.f32 %v4489, %v4502
        %v4504 = vpop.f32.mrf.mxu0
        %v4505 = vadd.f32 %v4491, %v4504
        %4506 = vdwg.mxu0
        %v4507 = vmax.f32 %v4111, 0.0
        %v4508 = vmax.f32 %v4167, 0.0
        %v4509 = vmax.f32 %v4223, 0.0
        %v4510 = vmax.f32 %v4279, 0.0
        %v4511 = vmax.f32 %v4335, 0.0
        %v4512 = vmax.f32 %v4391, 0.0
        %v4513 = vmax.f32 %v4447, 0.0
        %v4514 = vmax.f32 %v4503, 0.0
        %v4515 = vmax.f32 %v4113, 0.0
        %v4516 = vmax.f32 %v4169, 0.0
        %v4517 = vmax.f32 %v4225, 0.0
        %v4518 = vmax.f32 %v4281, 0.0
        %v4519 = vmax.f32 %v4337, 0.0
        %v4520 = vmax.f32 %v4393, 0.0
        %v4521 = vmax.f32 %v4449, 0.0
        %v4522 = vmax.f32 %v4505, 0.0
        %v4523 = vpack.c.bf16 %v4515, %v4507
        %v4524 = vpack.c.bf16 %v4516, %v4508
        %v4525 = vpack.c.bf16 %v4517, %v4509
        %v4526 = vpack.c.bf16 %v4518, %v4510
        %v4527 = vpack.c.bf16 %v4519, %v4511
        %v4528 = vpack.c.bf16 %v4520, %v4512
        %v4529 = vpack.c.bf16 %v4521, %v4513
        %v4530 = vpack.c.bf16 %v4522, %v4514
        %v4531 = vld [vmem:[#allocation11] sm:$0xff]
        %v4532 = vld [vmem:[#allocation11 + $0x8] sm:$0xff]
        %v4533 = vld [vmem:[#allocation11 + $0x10] sm:$0xff]
        %v4534 = vld [vmem:[#allocation11 + $0x18] sm:$0xff]
        %v4535 = vld [vmem:[#allocation11 + $0x20] sm:$0xff]
        %v4536 = vld [vmem:[#allocation11 + $0x28] sm:$0xff]
        %v4537 = vld [vmem:[#allocation11 + $0x30] sm:$0xff]
        %v4538 = vld [vmem:[#allocation11 + $0x38] sm:$0xff]
        %v4539 = vld [vmem:[#allocation11 + $0x40] sm:$0xff]
        %v4540 = vld [vmem:[#allocation11 + $0x48] sm:$0xff]
        %v4541 = vld [vmem:[#allocation11 + $0x50] sm:$0xff]
        %v4542 = vld [vmem:[#allocation11 + $0x58] sm:$0xff]
        %v4543 = vld [vmem:[#allocation11 + $0x60] sm:$0xff]
        %v4544 = vld [vmem:[#allocation11 + $0x68] sm:$0xff]
        %v4545 = vld [vmem:[#allocation11 + $0x70] sm:$0xff]
        %v4546 = vld [vmem:[#allocation11 + $0x78] sm:$0xff]
        %v4547 = vld [vmem:[#allocation11 + $0x80] sm:$0xff]
        %v4548 = vld [vmem:[#allocation11 + $0x88] sm:$0xff]
        %v4549 = vld [vmem:[#allocation11 + $0x90] sm:$0xff]
        %v4550 = vld [vmem:[#allocation11 + $0x98] sm:$0xff]
        %v4551 = vld [vmem:[#allocation11 + $0xa0] sm:$0xff]
        %v4552 = vld [vmem:[#allocation11 + $0xa8] sm:$0xff]
        %v4553 = vld [vmem:[#allocation11 + $0xb0] sm:$0xff]
        %v4554 = vld [vmem:[#allocation11 + $0xb8] sm:$0xff]
        %v4555 = vld [vmem:[#allocation11 + $0xc0] sm:$0xff]
        %v4556 = vld [vmem:[#allocation11 + $0xc8] sm:$0xff]
        %v4557 = vld [vmem:[#allocation11 + $0xd0] sm:$0xff]
        %v4558 = vld [vmem:[#allocation11 + $0xd8] sm:$0xff]
        %v4559 = vld [vmem:[#allocation11 + $0xe0] sm:$0xff]
        %v4560 = vld [vmem:[#allocation11 + $0xe8] sm:$0xff]
        %v4561 = vld [vmem:[#allocation11 + $0xf0] sm:$0xff]
        %v4562 = vld [vmem:[#allocation11 + $0xf8] sm:$0xff]
        %v4563 = vld [vmem:[#allocation11 + $0x100] sm:$0xff]
        %v4564 = vld [vmem:[#allocation11 + $0x108] sm:$0xff]
        %v4565 = vld [vmem:[#allocation11 + $0x110] sm:$0xff]
        %v4566 = vld [vmem:[#allocation11 + $0x118] sm:$0xff]
        %v4567 = vld [vmem:[#allocation11 + $0x120] sm:$0xff]
        %v4568 = vld [vmem:[#allocation11 + $0x128] sm:$0xff]
        %v4569 = vld [vmem:[#allocation11 + $0x130] sm:$0xff]
        %v4570 = vld [vmem:[#allocation11 + $0x138] sm:$0xff]
        %v4571 = vld [vmem:[#allocation11 + $0x140] sm:$0xff]
        %v4572 = vld [vmem:[#allocation11 + $0x148] sm:$0xff]
        %v4573 = vld [vmem:[#allocation11 + $0x150] sm:$0xff]
        %v4574 = vld [vmem:[#allocation11 + $0x158] sm:$0xff]
        %v4575 = vld [vmem:[#allocation11 + $0x160] sm:$0xff]
        %v4576 = vld [vmem:[#allocation11 + $0x168] sm:$0xff]
        %v4577 = vld [vmem:[#allocation11 + $0x170] sm:$0xff]
        %v4578 = vld [vmem:[#allocation11 + $0x178] sm:$0xff]
        %v4579 = vld [vmem:[#allocation11 + $0x180] sm:$0xff]
        %v4580 = vld [vmem:[#allocation11 + $0x188] sm:$0xff]
        %v4581 = vld [vmem:[#allocation11 + $0x190] sm:$0xff]
        %v4582 = vld [vmem:[#allocation11 + $0x198] sm:$0xff]
        %v4583 = vld [vmem:[#allocation11 + $0x1a0] sm:$0xff]
        %v4584 = vld [vmem:[#allocation11 + $0x1a8] sm:$0xff]
        %v4585 = vld [vmem:[#allocation11 + $0x1b0] sm:$0xff]
        %v4586 = vld [vmem:[#allocation11 + $0x1b8] sm:$0xff]
        %v4587 = vld [vmem:[#allocation11 + $0x1c0] sm:$0xff]
        %v4588 = vld [vmem:[#allocation11 + $0x1c8] sm:$0xff]
        %v4589 = vld [vmem:[#allocation11 + $0x1d0] sm:$0xff]
        %v4590 = vld [vmem:[#allocation11 + $0x1d8] sm:$0xff]
        %v4591 = vld [vmem:[#allocation11 + $0x1e0] sm:$0xff]
        %v4592 = vld [vmem:[#allocation11 + $0x1e8] sm:$0xff]
        %v4593 = vld [vmem:[#allocation11 + $0x1f0] sm:$0xff]
        %v4594 = vld [vmem:[#allocation11 + $0x1f8] sm:$0xff]
        %v4595 = vld [vmem:[#allocation11 + $0x200] sm:$0xff]
        %v4596 = vld [vmem:[#allocation11 + $0x208] sm:$0xff]
        %v4597 = vld [vmem:[#allocation11 + $0x210] sm:$0xff]
        %v4598 = vld [vmem:[#allocation11 + $0x218] sm:$0xff]
        %v4599 = vld [vmem:[#allocation11 + $0x220] sm:$0xff]
        %v4600 = vld [vmem:[#allocation11 + $0x228] sm:$0xff]
        %v4601 = vld [vmem:[#allocation11 + $0x230] sm:$0xff]
        %v4602 = vld [vmem:[#allocation11 + $0x238] sm:$0xff]
        %v4603 = vld [vmem:[#allocation11 + $0x240] sm:$0xff]
        %v4604 = vld [vmem:[#allocation11 + $0x248] sm:$0xff]
        %v4605 = vld [vmem:[#allocation11 + $0x250] sm:$0xff]
        %v4606 = vld [vmem:[#allocation11 + $0x258] sm:$0xff]
        %v4607 = vld [vmem:[#allocation11 + $0x260] sm:$0xff]
        %v4608 = vld [vmem:[#allocation11 + $0x268] sm:$0xff]
        %v4609 = vld [vmem:[#allocation11 + $0x270] sm:$0xff]
        %v4610 = vld [vmem:[#allocation11 + $0x278] sm:$0xff]
        %v4611 = vld [vmem:[#allocation11 + $0x280] sm:$0xff]
        %v4612 = vld [vmem:[#allocation11 + $0x288] sm:$0xff]
        %v4613 = vld [vmem:[#allocation11 + $0x290] sm:$0xff]
        %v4614 = vld [vmem:[#allocation11 + $0x298] sm:$0xff]
        %v4615 = vld [vmem:[#allocation11 + $0x2a0] sm:$0xff]
        %v4616 = vld [vmem:[#allocation11 + $0x2a8] sm:$0xff]
        %v4617 = vld [vmem:[#allocation11 + $0x2b0] sm:$0xff]
        %v4618 = vld [vmem:[#allocation11 + $0x2b8] sm:$0xff]
        %v4619 = vld [vmem:[#allocation11 + $0x2c0] sm:$0xff]
        %v4620 = vld [vmem:[#allocation11 + $0x2c8] sm:$0xff]
        %v4621 = vld [vmem:[#allocation11 + $0x2d0] sm:$0xff]
        %v4622 = vld [vmem:[#allocation11 + $0x2d8] sm:$0xff]
        %v4623 = vld [vmem:[#allocation11 + $0x2e0] sm:$0xff]
        %v4624 = vld [vmem:[#allocation11 + $0x2e8] sm:$0xff]
        %v4625 = vld [vmem:[#allocation11 + $0x2f0] sm:$0xff]
        %v4626 = vld [vmem:[#allocation11 + $0x2f8] sm:$0xff]
        %v4627 = vld [vmem:[#allocation11 + $0x300] sm:$0xff]
        %v4628 = vld [vmem:[#allocation11 + $0x308] sm:$0xff]
        %v4629 = vld [vmem:[#allocation11 + $0x310] sm:$0xff]
        %v4630 = vld [vmem:[#allocation11 + $0x318] sm:$0xff]
        %v4631 = vld [vmem:[#allocation11 + $0x320] sm:$0xff]
        %v4632 = vld [vmem:[#allocation11 + $0x328] sm:$0xff]
        %v4633 = vld [vmem:[#allocation11 + $0x330] sm:$0xff]
        %v4634 = vld [vmem:[#allocation11 + $0x338] sm:$0xff]
        %v4635 = vld [vmem:[#allocation11 + $0x340] sm:$0xff]
        %v4636 = vld [vmem:[#allocation11 + $0x348] sm:$0xff]
        %v4637 = vld [vmem:[#allocation11 + $0x350] sm:$0xff]
        %v4638 = vld [vmem:[#allocation11 + $0x358] sm:$0xff]
        %v4639 = vld [vmem:[#allocation11 + $0x360] sm:$0xff]
        %v4640 = vld [vmem:[#allocation11 + $0x368] sm:$0xff]
        %v4641 = vld [vmem:[#allocation11 + $0x370] sm:$0xff]
        %v4642 = vld [vmem:[#allocation11 + $0x378] sm:$0xff]
        %v4643 = vld [vmem:[#allocation11 + $0x380] sm:$0xff]
        %v4644 = vld [vmem:[#allocation11 + $0x388] sm:$0xff]
        %v4645 = vld [vmem:[#allocation11 + $0x390] sm:$0xff]
        %v4646 = vld [vmem:[#allocation11 + $0x398] sm:$0xff]
        %v4647 = vld [vmem:[#allocation11 + $0x3a0] sm:$0xff]
        %v4648 = vld [vmem:[#allocation11 + $0x3a8] sm:$0xff]
        %v4649 = vld [vmem:[#allocation11 + $0x3b0] sm:$0xff]
        %v4650 = vld [vmem:[#allocation11 + $0x3b8] sm:$0xff]
        %v4651 = vld [vmem:[#allocation11 + $0x3c0] sm:$0xff]
        %v4652 = vld [vmem:[#allocation11 + $0x3c8] sm:$0xff]
        %v4653 = vld [vmem:[#allocation11 + $0x3d0] sm:$0xff]
        %v4654 = vld [vmem:[#allocation11 + $0x3d8] sm:$0xff]
        %v4655 = vld [vmem:[#allocation11 + $0x3e0] sm:$0xff]
        %v4656 = vld [vmem:[#allocation11 + $0x3e8] sm:$0xff]
        %v4657 = vld [vmem:[#allocation11 + $0x3f0] sm:$0xff]
        %v4658 = vld [vmem:[#allocation11 + $0x3f8] sm:$0xff]
        %v4659 = vld [vmem:[#allocation11 + $0x400] sm:$0xff]
        %v4660 = vld [vmem:[#allocation11 + $0x408] sm:$0xff]
        %v4661 = vld [vmem:[#allocation11 + $0x410] sm:$0xff]
        %v4662 = vld [vmem:[#allocation11 + $0x418] sm:$0xff]
        %v4663 = vld [vmem:[#allocation11 + $0x420] sm:$0xff]
        %v4664 = vld [vmem:[#allocation11 + $0x428] sm:$0xff]
        %v4665 = vld [vmem:[#allocation11 + $0x430] sm:$0xff]
        %v4666 = vld [vmem:[#allocation11 + $0x438] sm:$0xff]
        %v4667 = vld [vmem:[#allocation11 + $0x440] sm:$0xff]
        %v4668 = vld [vmem:[#allocation11 + $0x448] sm:$0xff]
        %v4669 = vld [vmem:[#allocation11 + $0x450] sm:$0xff]
        %v4670 = vld [vmem:[#allocation11 + $0x458] sm:$0xff]
        %v4671 = vld [vmem:[#allocation11 + $0x460] sm:$0xff]
        %v4672 = vld [vmem:[#allocation11 + $0x468] sm:$0xff]
        %v4673 = vld [vmem:[#allocation11 + $0x470] sm:$0xff]
        %v4674 = vld [vmem:[#allocation11 + $0x478] sm:$0xff]
        %v4675 = vld [vmem:[#allocation11 + $0x480] sm:$0xff]
        %v4676 = vld [vmem:[#allocation11 + $0x488] sm:$0xff]
        %v4677 = vld [vmem:[#allocation11 + $0x490] sm:$0xff]
        %v4678 = vld [vmem:[#allocation11 + $0x498] sm:$0xff]
        %v4679 = vld [vmem:[#allocation11 + $0x4a0] sm:$0xff]
        %v4680 = vld [vmem:[#allocation11 + $0x4a8] sm:$0xff]
        %v4681 = vld [vmem:[#allocation11 + $0x4b0] sm:$0xff]
        %v4682 = vld [vmem:[#allocation11 + $0x4b8] sm:$0xff]
        %v4683 = vld [vmem:[#allocation11 + $0x4c0] sm:$0xff]
        %v4684 = vld [vmem:[#allocation11 + $0x4c8] sm:$0xff]
        %v4685 = vld [vmem:[#allocation11 + $0x4d0] sm:$0xff]
        %v4686 = vld [vmem:[#allocation11 + $0x4d8] sm:$0xff]
        %v4687 = vld [vmem:[#allocation11 + $0x4e0] sm:$0xff]
        %v4688 = vld [vmem:[#allocation11 + $0x4e8] sm:$0xff]
        %v4689 = vld [vmem:[#allocation11 + $0x4f0] sm:$0xff]
        %v4690 = vld [vmem:[#allocation11 + $0x4f8] sm:$0xff]
        %v4691 = vld [vmem:[#allocation11 + $0x500] sm:$0xff]
        %v4692 = vld [vmem:[#allocation11 + $0x508] sm:$0xff]
        %v4693 = vld [vmem:[#allocation11 + $0x510] sm:$0xff]
        %v4694 = vld [vmem:[#allocation11 + $0x518] sm:$0xff]
        %v4695 = vld [vmem:[#allocation11 + $0x520] sm:$0xff]
        %v4696 = vld [vmem:[#allocation11 + $0x528] sm:$0xff]
        %v4697 = vld [vmem:[#allocation11 + $0x530] sm:$0xff]
        %v4698 = vld [vmem:[#allocation11 + $0x538] sm:$0xff]
        %v4699 = vld [vmem:[#allocation11 + $0x540] sm:$0xff]
        %v4700 = vld [vmem:[#allocation11 + $0x548] sm:$0xff]
        %v4701 = vld [vmem:[#allocation11 + $0x550] sm:$0xff]
        %v4702 = vld [vmem:[#allocation11 + $0x558] sm:$0xff]
        %v4703 = vld [vmem:[#allocation11 + $0x560] sm:$0xff]
        %v4704 = vld [vmem:[#allocation11 + $0x568] sm:$0xff]
        %v4705 = vld [vmem:[#allocation11 + $0x570] sm:$0xff]
        %v4706 = vld [vmem:[#allocation11 + $0x578] sm:$0xff]
        %v4707 = vld [vmem:[#allocation11 + $0x580] sm:$0xff]
        %v4708 = vld [vmem:[#allocation11 + $0x588] sm:$0xff]
        %v4709 = vld [vmem:[#allocation11 + $0x590] sm:$0xff]
        %v4710 = vld [vmem:[#allocation11 + $0x598] sm:$0xff]
        %v4711 = vld [vmem:[#allocation11 + $0x5a0] sm:$0xff]
        %v4712 = vld [vmem:[#allocation11 + $0x5a8] sm:$0xff]
        %v4713 = vld [vmem:[#allocation11 + $0x5b0] sm:$0xff]
        %v4714 = vld [vmem:[#allocation11 + $0x5b8] sm:$0xff]
        %v4715 = vld [vmem:[#allocation11 + $0x5c0] sm:$0xff]
        %v4716 = vld [vmem:[#allocation11 + $0x5c8] sm:$0xff]
        %v4717 = vld [vmem:[#allocation11 + $0x5d0] sm:$0xff]
        %v4718 = vld [vmem:[#allocation11 + $0x5d8] sm:$0xff]
        %v4719 = vld [vmem:[#allocation11 + $0x5e0] sm:$0xff]
        %v4720 = vld [vmem:[#allocation11 + $0x5e8] sm:$0xff]
        %v4721 = vld [vmem:[#allocation11 + $0x5f0] sm:$0xff]
        %v4722 = vld [vmem:[#allocation11 + $0x5f8] sm:$0xff]
        %v4723 = vld [vmem:[#allocation11 + $0x600] sm:$0xff]
        %v4724 = vld [vmem:[#allocation11 + $0x608] sm:$0xff]
        %v4725 = vld [vmem:[#allocation11 + $0x610] sm:$0xff]
        %v4726 = vld [vmem:[#allocation11 + $0x618] sm:$0xff]
        %v4727 = vld [vmem:[#allocation11 + $0x620] sm:$0xff]
        %v4728 = vld [vmem:[#allocation11 + $0x628] sm:$0xff]
        %v4729 = vld [vmem:[#allocation11 + $0x630] sm:$0xff]
        %v4730 = vld [vmem:[#allocation11 + $0x638] sm:$0xff]
        %v4731 = vld [vmem:[#allocation11 + $0x640] sm:$0xff]
        %v4732 = vld [vmem:[#allocation11 + $0x648] sm:$0xff]
        %v4733 = vld [vmem:[#allocation11 + $0x650] sm:$0xff]
        %v4734 = vld [vmem:[#allocation11 + $0x658] sm:$0xff]
        %v4735 = vld [vmem:[#allocation11 + $0x660] sm:$0xff]
        %v4736 = vld [vmem:[#allocation11 + $0x668] sm:$0xff]
        %v4737 = vld [vmem:[#allocation11 + $0x670] sm:$0xff]
        %v4738 = vld [vmem:[#allocation11 + $0x678] sm:$0xff]
        %v4739 = vld [vmem:[#allocation11 + $0x680] sm:$0xff]
        %v4740 = vld [vmem:[#allocation11 + $0x688] sm:$0xff]
        %v4741 = vld [vmem:[#allocation11 + $0x690] sm:$0xff]
        %v4742 = vld [vmem:[#allocation11 + $0x698] sm:$0xff]
        %v4743 = vld [vmem:[#allocation11 + $0x6a0] sm:$0xff]
        %v4744 = vld [vmem:[#allocation11 + $0x6a8] sm:$0xff]
        %v4745 = vld [vmem:[#allocation11 + $0x6b0] sm:$0xff]
        %v4746 = vld [vmem:[#allocation11 + $0x6b8] sm:$0xff]
        %v4747 = vld [vmem:[#allocation11 + $0x6c0] sm:$0xff]
        %v4748 = vld [vmem:[#allocation11 + $0x6c8] sm:$0xff]
        %v4749 = vld [vmem:[#allocation11 + $0x6d0] sm:$0xff]
        %v4750 = vld [vmem:[#allocation11 + $0x6d8] sm:$0xff]
        %v4751 = vld [vmem:[#allocation11 + $0x6e0] sm:$0xff]
        %v4752 = vld [vmem:[#allocation11 + $0x6e8] sm:$0xff]
        %v4753 = vld [vmem:[#allocation11 + $0x6f0] sm:$0xff]
        %v4754 = vld [vmem:[#allocation11 + $0x6f8] sm:$0xff]
        %v4755 = vld [vmem:[#allocation11 + $0x700] sm:$0xff]
        %v4756 = vld [vmem:[#allocation11 + $0x708] sm:$0xff]
        %v4757 = vld [vmem:[#allocation11 + $0x710] sm:$0xff]
        %v4758 = vld [vmem:[#allocation11 + $0x718] sm:$0xff]
        %v4759 = vld [vmem:[#allocation11 + $0x720] sm:$0xff]
        %v4760 = vld [vmem:[#allocation11 + $0x728] sm:$0xff]
        %v4761 = vld [vmem:[#allocation11 + $0x730] sm:$0xff]
        %v4762 = vld [vmem:[#allocation11 + $0x738] sm:$0xff]
        %v4763 = vld [vmem:[#allocation11 + $0x740] sm:$0xff]
        %v4764 = vld [vmem:[#allocation11 + $0x748] sm:$0xff]
        %v4765 = vld [vmem:[#allocation11 + $0x750] sm:$0xff]
        %v4766 = vld [vmem:[#allocation11 + $0x758] sm:$0xff]
        %v4767 = vld [vmem:[#allocation11 + $0x760] sm:$0xff]
        %v4768 = vld [vmem:[#allocation11 + $0x768] sm:$0xff]
        %v4769 = vld [vmem:[#allocation11 + $0x770] sm:$0xff]
        %v4770 = vld [vmem:[#allocation11 + $0x778] sm:$0xff]
        %v4771 = vld [vmem:[#allocation11 + $0x780] sm:$0xff]
        %v4772 = vld [vmem:[#allocation11 + $0x788] sm:$0xff]
        %v4773 = vld [vmem:[#allocation11 + $0x790] sm:$0xff]
        %v4774 = vld [vmem:[#allocation11 + $0x798] sm:$0xff]
        %v4775 = vld [vmem:[#allocation11 + $0x7a0] sm:$0xff]
        %v4776 = vld [vmem:[#allocation11 + $0x7a8] sm:$0xff]
        %v4777 = vld [vmem:[#allocation11 + $0x7b0] sm:$0xff]
        %v4778 = vld [vmem:[#allocation11 + $0x7b8] sm:$0xff]
        %v4779 = vld [vmem:[#allocation11 + $0x7c0] sm:$0xff]
        %v4780 = vld [vmem:[#allocation11 + $0x7c8] sm:$0xff]
        %v4781 = vld [vmem:[#allocation11 + $0x7d0] sm:$0xff]
        %v4782 = vld [vmem:[#allocation11 + $0x7d8] sm:$0xff]
        %v4783 = vld [vmem:[#allocation11 + $0x7e0] sm:$0xff]
        %v4784 = vld [vmem:[#allocation11 + $0x7e8] sm:$0xff]
        %v4785 = vld [vmem:[#allocation11 + $0x7f0] sm:$0xff]
        %v4786 = vld [vmem:[#allocation11 + $0x7f8] sm:$0xff]
        %v4787 = vld [vmem:[%s6] sm:$0xf]
        %v4789 = vperm.slane %v4787, 0
        %v4790 = vperm.slane %v4787, 1
        %v4791 = vperm.slane %v4787, 2
        %v4792 = vperm.slane %v4787, 3
        %v5053 = vunpack.c.l.b16 %v4531
        %v5054 = vunpack.c.h.b16 %v4531
        %v5055 = vunpack.c.l.b16 %v4532
        %v5056 = vunpack.c.h.b16 %v4532
        %v5057 = vunpack.c.l.b16 %v4533
        %v5058 = vunpack.c.h.b16 %v4533
        %v5059 = vunpack.c.l.b16 %v4534
        %v5060 = vunpack.c.h.b16 %v4534
        %v5061 = vunpack.c.l.b16 %v4535
        %v5062 = vunpack.c.h.b16 %v4535
        %v5063 = vunpack.c.l.b16 %v4536
        %v5064 = vunpack.c.h.b16 %v4536
        %v5065 = vunpack.c.l.b16 %v4537
        %v5066 = vunpack.c.h.b16 %v4537
        %v5067 = vunpack.c.l.b16 %v4538
        %v5068 = vunpack.c.h.b16 %v4538
        %v5069 = vunpack.c.l.b16 %v4539
        %v5070 = vunpack.c.h.b16 %v4539
        %v5071 = vunpack.c.l.b16 %v4540
        %v5072 = vunpack.c.h.b16 %v4540
        %v5073 = vunpack.c.l.b16 %v4541
        %v5074 = vunpack.c.h.b16 %v4541
        %v5075 = vunpack.c.l.b16 %v4542
        %v5076 = vunpack.c.h.b16 %v4542
        %v5077 = vunpack.c.l.b16 %v4543
        %v5078 = vunpack.c.h.b16 %v4543
        %v5079 = vunpack.c.l.b16 %v4544
        %v5080 = vunpack.c.h.b16 %v4544
        %v5081 = vunpack.c.l.b16 %v4545
        %v5082 = vunpack.c.h.b16 %v4545
        %v5083 = vunpack.c.l.b16 %v4546
        %v5084 = vunpack.c.h.b16 %v4546
        %v5085 = vunpack.c.l.b16 %v4547
        %v5086 = vunpack.c.h.b16 %v4547
        %v5087 = vunpack.c.l.b16 %v4548
        %v5088 = vunpack.c.h.b16 %v4548
        %v5089 = vunpack.c.l.b16 %v4549
        %v5090 = vunpack.c.h.b16 %v4549
        %v5091 = vunpack.c.l.b16 %v4550
        %v5092 = vunpack.c.h.b16 %v4550
        %v5093 = vunpack.c.l.b16 %v4551
        %v5094 = vunpack.c.h.b16 %v4551
        %v5095 = vunpack.c.l.b16 %v4552
        %v5096 = vunpack.c.h.b16 %v4552
        %v5097 = vunpack.c.l.b16 %v4553
        %v5098 = vunpack.c.h.b16 %v4553
        %v5099 = vunpack.c.l.b16 %v4554
        %v5100 = vunpack.c.h.b16 %v4554
        %v5101 = vunpack.c.l.b16 %v4555
        %v5102 = vunpack.c.h.b16 %v4555
        %v5103 = vunpack.c.l.b16 %v4556
        %v5104 = vunpack.c.h.b16 %v4556
        %v5105 = vunpack.c.l.b16 %v4557
        %v5106 = vunpack.c.h.b16 %v4557
        %v5107 = vunpack.c.l.b16 %v4558
        %v5108 = vunpack.c.h.b16 %v4558
        %v5109 = vunpack.c.l.b16 %v4559
        %v5110 = vunpack.c.h.b16 %v4559
        %v5111 = vunpack.c.l.b16 %v4560
        %v5112 = vunpack.c.h.b16 %v4560
        %v5113 = vunpack.c.l.b16 %v4561
        %v5114 = vunpack.c.h.b16 %v4561
        %v5115 = vunpack.c.l.b16 %v4562
        %v5116 = vunpack.c.h.b16 %v4562
        %v5117 = vunpack.c.l.b16 %v4563
        %v5118 = vunpack.c.h.b16 %v4563
        %v5119 = vunpack.c.l.b16 %v4564
        %v5120 = vunpack.c.h.b16 %v4564
        %v5121 = vunpack.c.l.b16 %v4565
        %v5122 = vunpack.c.h.b16 %v4565
        %v5123 = vunpack.c.l.b16 %v4566
        %v5124 = vunpack.c.h.b16 %v4566
        %v5125 = vunpack.c.l.b16 %v4567
        %v5126 = vunpack.c.h.b16 %v4567
        %v5127 = vunpack.c.l.b16 %v4568
        %v5128 = vunpack.c.h.b16 %v4568
        %v5129 = vunpack.c.l.b16 %v4569
        %v5130 = vunpack.c.h.b16 %v4569
        %v5131 = vunpack.c.l.b16 %v4570
        %v5132 = vunpack.c.h.b16 %v4570
        %v5133 = vunpack.c.l.b16 %v4571
        %v5134 = vunpack.c.h.b16 %v4571
        %v5135 = vunpack.c.l.b16 %v4572
        %v5136 = vunpack.c.h.b16 %v4572
        %v5137 = vunpack.c.l.b16 %v4573
        %v5138 = vunpack.c.h.b16 %v4573
        %v5139 = vunpack.c.l.b16 %v4574
        %v5140 = vunpack.c.h.b16 %v4574
        %v5141 = vunpack.c.l.b16 %v4575
        %v5142 = vunpack.c.h.b16 %v4575
        %v5143 = vunpack.c.l.b16 %v4576
        %v5144 = vunpack.c.h.b16 %v4576
        %v5145 = vunpack.c.l.b16 %v4577
        %v5146 = vunpack.c.h.b16 %v4577
        %v5147 = vunpack.c.l.b16 %v4578
        %v5148 = vunpack.c.h.b16 %v4578
        %v5149 = vunpack.c.l.b16 %v4579
        %v5150 = vunpack.c.h.b16 %v4579
        %v5151 = vunpack.c.l.b16 %v4580
        %v5152 = vunpack.c.h.b16 %v4580
        %v5153 = vunpack.c.l.b16 %v4581
        %v5154 = vunpack.c.h.b16 %v4581
        %v5155 = vunpack.c.l.b16 %v4582
        %v5156 = vunpack.c.h.b16 %v4582
        %v5157 = vunpack.c.l.b16 %v4583
        %v5158 = vunpack.c.h.b16 %v4583
        %v5159 = vunpack.c.l.b16 %v4584
        %v5160 = vunpack.c.h.b16 %v4584
        %v5161 = vunpack.c.l.b16 %v4585
        %v5162 = vunpack.c.h.b16 %v4585
        %v5163 = vunpack.c.l.b16 %v4586
        %v5164 = vunpack.c.h.b16 %v4586
        %v5165 = vunpack.c.l.b16 %v4587
        %v5166 = vunpack.c.h.b16 %v4587
        %v5167 = vunpack.c.l.b16 %v4588
        %v5168 = vunpack.c.h.b16 %v4588
        %v5169 = vunpack.c.l.b16 %v4589
        %v5170 = vunpack.c.h.b16 %v4589
        %v5171 = vunpack.c.l.b16 %v4590
        %v5172 = vunpack.c.h.b16 %v4590
        %v5173 = vunpack.c.l.b16 %v4591
        %v5174 = vunpack.c.h.b16 %v4591
        %v5175 = vunpack.c.l.b16 %v4592
        %v5176 = vunpack.c.h.b16 %v4592
        %v5177 = vunpack.c.l.b16 %v4593
        %v5178 = vunpack.c.h.b16 %v4593
        %v5179 = vunpack.c.l.b16 %v4594
        %v5180 = vunpack.c.h.b16 %v4594
        %v5181 = vunpack.c.l.b16 %v4595
        %v5182 = vunpack.c.h.b16 %v4595
        %v5183 = vunpack.c.l.b16 %v4596
        %v5184 = vunpack.c.h.b16 %v4596
        %v5185 = vunpack.c.l.b16 %v4597
        %v5186 = vunpack.c.h.b16 %v4597
        %v5187 = vunpack.c.l.b16 %v4598
        %v5188 = vunpack.c.h.b16 %v4598
        %v5189 = vunpack.c.l.b16 %v4599
        %v5190 = vunpack.c.h.b16 %v4599
        %v5191 = vunpack.c.l.b16 %v4600
        %v5192 = vunpack.c.h.b16 %v4600
        %v5193 = vunpack.c.l.b16 %v4601
        %v5194 = vunpack.c.h.b16 %v4601
        %v5195 = vunpack.c.l.b16 %v4602
        %v5196 = vunpack.c.h.b16 %v4602
        %v5197 = vunpack.c.l.b16 %v4603
        %v5198 = vunpack.c.h.b16 %v4603
        %v5199 = vunpack.c.l.b16 %v4604
        %v5200 = vunpack.c.h.b16 %v4604
        %v5201 = vunpack.c.l.b16 %v4605
        %v5202 = vunpack.c.h.b16 %v4605
        %v5203 = vunpack.c.l.b16 %v4606
        %v5204 = vunpack.c.h.b16 %v4606
        %v5205 = vunpack.c.l.b16 %v4607
        %v5206 = vunpack.c.h.b16 %v4607
        %v5207 = vunpack.c.l.b16 %v4608
        %v5208 = vunpack.c.h.b16 %v4608
        %v5209 = vunpack.c.l.b16 %v4609
        %v5210 = vunpack.c.h.b16 %v4609
        %v5211 = vunpack.c.l.b16 %v4610
        %v5212 = vunpack.c.h.b16 %v4610
        %v5213 = vunpack.c.l.b16 %v4611
        %v5214 = vunpack.c.h.b16 %v4611
        %v5215 = vunpack.c.l.b16 %v4612
        %v5216 = vunpack.c.h.b16 %v4612
        %v5217 = vunpack.c.l.b16 %v4613
        %v5218 = vunpack.c.h.b16 %v4613
        %v5219 = vunpack.c.l.b16 %v4614
        %v5220 = vunpack.c.h.b16 %v4614
        %v5221 = vunpack.c.l.b16 %v4615
        %v5222 = vunpack.c.h.b16 %v4615
        %v5223 = vunpack.c.l.b16 %v4616
        %v5224 = vunpack.c.h.b16 %v4616
        %v5225 = vunpack.c.l.b16 %v4617
        %v5226 = vunpack.c.h.b16 %v4617
        %v5227 = vunpack.c.l.b16 %v4618
        %v5228 = vunpack.c.h.b16 %v4618
        %v5229 = vunpack.c.l.b16 %v4619
        %v5230 = vunpack.c.h.b16 %v4619
        %v5231 = vunpack.c.l.b16 %v4620
        %v5232 = vunpack.c.h.b16 %v4620
        %v5233 = vunpack.c.l.b16 %v4621
        %v5234 = vunpack.c.h.b16 %v4621
        %v5235 = vunpack.c.l.b16 %v4622
        %v5236 = vunpack.c.h.b16 %v4622
        %v5237 = vunpack.c.l.b16 %v4623
        %v5238 = vunpack.c.h.b16 %v4623
        %v5239 = vunpack.c.l.b16 %v4624
        %v5240 = vunpack.c.h.b16 %v4624
        %v5241 = vunpack.c.l.b16 %v4625
        %v5242 = vunpack.c.h.b16 %v4625
        %v5243 = vunpack.c.l.b16 %v4626
        %v5244 = vunpack.c.h.b16 %v4626
        %v5245 = vunpack.c.l.b16 %v4627
        %v5246 = vunpack.c.h.b16 %v4627
        %v5247 = vunpack.c.l.b16 %v4628
        %v5248 = vunpack.c.h.b16 %v4628
        %v5249 = vunpack.c.l.b16 %v4629
        %v5250 = vunpack.c.h.b16 %v4629
        %v5251 = vunpack.c.l.b16 %v4630
        %v5252 = vunpack.c.h.b16 %v4630
        %v5253 = vunpack.c.l.b16 %v4631
        %v5254 = vunpack.c.h.b16 %v4631
        %v5255 = vunpack.c.l.b16 %v4632
        %v5256 = vunpack.c.h.b16 %v4632
        %v5257 = vunpack.c.l.b16 %v4633
        %v5258 = vunpack.c.h.b16 %v4633
        %v5259 = vunpack.c.l.b16 %v4634
        %v5260 = vunpack.c.h.b16 %v4634
        %v5261 = vunpack.c.l.b16 %v4635
        %v5262 = vunpack.c.h.b16 %v4635
        %v5263 = vunpack.c.l.b16 %v4636
        %v5264 = vunpack.c.h.b16 %v4636
        %v5265 = vunpack.c.l.b16 %v4637
        %v5266 = vunpack.c.h.b16 %v4637
        %v5267 = vunpack.c.l.b16 %v4638
        %v5268 = vunpack.c.h.b16 %v4638
        %v5269 = vunpack.c.l.b16 %v4639
        %v5270 = vunpack.c.h.b16 %v4639
        %v5271 = vunpack.c.l.b16 %v4640
        %v5272 = vunpack.c.h.b16 %v4640
        %v5273 = vunpack.c.l.b16 %v4641
        %v5274 = vunpack.c.h.b16 %v4641
        %v5275 = vunpack.c.l.b16 %v4642
        %v5276 = vunpack.c.h.b16 %v4642
        %v5277 = vunpack.c.l.b16 %v4643
        %v5278 = vunpack.c.h.b16 %v4643
        %v5279 = vunpack.c.l.b16 %v4644
        %v5280 = vunpack.c.h.b16 %v4644
        %v5281 = vunpack.c.l.b16 %v4645
        %v5282 = vunpack.c.h.b16 %v4645
        %v5283 = vunpack.c.l.b16 %v4646
        %v5284 = vunpack.c.h.b16 %v4646
        %v5285 = vunpack.c.l.b16 %v4647
        %v5286 = vunpack.c.h.b16 %v4647
        %v5287 = vunpack.c.l.b16 %v4648
        %v5288 = vunpack.c.h.b16 %v4648
        %v5289 = vunpack.c.l.b16 %v4649
        %v5290 = vunpack.c.h.b16 %v4649
        %v5291 = vunpack.c.l.b16 %v4650
        %v5292 = vunpack.c.h.b16 %v4650
        %v5293 = vunpack.c.l.b16 %v4651
        %v5294 = vunpack.c.h.b16 %v4651
        %v5295 = vunpack.c.l.b16 %v4652
        %v5296 = vunpack.c.h.b16 %v4652
        %v5297 = vunpack.c.l.b16 %v4653
        %v5298 = vunpack.c.h.b16 %v4653
        %v5299 = vunpack.c.l.b16 %v4654
        %v5300 = vunpack.c.h.b16 %v4654
        %v5301 = vunpack.c.l.b16 %v4655
        %v5302 = vunpack.c.h.b16 %v4655
        %v5303 = vunpack.c.l.b16 %v4656
        %v5304 = vunpack.c.h.b16 %v4656
        %v5305 = vunpack.c.l.b16 %v4657
        %v5306 = vunpack.c.h.b16 %v4657
        %v5307 = vunpack.c.l.b16 %v4658
        %v5308 = vunpack.c.h.b16 %v4658
        %v5309 = vunpack.c.l.b16 %v4659
        %v5310 = vunpack.c.h.b16 %v4659
        %v5311 = vunpack.c.l.b16 %v4660
        %v5312 = vunpack.c.h.b16 %v4660
        %v5313 = vunpack.c.l.b16 %v4661
        %v5314 = vunpack.c.h.b16 %v4661
        %v5315 = vunpack.c.l.b16 %v4662
        %v5316 = vunpack.c.h.b16 %v4662
        %v5317 = vunpack.c.l.b16 %v4663
        %v5318 = vunpack.c.h.b16 %v4663
        %v5319 = vunpack.c.l.b16 %v4664
        %v5320 = vunpack.c.h.b16 %v4664
        %v5321 = vunpack.c.l.b16 %v4665
        %v5322 = vunpack.c.h.b16 %v4665
        %v5323 = vunpack.c.l.b16 %v4666
        %v5324 = vunpack.c.h.b16 %v4666
        %v5325 = vunpack.c.l.b16 %v4667
        %v5326 = vunpack.c.h.b16 %v4667
        %v5327 = vunpack.c.l.b16 %v4668
        %v5328 = vunpack.c.h.b16 %v4668
        %v5329 = vunpack.c.l.b16 %v4669
        %v5330 = vunpack.c.h.b16 %v4669
        %v5331 = vunpack.c.l.b16 %v4670
        %v5332 = vunpack.c.h.b16 %v4670
        %v5333 = vunpack.c.l.b16 %v4671
        %v5334 = vunpack.c.h.b16 %v4671
        %v5335 = vunpack.c.l.b16 %v4672
        %v5336 = vunpack.c.h.b16 %v4672
        %v5337 = vunpack.c.l.b16 %v4673
        %v5338 = vunpack.c.h.b16 %v4673
        %v5339 = vunpack.c.l.b16 %v4674
        %v5340 = vunpack.c.h.b16 %v4674
        %v5341 = vunpack.c.l.b16 %v4675
        %v5342 = vunpack.c.h.b16 %v4675
        %v5343 = vunpack.c.l.b16 %v4676
        %v5344 = vunpack.c.h.b16 %v4676
        %v5345 = vunpack.c.l.b16 %v4677
        %v5346 = vunpack.c.h.b16 %v4677
        %v5347 = vunpack.c.l.b16 %v4678
        %v5348 = vunpack.c.h.b16 %v4678
        %v5349 = vunpack.c.l.b16 %v4679
        %v5350 = vunpack.c.h.b16 %v4679
        %v5351 = vunpack.c.l.b16 %v4680
        %v5352 = vunpack.c.h.b16 %v4680
        %v5353 = vunpack.c.l.b16 %v4681
        %v5354 = vunpack.c.h.b16 %v4681
        %v5355 = vunpack.c.l.b16 %v4682
        %v5356 = vunpack.c.h.b16 %v4682
        %v5357 = vunpack.c.l.b16 %v4683
        %v5358 = vunpack.c.h.b16 %v4683
        %v5359 = vunpack.c.l.b16 %v4684
        %v5360 = vunpack.c.h.b16 %v4684
        %v5361 = vunpack.c.l.b16 %v4685
        %v5362 = vunpack.c.h.b16 %v4685
        %v5363 = vunpack.c.l.b16 %v4686
        %v5364 = vunpack.c.h.b16 %v4686
        %v5365 = vunpack.c.l.b16 %v4687
        %v5366 = vunpack.c.h.b16 %v4687
        %v5367 = vunpack.c.l.b16 %v4688
        %v5368 = vunpack.c.h.b16 %v4688
        %v5369 = vunpack.c.l.b16 %v4689
        %v5370 = vunpack.c.h.b16 %v4689
        %v5371 = vunpack.c.l.b16 %v4690
        %v5372 = vunpack.c.h.b16 %v4690
        %v5373 = vunpack.c.l.b16 %v4691
        %v5374 = vunpack.c.h.b16 %v4691
        %v5375 = vunpack.c.l.b16 %v4692
        %v5376 = vunpack.c.h.b16 %v4692
        %v5377 = vunpack.c.l.b16 %v4693
        %v5378 = vunpack.c.h.b16 %v4693
        %v5379 = vunpack.c.l.b16 %v4694
        %v5380 = vunpack.c.h.b16 %v4694
        %v5381 = vunpack.c.l.b16 %v4695
        %v5382 = vunpack.c.h.b16 %v4695
        %v5383 = vunpack.c.l.b16 %v4696
        %v5384 = vunpack.c.h.b16 %v4696
        %v5385 = vunpack.c.l.b16 %v4697
        %v5386 = vunpack.c.h.b16 %v4697
        %v5387 = vunpack.c.l.b16 %v4698
        %v5388 = vunpack.c.h.b16 %v4698
        %v5389 = vunpack.c.l.b16 %v4699
        %v5390 = vunpack.c.h.b16 %v4699
        %v5391 = vunpack.c.l.b16 %v4700
        %v5392 = vunpack.c.h.b16 %v4700
        %v5393 = vunpack.c.l.b16 %v4701
        %v5394 = vunpack.c.h.b16 %v4701
        %v5395 = vunpack.c.l.b16 %v4702
        %v5396 = vunpack.c.h.b16 %v4702
        %v5397 = vunpack.c.l.b16 %v4703
        %v5398 = vunpack.c.h.b16 %v4703
        %v5399 = vunpack.c.l.b16 %v4704
        %v5400 = vunpack.c.h.b16 %v4704
        %v5401 = vunpack.c.l.b16 %v4705
        %v5402 = vunpack.c.h.b16 %v4705
        %v5403 = vunpack.c.l.b16 %v4706
        %v5404 = vunpack.c.h.b16 %v4706
        %v5405 = vunpack.c.l.b16 %v4707
        %v5406 = vunpack.c.h.b16 %v4707
        %v5407 = vunpack.c.l.b16 %v4708
        %v5408 = vunpack.c.h.b16 %v4708
        %v5409 = vunpack.c.l.b16 %v4709
        %v5410 = vunpack.c.h.b16 %v4709
        %v5411 = vunpack.c.l.b16 %v4710
        %v5412 = vunpack.c.h.b16 %v4710
        %v5413 = vunpack.c.l.b16 %v4711
        %v5414 = vunpack.c.h.b16 %v4711
        %v5415 = vunpack.c.l.b16 %v4712
        %v5416 = vunpack.c.h.b16 %v4712
        %v5417 = vunpack.c.l.b16 %v4713
        %v5418 = vunpack.c.h.b16 %v4713
        %v5419 = vunpack.c.l.b16 %v4714
        %v5420 = vunpack.c.h.b16 %v4714
        %v5421 = vunpack.c.l.b16 %v4715
        %v5422 = vunpack.c.h.b16 %v4715
        %v5423 = vunpack.c.l.b16 %v4716
        %v5424 = vunpack.c.h.b16 %v4716
        %v5425 = vunpack.c.l.b16 %v4717
        %v5426 = vunpack.c.h.b16 %v4717
        %v5427 = vunpack.c.l.b16 %v4718
        %v5428 = vunpack.c.h.b16 %v4718
        %v5429 = vunpack.c.l.b16 %v4719
        %v5430 = vunpack.c.h.b16 %v4719
        %v5431 = vunpack.c.l.b16 %v4720
        %v5432 = vunpack.c.h.b16 %v4720
        %v5433 = vunpack.c.l.b16 %v4721
        %v5434 = vunpack.c.h.b16 %v4721
        %v5435 = vunpack.c.l.b16 %v4722
        %v5436 = vunpack.c.h.b16 %v4722
        %v5437 = vunpack.c.l.b16 %v4723
        %v5438 = vunpack.c.h.b16 %v4723
        %v5439 = vunpack.c.l.b16 %v4724
        %v5440 = vunpack.c.h.b16 %v4724
        %v5441 = vunpack.c.l.b16 %v4725
        %v5442 = vunpack.c.h.b16 %v4725
        %v5443 = vunpack.c.l.b16 %v4726
        %v5444 = vunpack.c.h.b16 %v4726
        %v5445 = vunpack.c.l.b16 %v4727
        %v5446 = vunpack.c.h.b16 %v4727
        %v5447 = vunpack.c.l.b16 %v4728
        %v5448 = vunpack.c.h.b16 %v4728
        %v5449 = vunpack.c.l.b16 %v4729
        %v5450 = vunpack.c.h.b16 %v4729
        %v5451 = vunpack.c.l.b16 %v4730
        %v5452 = vunpack.c.h.b16 %v4730
        %v5453 = vunpack.c.l.b16 %v4731
        %v5454 = vunpack.c.h.b16 %v4731
        %v5455 = vunpack.c.l.b16 %v4732
        %v5456 = vunpack.c.h.b16 %v4732
        %v5457 = vunpack.c.l.b16 %v4733
        %v5458 = vunpack.c.h.b16 %v4733
        %v5459 = vunpack.c.l.b16 %v4734
        %v5460 = vunpack.c.h.b16 %v4734
        %v5461 = vunpack.c.l.b16 %v4735
        %v5462 = vunpack.c.h.b16 %v4735
        %v5463 = vunpack.c.l.b16 %v4736
        %v5464 = vunpack.c.h.b16 %v4736
        %v5465 = vunpack.c.l.b16 %v4737
        %v5466 = vunpack.c.h.b16 %v4737
        %v5467 = vunpack.c.l.b16 %v4738
        %v5468 = vunpack.c.h.b16 %v4738
        %v5469 = vunpack.c.l.b16 %v4739
        %v5470 = vunpack.c.h.b16 %v4739
        %v5471 = vunpack.c.l.b16 %v4740
        %v5472 = vunpack.c.h.b16 %v4740
        %v5473 = vunpack.c.l.b16 %v4741
        %v5474 = vunpack.c.h.b16 %v4741
        %v5475 = vunpack.c.l.b16 %v4742
        %v5476 = vunpack.c.h.b16 %v4742
        %v5477 = vunpack.c.l.b16 %v4743
        %v5478 = vunpack.c.h.b16 %v4743
        %v5479 = vunpack.c.l.b16 %v4744
        %v5480 = vunpack.c.h.b16 %v4744
        %v5481 = vunpack.c.l.b16 %v4745
        %v5482 = vunpack.c.h.b16 %v4745
        %v5483 = vunpack.c.l.b16 %v4746
        %v5484 = vunpack.c.h.b16 %v4746
        %v5485 = vunpack.c.l.b16 %v4747
        %v5486 = vunpack.c.h.b16 %v4747
        %v5487 = vunpack.c.l.b16 %v4748
        %v5488 = vunpack.c.h.b16 %v4748
        %v5489 = vunpack.c.l.b16 %v4749
        %v5490 = vunpack.c.h.b16 %v4749
        %v5491 = vunpack.c.l.b16 %v4750
        %v5492 = vunpack.c.h.b16 %v4750
        %v5493 = vunpack.c.l.b16 %v4751
        %v5494 = vunpack.c.h.b16 %v4751
        %v5495 = vunpack.c.l.b16 %v4752
        %v5496 = vunpack.c.h.b16 %v4752
        %v5497 = vunpack.c.l.b16 %v4753
        %v5498 = vunpack.c.h.b16 %v4753
        %v5499 = vunpack.c.l.b16 %v4754
        %v5500 = vunpack.c.h.b16 %v4754
        %v5501 = vunpack.c.l.b16 %v4755
        %v5502 = vunpack.c.h.b16 %v4755
        %v5503 = vunpack.c.l.b16 %v4756
        %v5504 = vunpack.c.h.b16 %v4756
        %v5505 = vunpack.c.l.b16 %v4757
        %v5506 = vunpack.c.h.b16 %v4757
        %v5507 = vunpack.c.l.b16 %v4758
        %v5508 = vunpack.c.h.b16 %v4758
        %v5509 = vunpack.c.l.b16 %v4759
        %v5510 = vunpack.c.h.b16 %v4759
        %v5511 = vunpack.c.l.b16 %v4760
        %v5512 = vunpack.c.h.b16 %v4760
        %v5513 = vunpack.c.l.b16 %v4761
        %v5514 = vunpack.c.h.b16 %v4761
        %v5515 = vunpack.c.l.b16 %v4762
        %v5516 = vunpack.c.h.b16 %v4762
        %v5517 = vunpack.c.l.b16 %v4763
        %v5518 = vunpack.c.h.b16 %v4763
        %v5519 = vunpack.c.l.b16 %v4764
        %v5520 = vunpack.c.h.b16 %v4764
        %v5521 = vunpack.c.l.b16 %v4765
        %v5522 = vunpack.c.h.b16 %v4765
        %v5523 = vunpack.c.l.b16 %v4766
        %v5524 = vunpack.c.h.b16 %v4766
        %v5525 = vunpack.c.l.b16 %v4767
        %v5526 = vunpack.c.h.b16 %v4767
        %v5527 = vunpack.c.l.b16 %v4768
        %v5528 = vunpack.c.h.b16 %v4768
        %v5529 = vunpack.c.l.b16 %v4769
        %v5530 = vunpack.c.h.b16 %v4769
        %v5531 = vunpack.c.l.b16 %v4770
        %v5532 = vunpack.c.h.b16 %v4770
        %v5533 = vunpack.c.l.b16 %v4771
        %v5534 = vunpack.c.h.b16 %v4771
        %v5535 = vunpack.c.l.b16 %v4772
        %v5536 = vunpack.c.h.b16 %v4772
        %v5537 = vunpack.c.l.b16 %v4773
        %v5538 = vunpack.c.h.b16 %v4773
        %v5539 = vunpack.c.l.b16 %v4774
        %v5540 = vunpack.c.h.b16 %v4774
        %v5541 = vunpack.c.l.b16 %v4775
        %v5542 = vunpack.c.h.b16 %v4775
        %v5543 = vunpack.c.l.b16 %v4776
        %v5544 = vunpack.c.h.b16 %v4776
        %v5545 = vunpack.c.l.b16 %v4777
        %v5546 = vunpack.c.h.b16 %v4777
        %v5547 = vunpack.c.l.b16 %v4778
        %v5548 = vunpack.c.h.b16 %v4778
        %v5549 = vunpack.c.l.b16 %v4779
        %v5550 = vunpack.c.h.b16 %v4779
        %v5551 = vunpack.c.l.b16 %v4780
        %v5552 = vunpack.c.h.b16 %v4780
        %v5553 = vunpack.c.l.b16 %v4781
        %v5554 = vunpack.c.h.b16 %v4781
        %v5555 = vunpack.c.l.b16 %v4782
        %v5556 = vunpack.c.h.b16 %v4782
        %v5557 = vunpack.c.l.b16 %v4783
        %v5558 = vunpack.c.h.b16 %v4783
        %v5559 = vunpack.c.l.b16 %v4784
        %v5560 = vunpack.c.h.b16 %v4784
        %v5561 = vunpack.c.l.b16 %v4785
        %v5562 = vunpack.c.h.b16 %v4785
        %v5563 = vunpack.c.l.b16 %v4786
        %v5564 = vunpack.c.h.b16 %v4786
        %v5565 = vpack.c.b16 %v5057, %v5053
        %v5566 = vpack.c.b16 %v5058, %v5054
        %v5567 = vpack.c.b16 %v5059, %v5055
        %v5568 = vpack.c.b16 %v5060, %v5056
        %v5569 = vpack.c.b16 %v5065, %v5061
        %v5570 = vpack.c.b16 %v5066, %v5062
        %v5571 = vpack.c.b16 %v5067, %v5063
        %v5572 = vpack.c.b16 %v5068, %v5064
        %v5573 = vpack.c.b16 %v5073, %v5069
        %v5574 = vpack.c.b16 %v5074, %v5070
        %v5575 = vpack.c.b16 %v5075, %v5071
        %v5576 = vpack.c.b16 %v5076, %v5072
        %v5577 = vpack.c.b16 %v5081, %v5077
        %v5578 = vpack.c.b16 %v5082, %v5078
        %v5579 = vpack.c.b16 %v5083, %v5079
        %v5580 = vpack.c.b16 %v5084, %v5080
        %v5581 = vpack.c.b16 %v5089, %v5085
        %v5582 = vpack.c.b16 %v5090, %v5086
        %v5583 = vpack.c.b16 %v5091, %v5087
        %v5584 = vpack.c.b16 %v5092, %v5088
        %v5585 = vpack.c.b16 %v5097, %v5093
        %v5586 = vpack.c.b16 %v5098, %v5094
        %v5587 = vpack.c.b16 %v5099, %v5095
        %v5588 = vpack.c.b16 %v5100, %v5096
        %v5589 = vpack.c.b16 %v5105, %v5101
        %v5590 = vpack.c.b16 %v5106, %v5102
        %v5591 = vpack.c.b16 %v5107, %v5103
        %v5592 = vpack.c.b16 %v5108, %v5104
        %v5593 = vpack.c.b16 %v5113, %v5109
        %v5594 = vpack.c.b16 %v5114, %v5110
        %v5595 = vpack.c.b16 %v5115, %v5111
        %v5596 = vpack.c.b16 %v5116, %v5112
        %v5597 = vpack.c.b16 %v5121, %v5117
        %v5598 = vpack.c.b16 %v5122, %v5118
        %v5599 = vpack.c.b16 %v5123, %v5119
        %v5600 = vpack.c.b16 %v5124, %v5120
        %v5601 = vpack.c.b16 %v5129, %v5125
        %v5602 = vpack.c.b16 %v5130, %v5126
        %v5603 = vpack.c.b16 %v5131, %v5127
        %v5604 = vpack.c.b16 %v5132, %v5128
        %v5605 = vpack.c.b16 %v5137, %v5133
        %v5606 = vpack.c.b16 %v5138, %v5134
        %v5607 = vpack.c.b16 %v5139, %v5135
        %v5608 = vpack.c.b16 %v5140, %v5136
        %v5609 = vpack.c.b16 %v5145, %v5141
        %v5610 = vpack.c.b16 %v5146, %v5142
        %v5611 = vpack.c.b16 %v5147, %v5143
        %v5612 = vpack.c.b16 %v5148, %v5144
        %v5613 = vpack.c.b16 %v5153, %v5149
        %v5614 = vpack.c.b16 %v5154, %v5150
        %v5615 = vpack.c.b16 %v5155, %v5151
        %v5616 = vpack.c.b16 %v5156, %v5152
        %v5617 = vpack.c.b16 %v5161, %v5157
        %v5618 = vpack.c.b16 %v5162, %v5158
        %v5619 = vpack.c.b16 %v5163, %v5159
        %v5620 = vpack.c.b16 %v5164, %v5160
        %v5621 = vpack.c.b16 %v5169, %v5165
        %v5622 = vpack.c.b16 %v5170, %v5166
        %v5623 = vpack.c.b16 %v5171, %v5167
        %v5624 = vpack.c.b16 %v5172, %v5168
        %v5625 = vpack.c.b16 %v5177, %v5173
        %v5626 = vpack.c.b16 %v5178, %v5174
        %v5627 = vpack.c.b16 %v5179, %v5175
        %v5628 = vpack.c.b16 %v5180, %v5176
        %v5629 = vpack.c.b16 %v5185, %v5181
        %v5630 = vpack.c.b16 %v5186, %v5182
        %v5631 = vpack.c.b16 %v5187, %v5183
        %v5632 = vpack.c.b16 %v5188, %v5184
        %v5633 = vpack.c.b16 %v5193, %v5189
        %v5634 = vpack.c.b16 %v5194, %v5190
        %v5635 = vpack.c.b16 %v5195, %v5191
        %v5636 = vpack.c.b16 %v5196, %v5192
        %v5637 = vpack.c.b16 %v5201, %v5197
        %v5638 = vpack.c.b16 %v5202, %v5198
        %v5639 = vpack.c.b16 %v5203, %v5199
        %v5640 = vpack.c.b16 %v5204, %v5200
        %v5641 = vpack.c.b16 %v5209, %v5205
        %v5642 = vpack.c.b16 %v5210, %v5206
        %v5643 = vpack.c.b16 %v5211, %v5207
        %v5644 = vpack.c.b16 %v5212, %v5208
        %v5645 = vpack.c.b16 %v5217, %v5213
        %v5646 = vpack.c.b16 %v5218, %v5214
        %v5647 = vpack.c.b16 %v5219, %v5215
        %v5648 = vpack.c.b16 %v5220, %v5216
        %v5649 = vpack.c.b16 %v5225, %v5221
        %v5650 = vpack.c.b16 %v5226, %v5222
        %v5651 = vpack.c.b16 %v5227, %v5223
        %v5652 = vpack.c.b16 %v5228, %v5224
        %v5653 = vpack.c.b16 %v5233, %v5229
        %v5654 = vpack.c.b16 %v5234, %v5230
        %v5655 = vpack.c.b16 %v5235, %v5231
        %v5656 = vpack.c.b16 %v5236, %v5232
        %v5657 = vpack.c.b16 %v5241, %v5237
        %v5658 = vpack.c.b16 %v5242, %v5238
        %v5659 = vpack.c.b16 %v5243, %v5239
        %v5660 = vpack.c.b16 %v5244, %v5240
        %v5661 = vpack.c.b16 %v5249, %v5245
        %v5662 = vpack.c.b16 %v5250, %v5246
        %v5663 = vpack.c.b16 %v5251, %v5247
        %v5664 = vpack.c.b16 %v5252, %v5248
        %v5665 = vpack.c.b16 %v5257, %v5253
        %v5666 = vpack.c.b16 %v5258, %v5254
        %v5667 = vpack.c.b16 %v5259, %v5255
        %v5668 = vpack.c.b16 %v5260, %v5256
        %v5669 = vpack.c.b16 %v5265, %v5261
        %v5670 = vpack.c.b16 %v5266, %v5262
        %v5671 = vpack.c.b16 %v5267, %v5263
        %v5672 = vpack.c.b16 %v5268, %v5264
        %v5673 = vpack.c.b16 %v5273, %v5269
        %v5674 = vpack.c.b16 %v5274, %v5270
        %v5675 = vpack.c.b16 %v5275, %v5271
        %v5676 = vpack.c.b16 %v5276, %v5272
        %v5677 = vpack.c.b16 %v5281, %v5277
        %v5678 = vpack.c.b16 %v5282, %v5278
        %v5679 = vpack.c.b16 %v5283, %v5279
        %v5680 = vpack.c.b16 %v5284, %v5280
        %v5681 = vpack.c.b16 %v5289, %v5285
        %v5682 = vpack.c.b16 %v5290, %v5286
        %v5683 = vpack.c.b16 %v5291, %v5287
        %v5684 = vpack.c.b16 %v5292, %v5288
        %v5685 = vpack.c.b16 %v5297, %v5293
        %v5686 = vpack.c.b16 %v5298, %v5294
        %v5687 = vpack.c.b16 %v5299, %v5295
        %v5688 = vpack.c.b16 %v5300, %v5296
        %v5689 = vpack.c.b16 %v5305, %v5301
        %v5690 = vpack.c.b16 %v5306, %v5302
        %v5691 = vpack.c.b16 %v5307, %v5303
        %v5692 = vpack.c.b16 %v5308, %v5304
        %v5693 = vpack.c.b16 %v5313, %v5309
        %v5694 = vpack.c.b16 %v5314, %v5310
        %v5695 = vpack.c.b16 %v5315, %v5311
        %v5696 = vpack.c.b16 %v5316, %v5312
        %v5697 = vpack.c.b16 %v5321, %v5317
        %v5698 = vpack.c.b16 %v5322, %v5318
        %v5699 = vpack.c.b16 %v5323, %v5319
        %v5700 = vpack.c.b16 %v5324, %v5320
        %v5701 = vpack.c.b16 %v5329, %v5325
        %v5702 = vpack.c.b16 %v5330, %v5326
        %v5703 = vpack.c.b16 %v5331, %v5327
        %v5704 = vpack.c.b16 %v5332, %v5328
        %v5705 = vpack.c.b16 %v5337, %v5333
        %v5706 = vpack.c.b16 %v5338, %v5334
        %v5707 = vpack.c.b16 %v5339, %v5335
        %v5708 = vpack.c.b16 %v5340, %v5336
        %v5709 = vpack.c.b16 %v5345, %v5341
        %v5710 = vpack.c.b16 %v5346, %v5342
        %v5711 = vpack.c.b16 %v5347, %v5343
        %v5712 = vpack.c.b16 %v5348, %v5344
        %v5713 = vpack.c.b16 %v5353, %v5349
        %v5714 = vpack.c.b16 %v5354, %v5350
        %v5715 = vpack.c.b16 %v5355, %v5351
        %v5716 = vpack.c.b16 %v5356, %v5352
        %v5717 = vpack.c.b16 %v5361, %v5357
        %v5718 = vpack.c.b16 %v5362, %v5358
        %v5719 = vpack.c.b16 %v5363, %v5359
        %v5720 = vpack.c.b16 %v5364, %v5360
        %v5721 = vpack.c.b16 %v5369, %v5365
        %v5722 = vpack.c.b16 %v5370, %v5366
        %v5723 = vpack.c.b16 %v5371, %v5367
        %v5724 = vpack.c.b16 %v5372, %v5368
        %v5725 = vpack.c.b16 %v5377, %v5373
        %v5726 = vpack.c.b16 %v5378, %v5374
        %v5727 = vpack.c.b16 %v5379, %v5375
        %v5728 = vpack.c.b16 %v5380, %v5376
        %v5729 = vpack.c.b16 %v5385, %v5381
        %v5730 = vpack.c.b16 %v5386, %v5382
        %v5731 = vpack.c.b16 %v5387, %v5383
        %v5732 = vpack.c.b16 %v5388, %v5384
        %v5733 = vpack.c.b16 %v5393, %v5389
        %v5734 = vpack.c.b16 %v5394, %v5390
        %v5735 = vpack.c.b16 %v5395, %v5391
        %v5736 = vpack.c.b16 %v5396, %v5392
        %v5737 = vpack.c.b16 %v5401, %v5397
        %v5738 = vpack.c.b16 %v5402, %v5398
        %v5739 = vpack.c.b16 %v5403, %v5399
        %v5740 = vpack.c.b16 %v5404, %v5400
        %v5741 = vpack.c.b16 %v5409, %v5405
        %v5742 = vpack.c.b16 %v5410, %v5406
        %v5743 = vpack.c.b16 %v5411, %v5407
        %v5744 = vpack.c.b16 %v5412, %v5408
        %v5745 = vpack.c.b16 %v5417, %v5413
        %v5746 = vpack.c.b16 %v5418, %v5414
        %v5747 = vpack.c.b16 %v5419, %v5415
        %v5748 = vpack.c.b16 %v5420, %v5416
        %v5749 = vpack.c.b16 %v5425, %v5421
        %v5750 = vpack.c.b16 %v5426, %v5422
        %v5751 = vpack.c.b16 %v5427, %v5423
        %v5752 = vpack.c.b16 %v5428, %v5424
        %v5753 = vpack.c.b16 %v5433, %v5429
        %v5754 = vpack.c.b16 %v5434, %v5430
        %v5755 = vpack.c.b16 %v5435, %v5431
        %v5756 = vpack.c.b16 %v5436, %v5432
        %v5757 = vpack.c.b16 %v5441, %v5437
        %v5758 = vpack.c.b16 %v5442, %v5438
        %v5759 = vpack.c.b16 %v5443, %v5439
        %v5760 = vpack.c.b16 %v5444, %v5440
        %v5761 = vpack.c.b16 %v5449, %v5445
        %v5762 = vpack.c.b16 %v5450, %v5446
        %v5763 = vpack.c.b16 %v5451, %v5447
        %v5764 = vpack.c.b16 %v5452, %v5448
        %v5765 = vpack.c.b16 %v5457, %v5453
        %v5766 = vpack.c.b16 %v5458, %v5454
        %v5767 = vpack.c.b16 %v5459, %v5455
        %v5768 = vpack.c.b16 %v5460, %v5456
        %v5769 = vpack.c.b16 %v5465, %v5461
        %v5770 = vpack.c.b16 %v5466, %v5462
        %v5771 = vpack.c.b16 %v5467, %v5463
        %v5772 = vpack.c.b16 %v5468, %v5464
        %v5773 = vpack.c.b16 %v5473, %v5469
        %v5774 = vpack.c.b16 %v5474, %v5470
        %v5775 = vpack.c.b16 %v5475, %v5471
        %v5776 = vpack.c.b16 %v5476, %v5472
        %v5777 = vpack.c.b16 %v5481, %v5477
        %v5778 = vpack.c.b16 %v5482, %v5478
        %v5779 = vpack.c.b16 %v5483, %v5479
        %v5780 = vpack.c.b16 %v5484, %v5480
        %v5781 = vpack.c.b16 %v5489, %v5485
        %v5782 = vpack.c.b16 %v5490, %v5486
        %v5783 = vpack.c.b16 %v5491, %v5487
        %v5784 = vpack.c.b16 %v5492, %v5488
        %v5785 = vpack.c.b16 %v5497, %v5493
        %v5786 = vpack.c.b16 %v5498, %v5494
        %v5787 = vpack.c.b16 %v5499, %v5495
        %v5788 = vpack.c.b16 %v5500, %v5496
        %v5789 = vpack.c.b16 %v5505, %v5501
        %v5790 = vpack.c.b16 %v5506, %v5502
        %v5791 = vpack.c.b16 %v5507, %v5503
        %v5792 = vpack.c.b16 %v5508, %v5504
        %v5793 = vpack.c.b16 %v5513, %v5509
        %v5794 = vpack.c.b16 %v5514, %v5510
        %v5795 = vpack.c.b16 %v5515, %v5511
        %v5796 = vpack.c.b16 %v5516, %v5512
        %v5797 = vpack.c.b16 %v5521, %v5517
        %v5798 = vpack.c.b16 %v5522, %v5518
        %v5799 = vpack.c.b16 %v5523, %v5519
        %v5800 = vpack.c.b16 %v5524, %v5520
        %v5801 = vpack.c.b16 %v5529, %v5525
        %v5802 = vpack.c.b16 %v5530, %v5526
        %v5803 = vpack.c.b16 %v5531, %v5527
        %v5804 = vpack.c.b16 %v5532, %v5528
        %v5805 = vpack.c.b16 %v5537, %v5533
        %v5806 = vpack.c.b16 %v5538, %v5534
        %v5807 = vpack.c.b16 %v5539, %v5535
        %v5808 = vpack.c.b16 %v5540, %v5536
        %v5809 = vpack.c.b16 %v5545, %v5541
        %v5810 = vpack.c.b16 %v5546, %v5542
        %v5811 = vpack.c.b16 %v5547, %v5543
        %v5812 = vpack.c.b16 %v5548, %v5544
        %v5813 = vpack.c.b16 %v5553, %v5549
        %v5814 = vpack.c.b16 %v5554, %v5550
        %v5815 = vpack.c.b16 %v5555, %v5551
        %v5816 = vpack.c.b16 %v5556, %v5552
        %v5817 = vpack.c.b16 %v5561, %v5557
        %v5818 = vpack.c.b16 %v5562, %v5558
        %v5819 = vpack.c.b16 %v5563, %v5559
        %v5820 = vpack.c.b16 %v5564, %v5560
        %6077 = vmatpush.bf16.msra.mxu0 %v5593
        %6078 = vmatpush.bf16.msra.mxu0 %v5589
        %6079 = vmatpush.bf16.msra.mxu0 %v5585
        %6080 = vmatpush.bf16.msra.mxu0 %v5581
        %6081 = vmatpush.bf16.msra.mxu0 %v5577
        %6082 = vmatpush.bf16.msra.mxu0 %v5573
        %6083 = vmatpush.bf16.msra.mxu0 %v5569
        %6084 = vmatpush.bf16.msra.mxu0 %v5565
        %6085 = vmatmul.bf16.gmra.mxu0 %v4523
        %v6086 = vpop.f32.mrf.mxu0
        %v6087 = vadd.f32 %v4789, %v6086
        %v6088 = vpop.f32.mrf.mxu0
        %v6089 = vadd.f32 %v4789, %v6088
        %6090 = vdwg.mxu0
        %6091 = vmatpush.bf16.msra.mxu0 %v5625
        %6092 = vmatpush.bf16.msra.mxu0 %v5621
        %6093 = vmatpush.bf16.msra.mxu0 %v5617
        %6094 = vmatpush.bf16.msra.mxu0 %v5613
        %6095 = vmatpush.bf16.msra.mxu0 %v5609
        %6096 = vmatpush.bf16.msra.mxu0 %v5605
        %6097 = vmatpush.bf16.msra.mxu0 %v5601
        %6098 = vmatpush.bf16.msra.mxu0 %v5597
        %6099 = vmatmul.bf16.gmra.mxu0 %v4524
        %v6100 = vpop.f32.mrf.mxu0
        %v6101 = vadd.f32 %v6087, %v6100
        %v6102 = vpop.f32.mrf.mxu0
        %v6103 = vadd.f32 %v6089, %v6102
        %6104 = vdwg.mxu0
        %6105 = vmatpush.bf16.msra.mxu0 %v5657
        %6106 = vmatpush.bf16.msra.mxu0 %v5653
        %6107 = vmatpush.bf16.msra.mxu0 %v5649
        %6108 = vmatpush.bf16.msra.mxu0 %v5645
        %6109 = vmatpush.bf16.msra.mxu0 %v5641
        %6110 = vmatpush.bf16.msra.mxu0 %v5637
        %6111 = vmatpush.bf16.msra.mxu0 %v5633
        %6112 = vmatpush.bf16.msra.mxu0 %v5629
        %6113 = vmatmul.bf16.gmra.mxu0 %v4525
        %v6114 = vpop.f32.mrf.mxu0
        %v6115 = vadd.f32 %v6101, %v6114
        %v6116 = vpop.f32.mrf.mxu0
        %v6117 = vadd.f32 %v6103, %v6116
        %6118 = vdwg.mxu0
        %6119 = vmatpush.bf16.msra.mxu0 %v5689
        %6120 = vmatpush.bf16.msra.mxu0 %v5685
        %6121 = vmatpush.bf16.msra.mxu0 %v5681
        %6122 = vmatpush.bf16.msra.mxu0 %v5677
        %6123 = vmatpush.bf16.msra.mxu0 %v5673
        %6124 = vmatpush.bf16.msra.mxu0 %v5669
        %6125 = vmatpush.bf16.msra.mxu0 %v5665
        %6126 = vmatpush.bf16.msra.mxu0 %v5661
        %6127 = vmatmul.bf16.gmra.mxu0 %v4526
        %v6128 = vpop.f32.mrf.mxu0
        %v6129 = vadd.f32 %v6115, %v6128
        %v6130 = vpop.f32.mrf.mxu0
        %v6131 = vadd.f32 %v6117, %v6130
        %6132 = vdwg.mxu0
        %6133 = vmatpush.bf16.msra.mxu0 %v5721
        %6134 = vmatpush.bf16.msra.mxu0 %v5717
        %6135 = vmatpush.bf16.msra.mxu0 %v5713
        %6136 = vmatpush.bf16.msra.mxu0 %v5709
        %6137 = vmatpush.bf16.msra.mxu0 %v5705
        %6138 = vmatpush.bf16.msra.mxu0 %v5701
        %6139 = vmatpush.bf16.msra.mxu0 %v5697
        %6140 = vmatpush.bf16.msra.mxu0 %v5693
        %6141 = vmatmul.bf16.gmra.mxu0 %v4527
        %v6142 = vpop.f32.mrf.mxu0
        %v6143 = vadd.f32 %v6129, %v6142
        %v6144 = vpop.f32.mrf.mxu0
        %v6145 = vadd.f32 %v6131, %v6144
        %6146 = vdwg.mxu0
        %6147 = vmatpush.bf16.msra.mxu0 %v5753
        %6148 = vmatpush.bf16.msra.mxu0 %v5749
        %6149 = vmatpush.bf16.msra.mxu0 %v5745
        %6150 = vmatpush.bf16.msra.mxu0 %v5741
        %6151 = vmatpush.bf16.msra.mxu0 %v5737
        %6152 = vmatpush.bf16.msra.mxu0 %v5733
        %6153 = vmatpush.bf16.msra.mxu0 %v5729
        %6154 = vmatpush.bf16.msra.mxu0 %v5725
        %6155 = vmatmul.bf16.gmra.mxu0 %v4528
        %v6156 = vpop.f32.mrf.mxu0
        %v6157 = vadd.f32 %v6143, %v6156
        %v6158 = vpop.f32.mrf.mxu0
        %v6159 = vadd.f32 %v6145, %v6158
        %6160 = vdwg.mxu0
        %6161 = vmatpush.bf16.msra.mxu0 %v5785
        %6162 = vmatpush.bf16.msra.mxu0 %v5781
        %6163 = vmatpush.bf16.msra.mxu0 %v5777
        %6164 = vmatpush.bf16.msra.mxu0 %v5773
        %6165 = vmatpush.bf16.msra.mxu0 %v5769
        %6166 = vmatpush.bf16.msra.mxu0 %v5765
        %6167 = vmatpush.bf16.msra.mxu0 %v5761
        %6168 = vmatpush.bf16.msra.mxu0 %v5757
        %6169 = vmatmul.bf16.gmra.mxu0 %v4529
        %v6170 = vpop.f32.mrf.mxu0
        %v6171 = vadd.f32 %v6157, %v6170
        %v6172 = vpop.f32.mrf.mxu0
        %v6173 = vadd.f32 %v6159, %v6172
        %6174 = vdwg.mxu0
        %6175 = vmatpush.bf16.msra.mxu0 %v5817
        %6176 = vmatpush.bf16.msra.mxu0 %v5813
        %6177 = vmatpush.bf16.msra.mxu0 %v5809
        %6178 = vmatpush.bf16.msra.mxu0 %v5805
        %6179 = vmatpush.bf16.msra.mxu0 %v5801
        %6180 = vmatpush.bf16.msra.mxu0 %v5797
        %6181 = vmatpush.bf16.msra.mxu0 %v5793
        %6182 = vmatpush.bf16.msra.mxu0 %v5789
        %6183 = vmatmul.bf16.gmra.mxu0 %v4530
        %v6184 = vpop.f32.mrf.mxu0
        %v6185 = vadd.f32 %v6171, %v6184
        %v6186 = vpop.f32.mrf.mxu0
        %v6187 = vadd.f32 %v6173, %v6186
        %6188 = vdwg.mxu0
        %6189 = vmatpush.bf16.msra.mxu0 %v5594
        %6190 = vmatpush.bf16.msra.mxu0 %v5590
        %6191 = vmatpush.bf16.msra.mxu0 %v5586
        %6192 = vmatpush.bf16.msra.mxu0 %v5582
        %6193 = vmatpush.bf16.msra.mxu0 %v5578
        %6194 = vmatpush.bf16.msra.mxu0 %v5574
        %6195 = vmatpush.bf16.msra.mxu0 %v5570
        %6196 = vmatpush.bf16.msra.mxu0 %v5566
        %6197 = vmatmul.bf16.gmra.mxu0 %v4523
        %v6198 = vpop.f32.mrf.mxu0
        %v6199 = vadd.f32 %v4790, %v6198
        %v6200 = vpop.f32.mrf.mxu0
        %v6201 = vadd.f32 %v4790, %v6200
        %6202 = vdwg.mxu0
        %6203 = vmatpush.bf16.msra.mxu0 %v5626
        %6204 = vmatpush.bf16.msra.mxu0 %v5622
        %6205 = vmatpush.bf16.msra.mxu0 %v5618
        %6206 = vmatpush.bf16.msra.mxu0 %v5614
        %6207 = vmatpush.bf16.msra.mxu0 %v5610
        %6208 = vmatpush.bf16.msra.mxu0 %v5606
        %6209 = vmatpush.bf16.msra.mxu0 %v5602
        %6210 = vmatpush.bf16.msra.mxu0 %v5598
        %6211 = vmatmul.bf16.gmra.mxu0 %v4524
        %v6212 = vpop.f32.mrf.mxu0
        %v6213 = vadd.f32 %v6199, %v6212
        %v6214 = vpop.f32.mrf.mxu0
        %v6215 = vadd.f32 %v6201, %v6214
        %6216 = vdwg.mxu0
        %6217 = vmatpush.bf16.msra.mxu0 %v5658
        %6218 = vmatpush.bf16.msra.mxu0 %v5654
        %6219 = vmatpush.bf16.msra.mxu0 %v5650
        %6220 = vmatpush.bf16.msra.mxu0 %v5646
        %6221 = vmatpush.bf16.msra.mxu0 %v5642
        %6222 = vmatpush.bf16.msra.mxu0 %v5638
        %6223 = vmatpush.bf16.msra.mxu0 %v5634
        %6224 = vmatpush.bf16.msra.mxu0 %v5630
        %6225 = vmatmul.bf16.gmra.mxu0 %v4525
        %v6226 = vpop.f32.mrf.mxu0
        %v6227 = vadd.f32 %v6213, %v6226
        %v6228 = vpop.f32.mrf.mxu0
        %v6229 = vadd.f32 %v6215, %v6228
        %6230 = vdwg.mxu0
        %6231 = vmatpush.bf16.msra.mxu0 %v5690
        %6232 = vmatpush.bf16.msra.mxu0 %v5686
        %6233 = vmatpush.bf16.msra.mxu0 %v5682
        %6234 = vmatpush.bf16.msra.mxu0 %v5678
        %6235 = vmatpush.bf16.msra.mxu0 %v5674
        %6236 = vmatpush.bf16.msra.mxu0 %v5670
        %6237 = vmatpush.bf16.msra.mxu0 %v5666
        %6238 = vmatpush.bf16.msra.mxu0 %v5662
        %6239 = vmatmul.bf16.gmra.mxu0 %v4526
        %v6240 = vpop.f32.mrf.mxu0
        %v6241 = vadd.f32 %v6227, %v6240
        %v6242 = vpop.f32.mrf.mxu0
        %v6243 = vadd.f32 %v6229, %v6242
        %6244 = vdwg.mxu0
        %6245 = vmatpush.bf16.msra.mxu0 %v5722
        %6246 = vmatpush.bf16.msra.mxu0 %v5718
        %6247 = vmatpush.bf16.msra.mxu0 %v5714
        %6248 = vmatpush.bf16.msra.mxu0 %v5710
        %6249 = vmatpush.bf16.msra.mxu0 %v5706
        %6250 = vmatpush.bf16.msra.mxu0 %v5702
        %6251 = vmatpush.bf16.msra.mxu0 %v5698
        %6252 = vmatpush.bf16.msra.mxu0 %v5694
        %6253 = vmatmul.bf16.gmra.mxu0 %v4527
        %v6254 = vpop.f32.mrf.mxu0
        %v6255 = vadd.f32 %v6241, %v6254
        %v6256 = vpop.f32.mrf.mxu0
        %v6257 = vadd.f32 %v6243, %v6256
        %6258 = vdwg.mxu0
        %6259 = vmatpush.bf16.msra.mxu0 %v5754
        %6260 = vmatpush.bf16.msra.mxu0 %v5750
        %6261 = vmatpush.bf16.msra.mxu0 %v5746
        %6262 = vmatpush.bf16.msra.mxu0 %v5742
        %6263 = vmatpush.bf16.msra.mxu0 %v5738
        %6264 = vmatpush.bf16.msra.mxu0 %v5734
        %6265 = vmatpush.bf16.msra.mxu0 %v5730
        %6266 = vmatpush.bf16.msra.mxu0 %v5726
        %6267 = vmatmul.bf16.gmra.mxu0 %v4528
        %v6268 = vpop.f32.mrf.mxu0
        %v6269 = vadd.f32 %v6255, %v6268
        %v6270 = vpop.f32.mrf.mxu0
        %v6271 = vadd.f32 %v6257, %v6270
        %6272 = vdwg.mxu0
        %6273 = vmatpush.bf16.msra.mxu0 %v5786
        %6274 = vmatpush.bf16.msra.mxu0 %v5782
        %6275 = vmatpush.bf16.msra.mxu0 %v5778
        %6276 = vmatpush.bf16.msra.mxu0 %v5774
        %6277 = vmatpush.bf16.msra.mxu0 %v5770
        %6278 = vmatpush.bf16.msra.mxu0 %v5766
        %6279 = vmatpush.bf16.msra.mxu0 %v5762
        %6280 = vmatpush.bf16.msra.mxu0 %v5758
        %6281 = vmatmul.bf16.gmra.mxu0 %v4529
        %v6282 = vpop.f32.mrf.mxu0
        %v6283 = vadd.f32 %v6269, %v6282
        %v6284 = vpop.f32.mrf.mxu0
        %v6285 = vadd.f32 %v6271, %v6284
        %6286 = vdwg.mxu0
        %6287 = vmatpush.bf16.msra.mxu0 %v5818
        %6288 = vmatpush.bf16.msra.mxu0 %v5814
        %6289 = vmatpush.bf16.msra.mxu0 %v5810
        %6290 = vmatpush.bf16.msra.mxu0 %v5806
        %6291 = vmatpush.bf16.msra.mxu0 %v5802
        %6292 = vmatpush.bf16.msra.mxu0 %v5798
        %6293 = vmatpush.bf16.msra.mxu0 %v5794
        %6294 = vmatpush.bf16.msra.mxu0 %v5790
        %6295 = vmatmul.bf16.gmra.mxu0 %v4530
        %v6296 = vpop.f32.mrf.mxu0
        %v6297 = vadd.f32 %v6283, %v6296
        %v6298 = vpop.f32.mrf.mxu0
        %v6299 = vadd.f32 %v6285, %v6298
        %6300 = vdwg.mxu0
        %6301 = vmatpush.bf16.msra.mxu0 %v5595
        %6302 = vmatpush.bf16.msra.mxu0 %v5591
        %6303 = vmatpush.bf16.msra.mxu0 %v5587
        %6304 = vmatpush.bf16.msra.mxu0 %v5583
        %6305 = vmatpush.bf16.msra.mxu0 %v5579
        %6306 = vmatpush.bf16.msra.mxu0 %v5575
        %6307 = vmatpush.bf16.msra.mxu0 %v5571
        %6308 = vmatpush.bf16.msra.mxu0 %v5567
        %6309 = vmatmul.bf16.gmra.mxu0 %v4523
        %v6310 = vpop.f32.mrf.mxu0
        %v6311 = vadd.f32 %v4791, %v6310
        %v6312 = vpop.f32.mrf.mxu0
        %v6313 = vadd.f32 %v4791, %v6312
        %6314 = vdwg.mxu0
        %6315 = vmatpush.bf16.msra.mxu0 %v5627
        %6316 = vmatpush.bf16.msra.mxu0 %v5623
        %6317 = vmatpush.bf16.msra.mxu0 %v5619
        %6318 = vmatpush.bf16.msra.mxu0 %v5615
        %6319 = vmatpush.bf16.msra.mxu0 %v5611
        %6320 = vmatpush.bf16.msra.mxu0 %v5607
        %6321 = vmatpush.bf16.msra.mxu0 %v5603
        %6322 = vmatpush.bf16.msra.mxu0 %v5599
        %6323 = vmatmul.bf16.gmra.mxu0 %v4524
        %v6324 = vpop.f32.mrf.mxu0
        %v6325 = vadd.f32 %v6311, %v6324
        %v6326 = vpop.f32.mrf.mxu0
        %v6327 = vadd.f32 %v6313, %v6326
        %6328 = vdwg.mxu0
        %6329 = vmatpush.bf16.msra.mxu0 %v5659
        %6330 = vmatpush.bf16.msra.mxu0 %v5655
        %6331 = vmatpush.bf16.msra.mxu0 %v5651
        %6332 = vmatpush.bf16.msra.mxu0 %v5647
        %6333 = vmatpush.bf16.msra.mxu0 %v5643
        %6334 = vmatpush.bf16.msra.mxu0 %v5639
        %6335 = vmatpush.bf16.msra.mxu0 %v5635
        %6336 = vmatpush.bf16.msra.mxu0 %v5631
        %6337 = vmatmul.bf16.gmra.mxu0 %v4525
        %v6338 = vpop.f32.mrf.mxu0
        %v6339 = vadd.f32 %v6325, %v6338
        %v6340 = vpop.f32.mrf.mxu0
        %v6341 = vadd.f32 %v6327, %v6340
        %6342 = vdwg.mxu0
        %6343 = vmatpush.bf16.msra.mxu0 %v5691
        %6344 = vmatpush.bf16.msra.mxu0 %v5687
        %6345 = vmatpush.bf16.msra.mxu0 %v5683
        %6346 = vmatpush.bf16.msra.mxu0 %v5679
        %6347 = vmatpush.bf16.msra.mxu0 %v5675
        %6348 = vmatpush.bf16.msra.mxu0 %v5671
        %6349 = vmatpush.bf16.msra.mxu0 %v5667
        %6350 = vmatpush.bf16.msra.mxu0 %v5663
        %6351 = vmatmul.bf16.gmra.mxu0 %v4526
        %v6352 = vpop.f32.mrf.mxu0
        %v6353 = vadd.f32 %v6339, %v6352
        %v6354 = vpop.f32.mrf.mxu0
        %v6355 = vadd.f32 %v6341, %v6354
        %6356 = vdwg.mxu0
        %6357 = vmatpush.bf16.msra.mxu0 %v5723
        %6358 = vmatpush.bf16.msra.mxu0 %v5719
        %6359 = vmatpush.bf16.msra.mxu0 %v5715
        %6360 = vmatpush.bf16.msra.mxu0 %v5711
        %6361 = vmatpush.bf16.msra.mxu0 %v5707
        %6362 = vmatpush.bf16.msra.mxu0 %v5703
        %6363 = vmatpush.bf16.msra.mxu0 %v5699
        %6364 = vmatpush.bf16.msra.mxu0 %v5695
        %6365 = vmatmul.bf16.gmra.mxu0 %v4527
        %v6366 = vpop.f32.mrf.mxu0
        %v6367 = vadd.f32 %v6353, %v6366
        %v6368 = vpop.f32.mrf.mxu0
        %v6369 = vadd.f32 %v6355, %v6368
        %6370 = vdwg.mxu0
        %6371 = vmatpush.bf16.msra.mxu0 %v5755
        %6372 = vmatpush.bf16.msra.mxu0 %v5751
        %6373 = vmatpush.bf16.msra.mxu0 %v5747
        %6374 = vmatpush.bf16.msra.mxu0 %v5743
        %6375 = vmatpush.bf16.msra.mxu0 %v5739
        %6376 = vmatpush.bf16.msra.mxu0 %v5735
        %6377 = vmatpush.bf16.msra.mxu0 %v5731
        %6378 = vmatpush.bf16.msra.mxu0 %v5727
        %6379 = vmatmul.bf16.gmra.mxu0 %v4528
        %v6380 = vpop.f32.mrf.mxu0
        %v6381 = vadd.f32 %v6367, %v6380
        %v6382 = vpop.f32.mrf.mxu0
        %v6383 = vadd.f32 %v6369, %v6382
        %6384 = vdwg.mxu0
        %6385 = vmatpush.bf16.msra.mxu0 %v5787
        %6386 = vmatpush.bf16.msra.mxu0 %v5783
        %6387 = vmatpush.bf16.msra.mxu0 %v5779
        %6388 = vmatpush.bf16.msra.mxu0 %v5775
        %6389 = vmatpush.bf16.msra.mxu0 %v5771
        %6390 = vmatpush.bf16.msra.mxu0 %v5767
        %6391 = vmatpush.bf16.msra.mxu0 %v5763
        %6392 = vmatpush.bf16.msra.mxu0 %v5759
        %6393 = vmatmul.bf16.gmra.mxu0 %v4529
        %v6394 = vpop.f32.mrf.mxu0
        %v6395 = vadd.f32 %v6381, %v6394
        %v6396 = vpop.f32.mrf.mxu0
        %v6397 = vadd.f32 %v6383, %v6396
        %6398 = vdwg.mxu0
        %6399 = vmatpush.bf16.msra.mxu0 %v5819
        %6400 = vmatpush.bf16.msra.mxu0 %v5815
        %6401 = vmatpush.bf16.msra.mxu0 %v5811
        %6402 = vmatpush.bf16.msra.mxu0 %v5807
        %6403 = vmatpush.bf16.msra.mxu0 %v5803
        %6404 = vmatpush.bf16.msra.mxu0 %v5799
        %6405 = vmatpush.bf16.msra.mxu0 %v5795
        %6406 = vmatpush.bf16.msra.mxu0 %v5791
        %6407 = vmatmul.bf16.gmra.mxu0 %v4530
        %v6408 = vpop.f32.mrf.mxu0
        %v6409 = vadd.f32 %v6395, %v6408
        %v6410 = vpop.f32.mrf.mxu0
        %v6411 = vadd.f32 %v6397, %v6410
        %6412 = vdwg.mxu0
        %6413 = vmatpush.bf16.msra.mxu0 %v5596
        %6414 = vmatpush.bf16.msra.mxu0 %v5592
        %6415 = vmatpush.bf16.msra.mxu0 %v5588
        %6416 = vmatpush.bf16.msra.mxu0 %v5584
        %6417 = vmatpush.bf16.msra.mxu0 %v5580
        %6418 = vmatpush.bf16.msra.mxu0 %v5576
        %6419 = vmatpush.bf16.msra.mxu0 %v5572
        %6420 = vmatpush.bf16.msra.mxu0 %v5568
        %6421 = vmatmul.bf16.gmra.mxu0 %v4523
        %v6422 = vpop.f32.mrf.mxu0
        %v6423 = vadd.f32 %v4792, %v6422
        %v6424 = vpop.f32.mrf.mxu0
        %v6425 = vadd.f32 %v4792, %v6424
        %6426 = vdwg.mxu0
        %6427 = vmatpush.bf16.msra.mxu0 %v5628
        %6428 = vmatpush.bf16.msra.mxu0 %v5624
        %6429 = vmatpush.bf16.msra.mxu0 %v5620
        %6430 = vmatpush.bf16.msra.mxu0 %v5616
        %6431 = vmatpush.bf16.msra.mxu0 %v5612
        %6432 = vmatpush.bf16.msra.mxu0 %v5608
        %6433 = vmatpush.bf16.msra.mxu0 %v5604
        %6434 = vmatpush.bf16.msra.mxu0 %v5600
        %6435 = vmatmul.bf16.gmra.mxu0 %v4524
        %v6436 = vpop.f32.mrf.mxu0
        %v6437 = vadd.f32 %v6423, %v6436
        %v6438 = vpop.f32.mrf.mxu0
        %v6439 = vadd.f32 %v6425, %v6438
        %6440 = vdwg.mxu0
        %6441 = vmatpush.bf16.msra.mxu0 %v5660
        %6442 = vmatpush.bf16.msra.mxu0 %v5656
        %6443 = vmatpush.bf16.msra.mxu0 %v5652
        %6444 = vmatpush.bf16.msra.mxu0 %v5648
        %6445 = vmatpush.bf16.msra.mxu0 %v5644
        %6446 = vmatpush.bf16.msra.mxu0 %v5640
        %6447 = vmatpush.bf16.msra.mxu0 %v5636
        %6448 = vmatpush.bf16.msra.mxu0 %v5632
        %6449 = vmatmul.bf16.gmra.mxu0 %v4525
        %v6450 = vpop.f32.mrf.mxu0
        %v6451 = vadd.f32 %v6437, %v6450
        %v6452 = vpop.f32.mrf.mxu0
        %v6453 = vadd.f32 %v6439, %v6452
        %6454 = vdwg.mxu0
        %6455 = vmatpush.bf16.msra.mxu0 %v5692
        %6456 = vmatpush.bf16.msra.mxu0 %v5688
        %6457 = vmatpush.bf16.msra.mxu0 %v5684
        %6458 = vmatpush.bf16.msra.mxu0 %v5680
        %6459 = vmatpush.bf16.msra.mxu0 %v5676
        %6460 = vmatpush.bf16.msra.mxu0 %v5672
        %6461 = vmatpush.bf16.msra.mxu0 %v5668
        %6462 = vmatpush.bf16.msra.mxu0 %v5664
        %6463 = vmatmul.bf16.gmra.mxu0 %v4526
        %v6464 = vpop.f32.mrf.mxu0
        %v6465 = vadd.f32 %v6451, %v6464
        %v6466 = vpop.f32.mrf.mxu0
        %v6467 = vadd.f32 %v6453, %v6466
        %6468 = vdwg.mxu0
        %6469 = vmatpush.bf16.msra.mxu0 %v5724
        %6470 = vmatpush.bf16.msra.mxu0 %v5720
        %6471 = vmatpush.bf16.msra.mxu0 %v5716
        %6472 = vmatpush.bf16.msra.mxu0 %v5712
        %6473 = vmatpush.bf16.msra.mxu0 %v5708
        %6474 = vmatpush.bf16.msra.mxu0 %v5704
        %6475 = vmatpush.bf16.msra.mxu0 %v5700
        %6476 = vmatpush.bf16.msra.mxu0 %v5696
        %6477 = vmatmul.bf16.gmra.mxu0 %v4527
        %v6478 = vpop.f32.mrf.mxu0
        %v6479 = vadd.f32 %v6465, %v6478
        %v6480 = vpop.f32.mrf.mxu0
        %v6481 = vadd.f32 %v6467, %v6480
        %6482 = vdwg.mxu0
        %6483 = vmatpush.bf16.msra.mxu0 %v5756
        %6484 = vmatpush.bf16.msra.mxu0 %v5752
        %6485 = vmatpush.bf16.msra.mxu0 %v5748
        %6486 = vmatpush.bf16.msra.mxu0 %v5744
        %6487 = vmatpush.bf16.msra.mxu0 %v5740
        %6488 = vmatpush.bf16.msra.mxu0 %v5736
        %6489 = vmatpush.bf16.msra.mxu0 %v5732
        %6490 = vmatpush.bf16.msra.mxu0 %v5728
        %6491 = vmatmul.bf16.gmra.mxu0 %v4528
        %v6492 = vpop.f32.mrf.mxu0
        %v6493 = vadd.f32 %v6479, %v6492
        %v6494 = vpop.f32.mrf.mxu0
        %v6495 = vadd.f32 %v6481, %v6494
        %6496 = vdwg.mxu0
        %6497 = vmatpush.bf16.msra.mxu0 %v5788
        %6498 = vmatpush.bf16.msra.mxu0 %v5784
        %6499 = vmatpush.bf16.msra.mxu0 %v5780
        %6500 = vmatpush.bf16.msra.mxu0 %v5776
        %6501 = vmatpush.bf16.msra.mxu0 %v5772
        %6502 = vmatpush.bf16.msra.mxu0 %v5768
        %6503 = vmatpush.bf16.msra.mxu0 %v5764
        %6504 = vmatpush.bf16.msra.mxu0 %v5760
        %6505 = vmatmul.bf16.gmra.mxu0 %v4529
        %v6506 = vpop.f32.mrf.mxu0
        %v6507 = vadd.f32 %v6493, %v6506
        %v6508 = vpop.f32.mrf.mxu0
        %v6509 = vadd.f32 %v6495, %v6508
        %6510 = vdwg.mxu0
        %6511 = vmatpush.bf16.msra.mxu0 %v5820
        %6512 = vmatpush.bf16.msra.mxu0 %v5816
        %6513 = vmatpush.bf16.msra.mxu0 %v5812
        %6514 = vmatpush.bf16.msra.mxu0 %v5808
        %6515 = vmatpush.bf16.msra.mxu0 %v5804
        %6516 = vmatpush.bf16.msra.mxu0 %v5800
        %6517 = vmatpush.bf16.msra.mxu0 %v5796
        %6518 = vmatpush.bf16.msra.mxu0 %v5792
        %6519 = vmatmul.bf16.gmra.mxu0 %v4530
        %v6520 = vpop.f32.mrf.mxu0
        %v6521 = vadd.f32 %v6507, %v6520
        %v6522 = vpop.f32.mrf.mxu0
        %v6523 = vadd.f32 %v6509, %v6522
        %6524 = vdwg.mxu0
        %v6525 = vmax.f32 %v6185, 0.0
        %v6526 = vmax.f32 %v6297, 0.0
        %v6527 = vmax.f32 %v6409, 0.0
        %v6528 = vmax.f32 %v6521, 0.0
        %v6529 = vmax.f32 %v6187, 0.0
        %v6530 = vmax.f32 %v6299, 0.0
        %v6531 = vmax.f32 %v6411, 0.0
        %v6532 = vmax.f32 %v6523, 0.0
        %v6533 = vpack.c.bf16 %v6529, %v6525
        %v6534 = vpack.c.bf16 %v6530, %v6526
        %v6535 = vpack.c.bf16 %v6531, %v6527
        %v6536 = vpack.c.bf16 %v6532, %v6528
        %v6537 = vld [vmem:[#allocation13] sm:$0xf]
        %v6538 = vld [vmem:[#allocation13 + $0x4] sm:$0xf]
        %v6539 = vld [vmem:[#allocation13 + $0x8] sm:$0xf]
        %v6540 = vld [vmem:[#allocation13 + $0xc] sm:$0xf]
        %v6541 = vld [vmem:[#allocation13 + $0x10] sm:$0xf]
        %v6542 = vld [vmem:[#allocation13 + $0x14] sm:$0xf]
        %v6543 = vld [vmem:[#allocation13 + $0x18] sm:$0xf]
        %v6544 = vld [vmem:[#allocation13 + $0x1c] sm:$0xf]
        %v6545 = vld [vmem:[#allocation13 + $0x20] sm:$0xf]
        %v6546 = vld [vmem:[#allocation13 + $0x24] sm:$0xf]
        %v6547 = vld [vmem:[#allocation13 + $0x28] sm:$0xf]
        %v6548 = vld [vmem:[#allocation13 + $0x2c] sm:$0xf]
        %v6549 = vld [vmem:[#allocation13 + $0x30] sm:$0xf]
        %v6550 = vld [vmem:[#allocation13 + $0x34] sm:$0xf]
        %v6551 = vld [vmem:[#allocation13 + $0x38] sm:$0xf]
        %v6552 = vld [vmem:[#allocation13 + $0x3c] sm:$0xf]
        %v6553 = vld [vmem:[#allocation13 + $0x40] sm:$0xf]
        %v6554 = vld [vmem:[#allocation13 + $0x44] sm:$0xf]
        %v6555 = vld [vmem:[#allocation13 + $0x48] sm:$0xf]
        %v6556 = vld [vmem:[#allocation13 + $0x4c] sm:$0xf]
        %v6557 = vld [vmem:[#allocation13 + $0x50] sm:$0xf]
        %v6558 = vld [vmem:[#allocation13 + $0x54] sm:$0xf]
        %v6559 = vld [vmem:[#allocation13 + $0x58] sm:$0xf]
        %v6560 = vld [vmem:[#allocation13 + $0x5c] sm:$0xf]
        %v6561 = vld [vmem:[#allocation13 + $0x60] sm:$0xf]
        %v6562 = vld [vmem:[#allocation13 + $0x64] sm:$0xf]
        %v6563 = vld [vmem:[#allocation13 + $0x68] sm:$0xf]
        %v6564 = vld [vmem:[#allocation13 + $0x6c] sm:$0xf]
        %v6565 = vld [vmem:[#allocation13 + $0x70] sm:$0xf]
        %v6566 = vld [vmem:[#allocation13 + $0x74] sm:$0xf]
        %v6567 = vld [vmem:[#allocation13 + $0x78] sm:$0xf]
        %v6568 = vld [vmem:[#allocation13 + $0x7c] sm:$0xf]
        %v6569 = vld [vmem:[#allocation13 + $0x80] sm:$0xf]
        %v6570 = vld [vmem:[#allocation13 + $0x84] sm:$0xf]
        %v6571 = vld [vmem:[#allocation13 + $0x88] sm:$0xf]
        %v6572 = vld [vmem:[#allocation13 + $0x8c] sm:$0xf]
        %v6573 = vld [vmem:[#allocation13 + $0x90] sm:$0xf]
        %v6574 = vld [vmem:[#allocation13 + $0x94] sm:$0xf]
        %v6575 = vld [vmem:[#allocation13 + $0x98] sm:$0xf]
        %v6576 = vld [vmem:[#allocation13 + $0x9c] sm:$0xf]
        %v6577 = vld [vmem:[#allocation13 + $0xa0] sm:$0xf]
        %v6578 = vld [vmem:[#allocation13 + $0xa4] sm:$0xf]
        %v6579 = vld [vmem:[#allocation13 + $0xa8] sm:$0xf]
        %v6580 = vld [vmem:[#allocation13 + $0xac] sm:$0xf]
        %v6581 = vld [vmem:[#allocation13 + $0xb0] sm:$0xf]
        %v6582 = vld [vmem:[#allocation13 + $0xb4] sm:$0xf]
        %v6583 = vld [vmem:[#allocation13 + $0xb8] sm:$0xf]
        %v6584 = vld [vmem:[#allocation13 + $0xbc] sm:$0xf]
        %v6585 = vld [vmem:[#allocation13 + $0xc0] sm:$0xf]
        %v6586 = vld [vmem:[#allocation13 + $0xc4] sm:$0xf]
        %v6587 = vld [vmem:[#allocation13 + $0xc8] sm:$0xf]
        %v6588 = vld [vmem:[#allocation13 + $0xcc] sm:$0xf]
        %v6589 = vld [vmem:[#allocation13 + $0xd0] sm:$0xf]
        %v6590 = vld [vmem:[#allocation13 + $0xd4] sm:$0xf]
        %v6591 = vld [vmem:[#allocation13 + $0xd8] sm:$0xf]
        %v6592 = vld [vmem:[#allocation13 + $0xdc] sm:$0xf]
        %v6593 = vld [vmem:[#allocation13 + $0xe0] sm:$0xf]
        %v6594 = vld [vmem:[#allocation13 + $0xe4] sm:$0xf]
        %v6595 = vld [vmem:[#allocation13 + $0xe8] sm:$0xf]
        %v6596 = vld [vmem:[#allocation13 + $0xec] sm:$0xf]
        %v6597 = vld [vmem:[#allocation13 + $0xf0] sm:$0xf]
        %v6598 = vld [vmem:[#allocation13 + $0xf4] sm:$0xf]
        %v6599 = vld [vmem:[#allocation13 + $0xf8] sm:$0xf]
        %v6600 = vld [vmem:[#allocation13 + $0xfc] sm:$0xf]
        %v6601 = vld [vmem:[%s8] sm:$0x1]
        %v6603 = vperm.slane %v6601, 0
        %v6669 = vunpack.c.l.b16 %v6537
        %v6670 = vunpack.c.l.b16 %v6538
        %v6671 = vunpack.c.l.b16 %v6539
        %v6672 = vunpack.c.l.b16 %v6540
        %v6673 = vunpack.c.l.b16 %v6541
        %v6674 = vunpack.c.l.b16 %v6542
        %v6675 = vunpack.c.l.b16 %v6543
        %v6676 = vunpack.c.l.b16 %v6544
        %v6677 = vunpack.c.l.b16 %v6545
        %v6678 = vunpack.c.l.b16 %v6546
        %v6679 = vunpack.c.l.b16 %v6547
        %v6680 = vunpack.c.l.b16 %v6548
        %v6681 = vunpack.c.l.b16 %v6549
        %v6682 = vunpack.c.l.b16 %v6550
        %v6683 = vunpack.c.l.b16 %v6551
        %v6684 = vunpack.c.l.b16 %v6552
        %v6685 = vunpack.c.l.b16 %v6553
        %v6686 = vunpack.c.l.b16 %v6554
        %v6687 = vunpack.c.l.b16 %v6555
        %v6688 = vunpack.c.l.b16 %v6556
        %v6689 = vunpack.c.l.b16 %v6557
        %v6690 = vunpack.c.l.b16 %v6558
        %v6691 = vunpack.c.l.b16 %v6559
        %v6692 = vunpack.c.l.b16 %v6560
        %v6693 = vunpack.c.l.b16 %v6561
        %v6694 = vunpack.c.l.b16 %v6562
        %v6695 = vunpack.c.l.b16 %v6563
        %v6696 = vunpack.c.l.b16 %v6564
        %v6697 = vunpack.c.l.b16 %v6565
        %v6698 = vunpack.c.l.b16 %v6566
        %v6699 = vunpack.c.l.b16 %v6567
        %v6700 = vunpack.c.l.b16 %v6568
        %v6701 = vunpack.c.l.b16 %v6569
        %v6702 = vunpack.c.l.b16 %v6570
        %v6703 = vunpack.c.l.b16 %v6571
        %v6704 = vunpack.c.l.b16 %v6572
        %v6705 = vunpack.c.l.b16 %v6573
        %v6706 = vunpack.c.l.b16 %v6574
        %v6707 = vunpack.c.l.b16 %v6575
        %v6708 = vunpack.c.l.b16 %v6576
        %v6709 = vunpack.c.l.b16 %v6577
        %v6710 = vunpack.c.l.b16 %v6578
        %v6711 = vunpack.c.l.b16 %v6579
        %v6712 = vunpack.c.l.b16 %v6580
        %v6713 = vunpack.c.l.b16 %v6581
        %v6714 = vunpack.c.l.b16 %v6582
        %v6715 = vunpack.c.l.b16 %v6583
        %v6716 = vunpack.c.l.b16 %v6584
        %v6717 = vunpack.c.l.b16 %v6585
        %v6718 = vunpack.c.l.b16 %v6586
        %v6719 = vunpack.c.l.b16 %v6587
        %v6720 = vunpack.c.l.b16 %v6588
        %v6721 = vunpack.c.l.b16 %v6589
        %v6722 = vunpack.c.l.b16 %v6590
        %v6723 = vunpack.c.l.b16 %v6591
        %v6724 = vunpack.c.l.b16 %v6592
        %v6725 = vunpack.c.l.b16 %v6593
        %v6726 = vunpack.c.l.b16 %v6594
        %v6727 = vunpack.c.l.b16 %v6595
        %v6728 = vunpack.c.l.b16 %v6596
        %v6729 = vunpack.c.l.b16 %v6597
        %v6730 = vunpack.c.l.b16 %v6598
        %v6731 = vunpack.c.l.b16 %v6599
        %v6732 = vunpack.c.l.b16 %v6600
        %v6733 = vpack.c.b16 %v6670, %v6669
        %v6734 = vpack.c.b16 %v6672, %v6671
        %v6735 = vpack.c.b16 %v6674, %v6673
        %v6736 = vpack.c.b16 %v6676, %v6675
        %v6737 = vpack.c.b16 %v6678, %v6677
        %v6738 = vpack.c.b16 %v6680, %v6679
        %v6739 = vpack.c.b16 %v6682, %v6681
        %v6740 = vpack.c.b16 %v6684, %v6683
        %v6741 = vpack.c.b16 %v6686, %v6685
        %v6742 = vpack.c.b16 %v6688, %v6687
        %v6743 = vpack.c.b16 %v6690, %v6689
        %v6744 = vpack.c.b16 %v6692, %v6691
        %v6745 = vpack.c.b16 %v6694, %v6693
        %v6746 = vpack.c.b16 %v6696, %v6695
        %v6747 = vpack.c.b16 %v6698, %v6697
        %v6748 = vpack.c.b16 %v6700, %v6699
        %v6749 = vpack.c.b16 %v6702, %v6701
        %v6750 = vpack.c.b16 %v6704, %v6703
        %v6751 = vpack.c.b16 %v6706, %v6705
        %v6752 = vpack.c.b16 %v6708, %v6707
        %v6753 = vpack.c.b16 %v6710, %v6709
        %v6754 = vpack.c.b16 %v6712, %v6711
        %v6755 = vpack.c.b16 %v6714, %v6713
        %v6756 = vpack.c.b16 %v6716, %v6715
        %v6757 = vpack.c.b16 %v6718, %v6717
        %v6758 = vpack.c.b16 %v6720, %v6719
        %v6759 = vpack.c.b16 %v6722, %v6721
        %v6760 = vpack.c.b16 %v6724, %v6723
        %v6761 = vpack.c.b16 %v6726, %v6725
        %v6762 = vpack.c.b16 %v6728, %v6727
        %v6763 = vpack.c.b16 %v6730, %v6729
        %v6764 = vpack.c.b16 %v6732, %v6731
        %6797 = vmatpush.bf16.msra.mxu0 %v6740
        %6798 = vmatpush.bf16.msra.mxu0 %v6739
        %6799 = vmatpush.bf16.msra.mxu0 %v6738
        %6800 = vmatpush.bf16.msra.mxu0 %v6737
        %6801 = vmatpush.bf16.msra.mxu0 %v6736
        %6802 = vmatpush.bf16.msra.mxu0 %v6735
        %6803 = vmatpush.bf16.msra.mxu0 %v6734
        %6804 = vmatpush.bf16.msra.mxu0 %v6733
        %6805 = vmatmul.bf16.gmra.mxu0 %v6533
        %v6806 = vpop.f32.mrf.mxu0
        %v6807 = vadd.f32 %v6603, %v6806
        %v6808 = vpop.f32.mrf.mxu0
        %v6809 = vadd.f32 %v6603, %v6808
        %6810 = vdwg.mxu0
        %6811 = vmatpush.bf16.msra.mxu0 %v6748
        %6812 = vmatpush.bf16.msra.mxu0 %v6747
        %6813 = vmatpush.bf16.msra.mxu0 %v6746
        %6814 = vmatpush.bf16.msra.mxu0 %v6745
        %6815 = vmatpush.bf16.msra.mxu0 %v6744
        %6816 = vmatpush.bf16.msra.mxu0 %v6743
        %6817 = vmatpush.bf16.msra.mxu0 %v6742
        %6818 = vmatpush.bf16.msra.mxu0 %v6741
        %6819 = vmatmul.bf16.gmra.mxu0 %v6534
        %v6820 = vpop.f32.mrf.mxu0
        %v6821 = vadd.f32 %v6807, %v6820
        %v6822 = vpop.f32.mrf.mxu0
        %v6823 = vadd.f32 %v6809, %v6822
        %6824 = vdwg.mxu0
        %6825 = vmatpush.bf16.msra.mxu0 %v6756
        %6826 = vmatpush.bf16.msra.mxu0 %v6755
        %6827 = vmatpush.bf16.msra.mxu0 %v6754
        %6828 = vmatpush.bf16.msra.mxu0 %v6753
        %6829 = vmatpush.bf16.msra.mxu0 %v6752
        %6830 = vmatpush.bf16.msra.mxu0 %v6751
        %6831 = vmatpush.bf16.msra.mxu0 %v6750
        %6832 = vmatpush.bf16.msra.mxu0 %v6749
        %6833 = vmatmul.bf16.gmra.mxu0 %v6535
        %v6834 = vpop.f32.mrf.mxu0
        %v6835 = vadd.f32 %v6821, %v6834
        %v6836 = vpop.f32.mrf.mxu0
        %v6837 = vadd.f32 %v6823, %v6836
        %6838 = vdwg.mxu0
        %6839 = vmatpush.bf16.msra.mxu0 %v6764
        %6840 = vmatpush.bf16.msra.mxu0 %v6763
        %6841 = vmatpush.bf16.msra.mxu0 %v6762
        %6842 = vmatpush.bf16.msra.mxu0 %v6761
        %6843 = vmatpush.bf16.msra.mxu0 %v6760
        %6844 = vmatpush.bf16.msra.mxu0 %v6759
        %6845 = vmatpush.bf16.msra.mxu0 %v6758
        %6846 = vmatpush.bf16.msra.mxu0 %v6757
        %6847 = vmatmul.bf16.gmra.mxu0 %v6536
        %v6848 = vpop.f32.mrf.mxu0
        %v6849 = vadd.f32 %v6835, %v6848
        %v6850 = vpop.f32.mrf.mxu0
        %v6851 = vadd.f32 %v6837, %v6850
        %6852 = vdwg.mxu0
        %v6853 = vlaneseq
        %v6854 = vand.u32 %v6853, 127
        %vm6855 = vcmp.lt.s32.totalorder %v6854, 5
        %v6856 = vsel %vm6855, %v6849, -inf
        %v6857 = vsel %vm6855, %v6851, -inf
        %6858 = vmax.xlane.f32.xlu0 %v6856
        %v6859 = vpop.xlane.xlu0 %6858
        %6860 = vmax.xlane.f32.xlu0 %v6857
        %v6861 = vpop.xlane.xlu0 %6860
        %v6862 = vsub.f32 %v6856, %v6859
        %v6863 = vsub.f32 %v6857, %v6861
        %v6864 = vmul.f32 %v6862, 1.442695
        %v6865 = vpow.pop %v6864
        %v6866 = vmul.f32 %v6863, 1.442695
        %v6867 = vpow.pop %v6866
        %6868 = vadd.xlane.f32.xlu0 %v6865
        %v6869 = vpop.xlane.xlu0 %6868
        %6870 = vadd.xlane.f32.xlu0 %v6867
        %v6871 = vpop.xlane.xlu0 %6870
        %v6872 = vrcp.pop %v6869
        %v6873 = vmul.f32 %v6869, %v6872
        %v6874 = vsub.f32 1.0, %v6873
        %v6875 = vmul.f32 %v6872, %v6874
        %v6876 = vadd.f32 %v6872, %v6875
        %vm6877 = vweird.f32 %v6869
        %vm6878 = vweird.f32 %v6872
        %vm6879 = vmor %vm6877, %vm6878
        %v6880 = vsel %vm6879, %v6872, %v6876
        %v6881 = vand.u32 2147483647, %v6869
        %vm6882 = vcmp.eq.f32.partialorder %v6881, 8.507059e+37
        %v6883 = vand.u32 %v6869, 2147483648
        %v6884 = vor.u32 1.1754944e-38, %v6883
        %v6885 = vsel %vm6882, %v6884, %v6880
        %v6886 = vmul.f32 %v6865, %v6885
        %v6887 = vrcp.pop %v6871
        %v6888 = vmul.f32 %v6871, %v6887
        %v6889 = vsub.f32 1.0, %v6888
        %v6890 = vmul.f32 %v6887, %v6889
        %v6891 = vadd.f32 %v6887, %v6890
        %vm6892 = vweird.f32 %v6871
        %vm6893 = vweird.f32 %v6887
        %vm6894 = vmor %vm6892, %vm6893
        %v6895 = vsel %vm6894, %v6887, %v6891
        %v6896 = vand.u32 2147483647, %v6871
        %vm6897 = vcmp.eq.f32.partialorder %v6896, 8.507059e+37
        %v6898 = vand.u32 %v6871, 2147483648
        %v6899 = vor.u32 1.1754944e-38, %v6898
        %v6900 = vsel %vm6897, %v6899, %v6895
        %v6901 = vmul.f32 %v6867, %v6900
        %6902 = vst [vmem:[%s448] sm:$0xff] %v6886
        %6903 = vst [vmem:[%s448 + $0x8] sm:$0xff] %v6901
        %s6904 = sand.u32 %s231, 1
        %s6905 = scalar_lea.sflag [#allocation4], %s6904
        %s6906 = sand.u32 %s231, 1
        %s6907 = smul.addr %s6906, 16
        %s6908 = scalar_lea.vmem [#allocation14], %s6907
        // Predicated region
        $region85: #{tpu_custom_call.1} parent=55 // pred_check
          %p6909 = pneg %p241
        $region86: #{tpu_custom_call.1} parent=55 // pred_check_branch
          %6911 = sbr.rel (%p6909) target = $region88
        $region87: #{tpu_custom_call.1} parent=55 // pred_region
          %s6912 = smul.u32 2, %s29
          %6914 = vsyncadd %s6905, 0
          %s6915 = smul.addr %s6912, 8
          %s6916 = scalar_lea.hbm %s9, %s6915
          %s6917 = sshll.u32 %s6908, 4
          %s6918 = int_to_ptr.vmem [resolvable:$true] %s6917
          %s6919 = sshll.u32 %s6916, 4
          %s6920 = int_to_ptr.hbm [resolvable:$true] %s6919
          %6925 = dma.vmem_to_hbm [thread:$0]  %s6918, 256, %s6920, %s6905, 128, 128, 8
        $region88: #{tpu_custom_call.1} parent=55 // pred_fallthru
          _
      $region56: #{tpu_custom_call.1} parent=5 // pred_fallthru
        _
      %p6926 = scmp.le.s32.totalorder 2, %s24
      // Predicated region
      $region89: #{tpu_custom_call.1} parent=5 // pred_check
        %p6927 = pneg %p6926
      $region90: #{tpu_custom_call.1} parent=5 // pred_check_branch
        %6929 = sbr.rel (%p6927) target = $region92
      $region91: #{tpu_custom_call.1} parent=5 // pred_region
        %s6930 = ssub.s32 %s24, 2
        // Predicated region
        $region93: #{tpu_custom_call.1} parent=91 // pred_check
          %p6931 = pneg %p247
        $region94: #{tpu_custom_call.1} parent=91 // pred_check_branch
          %6933 = sbr.rel (%p6931) target = $region96
        $region95: #{tpu_custom_call.1} parent=91 // pred_region
          %s6934 = sand.u32 %s232, 1
          %s6935 = scalar_lea.sflag [#allocation4], %s6934
          %s6936 = sand.u32 %s232, 1
          %s6937 = smul.addr %s6936, 16
          %s6938 = scalar_lea.vmem [#allocation14], %s6937
          %6940 = dma.done %s6935, 256
        $region96: #{tpu_custom_call.1} parent=91 // pred_fallthru
          _
      $region92: #{tpu_custom_call.1} parent=5 // pred_fallthru
        _
    $region6: #{tpu_custom_call.1} parent=1 // loop_footer
      %s28 = sadd.s32 1, %s24
    $region7: #{tpu_custom_call.1} parent=1 // loop_footer_branch
      %23 = sbr.rel target = $region3
    $region8: #{tpu_custom_call.1} parent=1 // loop_exit
      _
    %6941 = vsyncpa [#allocation3], 1
    %s6942 = scalar_lea.sflag [#allocation3], 1
    %6943 = vsyncpa %s6942, 1
    %6944 = vsyncpa [#allocation6], 1
    %6945 = vsyncpa [#allocation9], 1
    %6946 = vsyncpa [#allocation12], 1
    %6947 = vsyncpa [#allocation4], 1
    %s6948 = scalar_lea.sflag [#allocation4], 1
    %6949 = vsyncpa %s6948, 1

</llo_original>
